<compile_context>
chip_gen: v7x
topology: tpu7x:2x2x1
jax: 0.10.0
libtpu: 0.0.40
codegen_flags: <defaults>
</compile_context>

<pallas_src>
import functools
import jax
import jax.numpy as jnp
from jax import lax
from jax.experimental import pallas as pl
from jax.experimental.pallas import tpu as pltpu


# ----------------------------------------------------------------------------
# Pallas kernel: one batch element per grid step, full Mamba block + LayerNorm
# ----------------------------------------------------------------------------
def _mamba_layer_kernel(
    x_ref,        # (1, L, d_model)
    w_in_x_ref,   # (d_model, P)                in_proj, x half (padded d_inner)
    w_in_z_ref,   # (d_model, P)                in_proj, z half
    conv_wt_ref,  # (d_conv, P)                 depthwise conv weights (tap-major)
    conv_b_ref,   # (1, P)                      conv bias
    w_dtlow_ref,  # (P, dt_rank)                x_proj -> dt_low
    w_b_ref,      # (P, d_state)                x_proj -> B
    w_c_ref,      # (P, d_state)                x_proj -> C
    w_dt_ref,     # (dt_rank, P)                dt_proj weight
    b_dt_ref,     # (1, P)                      dt_proj bias
    a_t_ref,      # (d_state, P)                A_t = -exp(A_log) (precomputed)
    d_ref,        # (1, P)                      D
    w_out_ref,    # (P, d_model)                out_proj
    ln_g_ref,     # (1, d_model)
    ln_b_ref,     # (1, d_model)
    o_ref,        # (1, L, d_model)
    da_ref,       # scratch (L*d_state, P) f32  row r = t*d_state + s
    dbu_ref,      # scratch (L*d_state, P) f32  (doubles as h-history storage)
    *,
    d_state, d_conv, num_layers, unroll,
):
    f32 = jnp.float32
    x = x_ref[0]                                     # (L, d_model)
    L = x.shape[0]
    P = w_in_x_ref.shape[1]                          # padded d_inner

    # ---- in_proj (split: no unaligned column slicing of a fused matmul) ----
    xc = jnp.dot(x, w_in_x_ref[...], preferred_element_type=f32)   # (L, P)
    z = jnp.dot(x, w_in_z_ref[...], preferred_element_type=f32)    # (L, P)

    # ---- causal depthwise conv1d (padding = d_conv - 1, truncated to L) ----
    row = lax.broadcasted_iota(jnp.int32, (L, 1), 0)
    conv = jnp.broadcast_to(conv_b_ref[...], (L, P))
    for k in range(d_conv):
        shift = d_conv - 1 - k                       # y[t] += w[:,k] * x[t-shift]
        wk = conv_wt_ref[k:k + 1, :]                 # (1, P)
        if shift == 0:
            sx = xc
        else:
            # masked roll: wrapped rows are explicitly zeroed (causal padding)
            sx = jnp.where(row >= shift, pltpu.roll(xc, shift, axis=0), 0.0)
        conv = conv + wk * sx
    u = jax.nn.silu(conv)                            # (L, P)

    # ---- x_proj (split) ----
    dt_low = jnp.dot(u, w_dtlow_ref[...], preferred_element_type=f32)  # (L, dt_rank)
    Bm = jnp.dot(u, w_b_ref[...], preferred_element_type=f32)          # (L, d_state)
    Cm = jnp.dot(u, w_c_ref[...], preferred_element_type=f32)          # (L, d_state)

    # ---- dt_proj + softplus ----
    dt = jax.nn.softplus(
        jnp.dot(dt_low, w_dt_ref[...], preferred_element_type=f32) + b_dt_ref[...])
    dtu = dt * u                                     # (L, P)

    # ---- batched precompute of dA / dBu (off the serial critical path) ----
    # row layout: r = t*d_state + s  -> the scan reads contiguous (d_state, P)
    # blocks; the strided per-state stores here happen once, outside the loop.
    for s in range(d_state):
        a_row = a_t_ref[s:s + 1, :]                  # (1, P)  sublane slice
        b_col = Bm[:, s:s + 1]                       # (L, 1)  static lane slice
        da_ref[pl.ds(s, L, d_state), :] = jnp.exp(dt * a_row)
        dbu_ref[pl.ds(s, L, d_state), :] = dtu * b_col

    # ---- selective scan: only the irreducible recurrence stays serial ----
    def step(t, h):
        start = t * d_state
        if d_state % 8 == 0:
            start = pl.multiple_of(start, 8)
        blk = pl.ds(start, d_state)
        h = da_ref[blk, :] * h + dbu_ref[blk, :]     # (d_state, P)
        dbu_ref[blk, :] = h                          # reuse dBu scratch as h history
        return h

    lax.fori_loop(0, L, step, jnp.zeros((d_state, P), f32), unroll=unroll)

    # ---- y[t] = sum_s C[t,s] * h[t,s,:] + D * u[t]  (batched, post-loop) ----
    y = d_ref[...] * u                               # (L, P)
    for s in range(d_state):
        y = y + dbu_ref[pl.ds(s, L, d_state), :] * Cm[:, s:s + 1]

    # ---- gate + out_proj ----
    y = y * jax.nn.silu(z)
    out = jnp.dot(y, w_out_ref[...], preferred_element_type=f32)       # (L, d_model)

    # ---- dropout (identity) + residual (if num_layers != 1) + LayerNorm ----
    if num_layers != 1:
        out = out + x
    mean = jnp.mean(out, axis=-1, keepdims=True)
    var = jnp.mean((out - mean) ** 2, axis=-1, keepdims=True)
    normed = (out - mean) * lax.rsqrt(var + 1e-12)   # module uses eps=1e-12
    o_ref[0] = (normed * ln_g_ref[...] + ln_b_ref[...]).astype(o_ref.dtype)


# ----------------------------------------------------------------------------
# Wrapper: splits/pads weights, precomputes A_t, sets up grid + scratch
# ----------------------------------------------------------------------------
def mamba_layer_pallas(x, params, *, d_state, d_conv, dt_rank, num_layers):
    Bsz, L, d_model = x.shape
    d_inner = params["w_dt"].shape[1]
    d_in_p = ((d_inner + 127) // 128) * 128          # lane-pad d_inner to 128
    pad = d_in_p - d_inner

    def pad_last(a):
        if pad == 0:
            return a
        return jnp.pad(a, [(0, 0)] * (a.ndim - 1) + [(0, pad)])

    w_in = params["w_in"]
    w_xp = params["w_xproj"]
    w_out = params["w_out"]
    if pad:
        w_xp = jnp.pad(w_xp, ((0, pad), (0, 0)))     # zero rows: padded u lanes are 0
        w_out = jnp.pad(w_out, ((0, pad), (0, 0)))

    weights = [
        pad_last(w_in[:, :d_inner]),                        # w_in_x
        pad_last(w_in[:, d_inner:]),                        # w_in_z
        pad_last(params["conv_wt"]),                        # conv_wt
        pad_last(params["conv_b"]),                         # conv_b
        w_xp[:, :dt_rank],                                  # w_dtlow
        w_xp[:, dt_rank:dt_rank + d_state],                 # w_B
        w_xp[:, dt_rank + d_state:dt_rank + 2 * d_state],   # w_C
        pad_last(params["w_dt"]),                           # w_dt
        pad_last(params["b_dt"]),                           # b_dt
        pad_last(-jnp.exp(params["A_log_t"])),              # A_t (precomputed once)
        pad_last(params["D"]),                              # D
        w_out,                                              # w_out
        params["ln_g"],                                     # ln_g
        params["ln_b"],                                     # ln_b
    ]

    unroll = 8 if L % 8 == 0 else (4 if L % 4 == 0 else (2 if L % 2 == 0 else 1))

    kernel = functools.partial(
        _mamba_layer_kernel,
        d_state=d_state, d_conv=d_conv, num_layers=num_layers, unroll=unroll)

    def full_spec(arr):
        return pl.BlockSpec(arr.shape, lambda b, _n=arr.ndim: (0,) * _n)

    in_specs = [pl.BlockSpec((1, L, d_model), lambda b: (b, 0, 0))]
    in_specs += [full_spec(w) for w in weights]

    return pl.pallas_call(
        kernel,
        out_shape=jax.ShapeDtypeStruct((Bsz, L, d_model), jnp.float32),
        grid=(Bsz,),
        in_specs=in_specs,
        out_specs=pl.BlockSpec((1, L, d_model), lambda b: (b, 0, 0)),
        scratch_shapes=[
            pltpu.VMEM((L * d_state, d_in_p), jnp.float32),   # dA
            pltpu.VMEM((L * d_state, d_in_p), jnp.float32),   # dBu / h history
        ],
        compiler_params=pltpu.CompilerParams(dimension_semantics=("parallel",)),
    )(x, *weights)


# ----------------------------------------------------------------------------
# Pure-JAX reference (for correctness check) — faithful port of the module
# ----------------------------------------------------------------------------
def mamba_layer_ref(x, p, *, d_state, d_conv, dt_rank, num_layers):
    d_inner = p["w_dt"].shape[1]
    L = x.shape[1]

    def single(xb):
        xz = xb @ p["w_in"]
        xc, z = xz[:, :d_inner], xz[:, d_inner:]
        xp = jnp.concatenate([jnp.zeros((d_conv - 1, d_inner)), xc], axis=0)
        conv = p["conv_b"][0] + sum(p["conv_wt"][k] * xp[k:k + L] for k in range(d_conv))
        u = jax.nn.silu(conv)
        x_dbl = u @ p["w_xproj"]
        dt_low = x_dbl[:, :dt_rank]
        Bm = x_dbl[:, dt_rank:dt_rank + d_state]
        Cm = x_dbl[:, dt_rank + d_state:]
        dt = jax.nn.softplus(dt_low @ p["w_dt"] + p["b_dt"][0])
        A_t = -jnp.exp(p["A_log_t"])                   # (d_state, d_inner)

        def step(h, inp):
            dt_t, u_t, B_t, C_t = inp
            dA = jnp.exp(dt_t[None, :] * A_t)
            dBu = (dt_t * u_t)[None, :] * B_t[:, None]
            h = dA * h + dBu
            y_t = jnp.sum(h * C_t[:, None], axis=0) + p["D"][0] * u_t
            return h, y_t

        h0 = jnp.zeros((d_state, d_inner), jnp.float32)
        _, ys = jax.lax.scan(step, h0, (dt, u, Bm, Cm))
        y = ys * jax.nn.silu(z)
        out = y @ p["w_out"]
        if num_layers != 1:
            out = out + xb
        mean = out.mean(-1, keepdims=True)
        var = ((out - mean) ** 2).mean(-1, keepdims=True)
        return (out - mean) / jnp.sqrt(var + 1e-12) * p["ln_g"][0] + p["ln_b"][0]

    return jax.vmap(single)(x)


# ----------------------------------------------------------------------------
# Deterministic parameter init (synthetic, Mamba-style where cheap)
# ----------------------------------------------------------------------------
def init_params(key, d_model, d_state, d_conv, expand):
    d_inner = expand * d_model
    dt_rank = -(-d_model // 16)      # ceil(d_model / 16), Mamba "auto"
    ks = jax.random.split(key, 6)
    scale = 0.02
    params = {
        "w_in":    scale * jax.random.normal(ks[0], (d_model, 2 * d_inner), jnp.float32),
        "conv_wt": scale * jax.random.normal(ks[1], (d_conv, d_inner), jnp.float32),
        "conv_b":  scale * jax.random.normal(ks[2], (1, d_inner), jnp.float32),
        "w_xproj": scale * jax.random.normal(ks[3], (d_inner, dt_rank + 2 * d_state), jnp.float32),
        "w_dt":    scale * jax.random.normal(ks[4], (dt_rank, d_inner), jnp.float32),
        "b_dt":    0.1 * jnp.ones((1, d_inner), jnp.float32),
        "A_log_t": jnp.log(jnp.broadcast_to(
            jnp.arange(1, d_state + 1, dtype=jnp.float32)[:, None], (d_state, d_inner))),
        "D":       jnp.ones((1, d_inner), jnp.float32),
        "w_out":   scale * jax.random.normal(ks[5], (d_inner, d_model), jnp.float32),
        "ln_g":    jnp.ones((1, d_model), jnp.float32),
        "ln_b":    jnp.zeros((1, d_model), jnp.float32),
    }
    return params, dt_rank


if __name__ == "__main__":
    d_model, d_state, d_conv, expand = 32, 16, 4, 2
    Bsz, L = 2, 8

    key = jax.random.PRNGKey(0)
    kx, kp = jax.random.split(key)
    params, dt_rank = init_params(kp, d_model, d_state, d_conv, expand)
    x = jax.random.normal(kx, (Bsz, L, d_model), jnp.float32)

    ok = True
    for num_layers in (1, 2):      # exercise both LayerNorm branches
        out = mamba_layer_pallas(x, params, d_state=d_state, d_conv=d_conv,
                                 dt_rank=dt_rank, num_layers=num_layers)
        out = jax.block_until_ready(out)
        ref = mamba_layer_ref(x, params, d_state=d_state, d_conv=d_conv,
                              dt_rank=dt_rank, num_layers=num_layers)
        if not jnp.allclose(out, ref, atol=2e-3, rtol=2e-3):
            ok = False
            print(f"mismatch (num_layers={num_layers}): "
                  f"max abs err {float(jnp.max(jnp.abs(out - ref)))}")

    if ok:
        print("KERNEL_OK")
</pallas_src>

<mosaic_0001>
module attributes {stable_mosaic.version = 11 : i64} {
  func.func @_mamba_layer_kernel(%arg0: i32, %arg1: memref<1x8x32xf32, #tpu.memory_space<vmem>>, %arg2: memref<32x128xf32, #tpu.memory_space<vmem>>, %arg3: memref<32x128xf32, #tpu.memory_space<vmem>>, %arg4: memref<4x128xf32, #tpu.memory_space<vmem>>, %arg5: memref<1x128xf32, #tpu.memory_space<vmem>>, %arg6: memref<128x2xf32, #tpu.memory_space<vmem>>, %arg7: memref<128x16xf32, #tpu.memory_space<vmem>>, %arg8: memref<128x16xf32, #tpu.memory_space<vmem>>, %arg9: memref<2x128xf32, #tpu.memory_space<vmem>>, %arg10: memref<1x128xf32, #tpu.memory_space<vmem>>, %arg11: memref<16x128xf32, #tpu.memory_space<vmem>>, %arg12: memref<1x128xf32, #tpu.memory_space<vmem>>, %arg13: memref<128x32xf32, #tpu.memory_space<vmem>>, %arg14: memref<1x32xf32, #tpu.memory_space<vmem>>, %arg15: memref<1x32xf32, #tpu.memory_space<vmem>>, %arg16: memref<1x8x32xf32, #tpu.memory_space<vmem>>, %arg17: memref<128x128xf32, #tpu.memory_space<vmem>>, %arg18: memref<128x128xf32, #tpu.memory_space<vmem>>) attributes {dimension_semantics = [#tpu.dimension_semantics<parallel>], iteration_bounds = array<i64: 2>, scalar_prefetch = 0 : i64, scratch_operands = 2 : i64, tpu.core_type = #tpu.core_type<tc>, window_params = [{transform_indices = @transform_0, window_bounds = array<i64: 1, 8, 32>}, {pipeline_mode = #tpu.pipeline_mode<synchronous>, transform_indices = @transform_1, window_bounds = array<i64: 32, 128>}, {pipeline_mode = #tpu.pipeline_mode<synchronous>, transform_indices = @transform_2, window_bounds = array<i64: 32, 128>}, {pipeline_mode = #tpu.pipeline_mode<synchronous>, transform_indices = @transform_3, window_bounds = array<i64: 4, 128>}, {pipeline_mode = #tpu.pipeline_mode<synchronous>, transform_indices = @transform_4, window_bounds = array<i64: 1, 128>}, {pipeline_mode = #tpu.pipeline_mode<synchronous>, transform_indices = @transform_5, window_bounds = array<i64: 128, 2>}, {pipeline_mode = #tpu.pipeline_mode<synchronous>, transform_indices = @transform_6, window_bounds = array<i64: 128, 16>}, {pipeline_mode = #tpu.pipeline_mode<synchronous>, transform_indices = @transform_7, window_bounds = array<i64: 128, 16>}, {pipeline_mode = #tpu.pipeline_mode<synchronous>, transform_indices = @transform_8, window_bounds = array<i64: 2, 128>}, {pipeline_mode = #tpu.pipeline_mode<synchronous>, transform_indices = @transform_9, window_bounds = array<i64: 1, 128>}, {pipeline_mode = #tpu.pipeline_mode<synchronous>, transform_indices = @transform_10, window_bounds = array<i64: 16, 128>}, {pipeline_mode = #tpu.pipeline_mode<synchronous>, transform_indices = @transform_11, window_bounds = array<i64: 1, 128>}, {pipeline_mode = #tpu.pipeline_mode<synchronous>, transform_indices = @transform_12, window_bounds = array<i64: 128, 32>}, {pipeline_mode = #tpu.pipeline_mode<synchronous>, transform_indices = @transform_13, window_bounds = array<i64: 1, 32>}, {pipeline_mode = #tpu.pipeline_mode<synchronous>, transform_indices = @transform_14, window_bounds = array<i64: 1, 32>}, {transform_indices = @transform_15, window_bounds = array<i64: 1, 8, 32>}]} {
    %c0 = arith.constant 0 : index
    %c0_0 = arith.constant 0 : index
    %c0_1 = arith.constant 0 : index
    %0 = vector.load %arg1[%c0, %c0_0, %c0_1] : memref<1x8x32xf32, #tpu.memory_space<vmem>>, vector<1x8x32xf32>
    %1 = vector.shape_cast %0 : vector<1x8x32xf32> to vector<8x32xf32>
    %c0_2 = arith.constant 0 : index
    %c0_3 = arith.constant 0 : index
    %2 = vector.load %arg2[%c0_2, %c0_3] : memref<32x128xf32, #tpu.memory_space<vmem>>, vector<32x128xf32>
    %cst = arith.constant dense<0.000000e+00> : vector<8x128xf32>
    %3 = tpu.matmul %1, %2, %cst {dimension_numbers = #tpu.dot_dimension_numbers<[1], [0], [0], [1], [0, 0, 1, 1], [], []>} : vector<8x32xf32>, vector<32x128xf32>, vector<8x128xf32> -> vector<8x128xf32>
    %c0_4 = arith.constant 0 : index
    %c0_5 = arith.constant 0 : index
    %4 = vector.load %arg3[%c0_4, %c0_5] : memref<32x128xf32, #tpu.memory_space<vmem>>, vector<32x128xf32>
    %cst_6 = arith.constant dense<0.000000e+00> : vector<8x128xf32>
    %5 = tpu.matmul %1, %4, %cst_6 {dimension_numbers = #tpu.dot_dimension_numbers<[1], [0], [0], [1], [0, 0, 1, 1], [], []>} : vector<8x32xf32>, vector<32x128xf32>, vector<8x128xf32> -> vector<8x128xf32>
    %6 = tpu.iota {dimensions = array<i32: 0>} : vector<8x1xi32>
    %c0_7 = arith.constant 0 : index
    %c0_8 = arith.constant 0 : index
    %7 = vector.load %arg5[%c0_7, %c0_8] : memref<1x128xf32, #tpu.memory_space<vmem>>, vector<1x128xf32>
    %8 = vector.shape_cast %7 : vector<1x128xf32> to vector<1x128xf32>
    %9 = vector.broadcast %8 : vector<1x128xf32> to vector<8x128xf32>
    %c0_9 = arith.constant 0 : index
    %c0_10 = arith.constant 0 : index
    %10 = vector.load %arg4[%c0_9, %c0_10] : memref<4x128xf32, #tpu.memory_space<vmem>>, vector<1x128xf32>
    %c3_i32 = arith.constant 3 : i32
    %11 = vector.broadcast %c3_i32 : i32 to vector<8x1xi32>
    %12 = arith.cmpi sge, %6, %11 : vector<8x1xi32>
    %c3_i32_11 = arith.constant 3 : i32
    %13 = tpu.dynamic_rotate %3 by %c3_i32_11 dim 0 : vector<8x128xf32>, i32 -> vector<8x128xf32>
    %cst_12 = arith.constant 0.000000e+00 : f32
    %14 = vector.shape_cast %12 : vector<8x1xi1> to vector<8x1xi1>
    %15 = vector.broadcast %14 : vector<8x1xi1> to vector<8x128xi1>
    %16 = vector.broadcast %cst_12 : f32 to vector<8x128xf32>
    %17 = arith.select %15, %13, %16 : vector<8x128xi1>, vector<8x128xf32>
    %18 = vector.broadcast %10 : vector<1x128xf32> to vector<8x128xf32>
    %19 = arith.mulf %18, %17 : vector<8x128xf32>
    %20 = arith.addf %9, %19 : vector<8x128xf32>
    %c1 = arith.constant 1 : index
    %c0_13 = arith.constant 0 : index
    %21 = vector.load %arg4[%c1, %c0_13] : memref<4x128xf32, #tpu.memory_space<vmem>>, vector<1x128xf32>
    %c2_i32 = arith.constant 2 : i32
    %22 = vector.broadcast %c2_i32 : i32 to vector<8x1xi32>
    %23 = arith.cmpi sge, %6, %22 : vector<8x1xi32>
    %c2_i32_14 = arith.constant 2 : i32
    %24 = tpu.dynamic_rotate %3 by %c2_i32_14 dim 0 : vector<8x128xf32>, i32 -> vector<8x128xf32>
    %cst_15 = arith.constant 0.000000e+00 : f32
    %25 = vector.shape_cast %23 : vector<8x1xi1> to vector<8x1xi1>
    %26 = vector.broadcast %25 : vector<8x1xi1> to vector<8x128xi1>
    %27 = vector.broadcast %cst_15 : f32 to vector<8x128xf32>
    %28 = arith.select %26, %24, %27 : vector<8x128xi1>, vector<8x128xf32>
    %29 = vector.broadcast %21 : vector<1x128xf32> to vector<8x128xf32>
    %30 = arith.mulf %29, %28 : vector<8x128xf32>
    %31 = arith.addf %20, %30 : vector<8x128xf32>
    %c2 = arith.constant 2 : index
    %c0_16 = arith.constant 0 : index
    %32 = vector.load %arg4[%c2, %c0_16] : memref<4x128xf32, #tpu.memory_space<vmem>>, vector<1x128xf32>
    %c1_i32 = arith.constant 1 : i32
    %33 = vector.broadcast %c1_i32 : i32 to vector<8x1xi32>
    %34 = arith.cmpi sge, %6, %33 : vector<8x1xi32>
    %c1_i32_17 = arith.constant 1 : i32
    %35 = tpu.dynamic_rotate %3 by %c1_i32_17 dim 0 : vector<8x128xf32>, i32 -> vector<8x128xf32>
    %cst_18 = arith.constant 0.000000e+00 : f32
    %36 = vector.shape_cast %34 : vector<8x1xi1> to vector<8x1xi1>
    %37 = vector.broadcast %36 : vector<8x1xi1> to vector<8x128xi1>
    %38 = vector.broadcast %cst_18 : f32 to vector<8x128xf32>
    %39 = arith.select %37, %35, %38 : vector<8x128xi1>, vector<8x128xf32>
    %40 = vector.broadcast %32 : vector<1x128xf32> to vector<8x128xf32>
    %41 = arith.mulf %40, %39 : vector<8x128xf32>
    %42 = arith.addf %31, %41 : vector<8x128xf32>
    %c3 = arith.constant 3 : index
    %c0_19 = arith.constant 0 : index
    %43 = vector.load %arg4[%c3, %c0_19] : memref<4x128xf32, #tpu.memory_space<vmem>>, vector<1x128xf32>
    %44 = vector.broadcast %43 : vector<1x128xf32> to vector<8x128xf32>
    %45 = arith.mulf %44, %3 : vector<8x128xf32>
    %46 = arith.addf %42, %45 : vector<8x128xf32>
    %47 = arith.negf %46 : vector<8x128xf32>
    %48 = math.exp %47 : vector<8x128xf32>
    %cst_20 = arith.constant 1.000000e+00 : f32
    %49 = vector.broadcast %cst_20 : f32 to vector<8x128xf32>
    %50 = arith.addf %49, %48 : vector<8x128xf32>
    %51 = arith.divf %49, %50 : vector<8x128xf32>
    %52 = arith.mulf %46, %51 : vector<8x128xf32>
    %c0_21 = arith.constant 0 : index
    %c0_22 = arith.constant 0 : index
    %53 = vector.load %arg6[%c0_21, %c0_22] : memref<128x2xf32, #tpu.memory_space<vmem>>, vector<128x2xf32>
    %cst_23 = arith.constant dense<0.000000e+00> : vector<8x2xf32>
    %54 = tpu.matmul %52, %53, %cst_23 {dimension_numbers = #tpu.dot_dimension_numbers<[1], [0], [0], [1], [0, 0, 1, 1], [], []>} : vector<8x128xf32>, vector<128x2xf32>, vector<8x2xf32> -> vector<8x2xf32>
    %c0_24 = arith.constant 0 : index
    %c0_25 = arith.constant 0 : index
    %55 = vector.load %arg7[%c0_24, %c0_25] : memref<128x16xf32, #tpu.memory_space<vmem>>, vector<128x16xf32>
    %cst_26 = arith.constant dense<0.000000e+00> : vector<8x16xf32>
    %56 = tpu.matmul %52, %55, %cst_26 {dimension_numbers = #tpu.dot_dimension_numbers<[1], [0], [0], [1], [0, 0, 1, 1], [], []>} : vector<8x128xf32>, vector<128x16xf32>, vector<8x16xf32> -> vector<8x16xf32>
    %c0_27 = arith.constant 0 : index
    %c0_28 = arith.constant 0 : index
    %57 = vector.load %arg8[%c0_27, %c0_28] : memref<128x16xf32, #tpu.memory_space<vmem>>, vector<128x16xf32>
    %cst_29 = arith.constant dense<0.000000e+00> : vector<8x16xf32>
    %58 = tpu.matmul %52, %57, %cst_29 {dimension_numbers = #tpu.dot_dimension_numbers<[1], [0], [0], [1], [0, 0, 1, 1], [], []>} : vector<8x128xf32>, vector<128x16xf32>, vector<8x16xf32> -> vector<8x16xf32>
    %c0_30 = arith.constant 0 : index
    %c0_31 = arith.constant 0 : index
    %59 = vector.load %arg9[%c0_30, %c0_31] : memref<2x128xf32, #tpu.memory_space<vmem>>, vector<2x128xf32>
    %cst_32 = arith.constant dense<0.000000e+00> : vector<8x128xf32>
    %60 = tpu.matmul %54, %59, %cst_32 {dimension_numbers = #tpu.dot_dimension_numbers<[1], [0], [0], [1], [0, 0, 1, 1], [], []>} : vector<8x2xf32>, vector<2x128xf32>, vector<8x128xf32> -> vector<8x128xf32>
    %c0_33 = arith.constant 0 : index
    %c0_34 = arith.constant 0 : index
    %61 = vector.load %arg10[%c0_33, %c0_34] : memref<1x128xf32, #tpu.memory_space<vmem>>, vector<1x128xf32>
    %62 = vector.broadcast %61 : vector<1x128xf32> to vector<8x128xf32>
    %63 = arith.addf %60, %62 : vector<8x128xf32>
    %cst_35 = arith.constant 0.000000e+00 : f32
    %64 = vector.broadcast %cst_35 : f32 to vector<8x128xf32>
    %65 = arith.maximumf %63, %64 : vector<8x128xf32>
    %66 = vector.broadcast %cst_35 : f32 to vector<8x128xf32>
    %67 = arith.subf %63, %66 : vector<8x128xf32>
    %68 = arith.cmpf one, %67, %67 : vector<8x128xf32>
    %69 = vector.broadcast %cst_35 : f32 to vector<8x128xf32>
    %70 = arith.addf %63, %69 : vector<8x128xf32>
    %71 = math.absf %67 : vector<8x128xf32>
    %cst_36 = arith.constant 0.000000e+00 : f32
    %72 = vector.broadcast %cst_36 : f32 to vector<8x128xf32>
    %73 = arith.subf %72, %71 : vector<8x128xf32>
    %74 = math.exp %73 : vector<8x128xf32>
    %75 = math.log1p %74 : vector<8x128xf32>
    %76 = arith.addf %65, %75 : vector<8x128xf32>
    %77 = arith.select %68, %70, %76 : vector<8x128xi1>, vector<8x128xf32>
    %78 = arith.mulf %77, %52 : vector<8x128xf32>
    %c0_37 = arith.constant 0 : index
    %c0_38 = arith.constant 0 : index
    %79 = vector.load %arg11[%c0_37, %c0_38] : memref<16x128xf32, #tpu.memory_space<vmem>>, vector<1x128xf32>
    %80 = vector.extract_strided_slice %56 {offsets = [0, 0], sizes = [8, 1], strides = [1, 1]} : vector<8x16xf32> to vector<8x1xf32>
    %81 = vector.broadcast %79 : vector<1x128xf32> to vector<8x128xf32>
    %82 = arith.mulf %77, %81 : vector<8x128xf32>
    %83 = math.exp %82 : vector<8x128xf32>
    %c0_39 = arith.constant 0 : index
    %c0_40 = arith.constant 0 : index
    %84 = tpu.strided_load %arg17[%c0_39, %c0_40] {strides = array<i32: 16, 1>} : memref<128x128xf32, #tpu.memory_space<vmem>>, vector<8x128xf32>
    tpu.strided_store %arg17[%c0_39, %c0_40], %83 {strides = array<i32: 16, 1>} : memref<128x128xf32, #tpu.memory_space<vmem>>, vector<8x128xf32>
    %85 = vector.broadcast %80 : vector<8x1xf32> to vector<8x128xf32>
    %86 = arith.mulf %78, %85 : vector<8x128xf32>
    %c0_41 = arith.constant 0 : index
    %c0_42 = arith.constant 0 : index
    %87 = tpu.strided_load %arg18[%c0_41, %c0_42] {strides = array<i32: 16, 1>} : memref<128x128xf32, #tpu.memory_space<vmem>>, vector<8x128xf32>
    tpu.strided_store %arg18[%c0_41, %c0_42], %86 {strides = array<i32: 16, 1>} : memref<128x128xf32, #tpu.memory_space<vmem>>, vector<8x128xf32>
    %c1_43 = arith.constant 1 : index
    %c0_44 = arith.constant 0 : index
    %88 = vector.load %arg11[%c1_43, %c0_44] : memref<16x128xf32, #tpu.memory_space<vmem>>, vector<1x128xf32>
    %89 = vector.extract_strided_slice %56 {offsets = [0, 1], sizes = [8, 1], strides = [1, 1]} : vector<8x16xf32> to vector<8x1xf32>
    %90 = vector.broadcast %88 : vector<1x128xf32> to vector<8x128xf32>
    %91 = arith.mulf %77, %90 : vector<8x128xf32>
    %92 = math.exp %91 : vector<8x128xf32>
    %c1_45 = arith.constant 1 : index
    %c0_46 = arith.constant 0 : index
    %93 = tpu.strided_load %arg17[%c1_45, %c0_46] {strides = array<i32: 16, 1>} : memref<128x128xf32, #tpu.memory_space<vmem>>, vector<8x128xf32>
    tpu.strided_store %arg17[%c1_45, %c0_46], %92 {strides = array<i32: 16, 1>} : memref<128x128xf32, #tpu.memory_space<vmem>>, vector<8x128xf32>
    %94 = vector.broadcast %89 : vector<8x1xf32> to vector<8x128xf32>
    %95 = arith.mulf %78, %94 : vector<8x128xf32>
    %c1_47 = arith.constant 1 : index
    %c0_48 = arith.constant 0 : index
    %96 = tpu.strided_load %arg18[%c1_47, %c0_48] {strides = array<i32: 16, 1>} : memref<128x128xf32, #tpu.memory_space<vmem>>, vector<8x128xf32>
    tpu.strided_store %arg18[%c1_47, %c0_48], %95 {strides = array<i32: 16, 1>} : memref<128x128xf32, #tpu.memory_space<vmem>>, vector<8x128xf32>
    %c2_49 = arith.constant 2 : index
    %c0_50 = arith.constant 0 : index
    %97 = vector.load %arg11[%c2_49, %c0_50] : memref<16x128xf32, #tpu.memory_space<vmem>>, vector<1x128xf32>
    %98 = vector.extract_strided_slice %56 {offsets = [0, 2], sizes = [8, 1], strides = [1, 1]} : vector<8x16xf32> to vector<8x1xf32>
    %99 = vector.broadcast %97 : vector<1x128xf32> to vector<8x128xf32>
    %100 = arith.mulf %77, %99 : vector<8x128xf32>
    %101 = math.exp %100 : vector<8x128xf32>
    %c2_51 = arith.constant 2 : index
    %c0_52 = arith.constant 0 : index
    %102 = tpu.strided_load %arg17[%c2_51, %c0_52] {strides = array<i32: 16, 1>} : memref<128x128xf32, #tpu.memory_space<vmem>>, vector<8x128xf32>
    tpu.strided_store %arg17[%c2_51, %c0_52], %101 {strides = array<i32: 16, 1>} : memref<128x128xf32, #tpu.memory_space<vmem>>, vector<8x128xf32>
    %103 = vector.broadcast %98 : vector<8x1xf32> to vector<8x128xf32>
    %104 = arith.mulf %78, %103 : vector<8x128xf32>
    %c2_53 = arith.constant 2 : index
    %c0_54 = arith.constant 0 : index
    %105 = tpu.strided_load %arg18[%c2_53, %c0_54] {strides = array<i32: 16, 1>} : memref<128x128xf32, #tpu.memory_space<vmem>>, vector<8x128xf32>
    tpu.strided_store %arg18[%c2_53, %c0_54], %104 {strides = array<i32: 16, 1>} : memref<128x128xf32, #tpu.memory_space<vmem>>, vector<8x128xf32>
    %c3_55 = arith.constant 3 : index
    %c0_56 = arith.constant 0 : index
    %106 = vector.load %arg11[%c3_55, %c0_56] : memref<16x128xf32, #tpu.memory_space<vmem>>, vector<1x128xf32>
    %107 = vector.extract_strided_slice %56 {offsets = [0, 3], sizes = [8, 1], strides = [1, 1]} : vector<8x16xf32> to vector<8x1xf32>
    %108 = vector.broadcast %106 : vector<1x128xf32> to vector<8x128xf32>
    %109 = arith.mulf %77, %108 : vector<8x128xf32>
    %110 = math.exp %109 : vector<8x128xf32>
    %c3_57 = arith.constant 3 : index
    %c0_58 = arith.constant 0 : index
    %111 = tpu.strided_load %arg17[%c3_57, %c0_58] {strides = array<i32: 16, 1>} : memref<128x128xf32, #tpu.memory_space<vmem>>, vector<8x128xf32>
    tpu.strided_store %arg17[%c3_57, %c0_58], %110 {strides = array<i32: 16, 1>} : memref<128x128xf32, #tpu.memory_space<vmem>>, vector<8x128xf32>
    %112 = vector.broadcast %107 : vector<8x1xf32> to vector<8x128xf32>
    %113 = arith.mulf %78, %112 : vector<8x128xf32>
    %c3_59 = arith.constant 3 : index
    %c0_60 = arith.constant 0 : index
    %114 = tpu.strided_load %arg18[%c3_59, %c0_60] {strides = array<i32: 16, 1>} : memref<128x128xf32, #tpu.memory_space<vmem>>, vector<8x128xf32>
    tpu.strided_store %arg18[%c3_59, %c0_60], %113 {strides = array<i32: 16, 1>} : memref<128x128xf32, #tpu.memory_space<vmem>>, vector<8x128xf32>
    %c4 = arith.constant 4 : index
    %c0_61 = arith.constant 0 : index
    %115 = vector.load %arg11[%c4, %c0_61] : memref<16x128xf32, #tpu.memory_space<vmem>>, vector<1x128xf32>
    %116 = vector.extract_strided_slice %56 {offsets = [0, 4], sizes = [8, 1], strides = [1, 1]} : vector<8x16xf32> to vector<8x1xf32>
    %117 = vector.broadcast %115 : vector<1x128xf32> to vector<8x128xf32>
    %118 = arith.mulf %77, %117 : vector<8x128xf32>
    %119 = math.exp %118 : vector<8x128xf32>
    %c4_62 = arith.constant 4 : index
    %c0_63 = arith.constant 0 : index
    %120 = tpu.strided_load %arg17[%c4_62, %c0_63] {strides = array<i32: 16, 1>} : memref<128x128xf32, #tpu.memory_space<vmem>>, vector<8x128xf32>
    tpu.strided_store %arg17[%c4_62, %c0_63], %119 {strides = array<i32: 16, 1>} : memref<128x128xf32, #tpu.memory_space<vmem>>, vector<8x128xf32>
    %121 = vector.broadcast %116 : vector<8x1xf32> to vector<8x128xf32>
    %122 = arith.mulf %78, %121 : vector<8x128xf32>
    %c4_64 = arith.constant 4 : index
    %c0_65 = arith.constant 0 : index
    %123 = tpu.strided_load %arg18[%c4_64, %c0_65] {strides = array<i32: 16, 1>} : memref<128x128xf32, #tpu.memory_space<vmem>>, vector<8x128xf32>
    tpu.strided_store %arg18[%c4_64, %c0_65], %122 {strides = array<i32: 16, 1>} : memref<128x128xf32, #tpu.memory_space<vmem>>, vector<8x128xf32>
    %c5 = arith.constant 5 : index
    %c0_66 = arith.constant 0 : index
    %124 = vector.load %arg11[%c5, %c0_66] : memref<16x128xf32, #tpu.memory_space<vmem>>, vector<1x128xf32>
    %125 = vector.extract_strided_slice %56 {offsets = [0, 5], sizes = [8, 1], strides = [1, 1]} : vector<8x16xf32> to vector<8x1xf32>
    %126 = vector.broadcast %124 : vector<1x128xf32> to vector<8x128xf32>
    %127 = arith.mulf %77, %126 : vector<8x128xf32>
    %128 = math.exp %127 : vector<8x128xf32>
    %c5_67 = arith.constant 5 : index
    %c0_68 = arith.constant 0 : index
    %129 = tpu.strided_load %arg17[%c5_67, %c0_68] {strides = array<i32: 16, 1>} : memref<128x128xf32, #tpu.memory_space<vmem>>, vector<8x128xf32>
    tpu.strided_store %arg17[%c5_67, %c0_68], %128 {strides = array<i32: 16, 1>} : memref<128x128xf32, #tpu.memory_space<vmem>>, vector<8x128xf32>
    %130 = vector.broadcast %125 : vector<8x1xf32> to vector<8x128xf32>
    %131 = arith.mulf %78, %130 : vector<8x128xf32>
    %c5_69 = arith.constant 5 : index
    %c0_70 = arith.constant 0 : index
    %132 = tpu.strided_load %arg18[%c5_69, %c0_70] {strides = array<i32: 16, 1>} : memref<128x128xf32, #tpu.memory_space<vmem>>, vector<8x128xf32>
    tpu.strided_store %arg18[%c5_69, %c0_70], %131 {strides = array<i32: 16, 1>} : memref<128x128xf32, #tpu.memory_space<vmem>>, vector<8x128xf32>
    %c6 = arith.constant 6 : index
    %c0_71 = arith.constant 0 : index
    %133 = vector.load %arg11[%c6, %c0_71] : memref<16x128xf32, #tpu.memory_space<vmem>>, vector<1x128xf32>
    %134 = vector.extract_strided_slice %56 {offsets = [0, 6], sizes = [8, 1], strides = [1, 1]} : vector<8x16xf32> to vector<8x1xf32>
    %135 = vector.broadcast %133 : vector<1x128xf32> to vector<8x128xf32>
    %136 = arith.mulf %77, %135 : vector<8x128xf32>
    %137 = math.exp %136 : vector<8x128xf32>
    %c6_72 = arith.constant 6 : index
    %c0_73 = arith.constant 0 : index
    %138 = tpu.strided_load %arg17[%c6_72, %c0_73] {strides = array<i32: 16, 1>} : memref<128x128xf32, #tpu.memory_space<vmem>>, vector<8x128xf32>
    tpu.strided_store %arg17[%c6_72, %c0_73], %137 {strides = array<i32: 16, 1>} : memref<128x128xf32, #tpu.memory_space<vmem>>, vector<8x128xf32>
    %139 = vector.broadcast %134 : vector<8x1xf32> to vector<8x128xf32>
    %140 = arith.mulf %78, %139 : vector<8x128xf32>
    %c6_74 = arith.constant 6 : index
    %c0_75 = arith.constant 0 : index
    %141 = tpu.strided_load %arg18[%c6_74, %c0_75] {strides = array<i32: 16, 1>} : memref<128x128xf32, #tpu.memory_space<vmem>>, vector<8x128xf32>
    tpu.strided_store %arg18[%c6_74, %c0_75], %140 {strides = array<i32: 16, 1>} : memref<128x128xf32, #tpu.memory_space<vmem>>, vector<8x128xf32>
    %c7 = arith.constant 7 : index
    %c0_76 = arith.constant 0 : index
    %142 = vector.load %arg11[%c7, %c0_76] : memref<16x128xf32, #tpu.memory_space<vmem>>, vector<1x128xf32>
    %143 = vector.extract_strided_slice %56 {offsets = [0, 7], sizes = [8, 1], strides = [1, 1]} : vector<8x16xf32> to vector<8x1xf32>
    %144 = vector.broadcast %142 : vector<1x128xf32> to vector<8x128xf32>
    %145 = arith.mulf %77, %144 : vector<8x128xf32>
    %146 = math.exp %145 : vector<8x128xf32>
    %c7_77 = arith.constant 7 : index
    %c0_78 = arith.constant 0 : index
    %147 = tpu.strided_load %arg17[%c7_77, %c0_78] {strides = array<i32: 16, 1>} : memref<128x128xf32, #tpu.memory_space<vmem>>, vector<8x128xf32>
    tpu.strided_store %arg17[%c7_77, %c0_78], %146 {strides = array<i32: 16, 1>} : memref<128x128xf32, #tpu.memory_space<vmem>>, vector<8x128xf32>
    %148 = vector.broadcast %143 : vector<8x1xf32> to vector<8x128xf32>
    %149 = arith.mulf %78, %148 : vector<8x128xf32>
    %c7_79 = arith.constant 7 : index
    %c0_80 = arith.constant 0 : index
    %150 = tpu.strided_load %arg18[%c7_79, %c0_80] {strides = array<i32: 16, 1>} : memref<128x128xf32, #tpu.memory_space<vmem>>, vector<8x128xf32>
    tpu.strided_store %arg18[%c7_79, %c0_80], %149 {strides = array<i32: 16, 1>} : memref<128x128xf32, #tpu.memory_space<vmem>>, vector<8x128xf32>
    %c8 = arith.constant 8 : index
    %c0_81 = arith.constant 0 : index
    %151 = vector.load %arg11[%c8, %c0_81] : memref<16x128xf32, #tpu.memory_space<vmem>>, vector<1x128xf32>
    %152 = vector.extract_strided_slice %56 {offsets = [0, 8], sizes = [8, 1], strides = [1, 1]} : vector<8x16xf32> to vector<8x1xf32>
    %153 = vector.broadcast %151 : vector<1x128xf32> to vector<8x128xf32>
    %154 = arith.mulf %77, %153 : vector<8x128xf32>
    %155 = math.exp %154 : vector<8x128xf32>
    %c8_82 = arith.constant 8 : index
    %c0_83 = arith.constant 0 : index
    %156 = tpu.strided_load %arg17[%c8_82, %c0_83] {strides = array<i32: 16, 1>} : memref<128x128xf32, #tpu.memory_space<vmem>>, vector<8x128xf32>
    tpu.strided_store %arg17[%c8_82, %c0_83], %155 {strides = array<i32: 16, 1>} : memref<128x128xf32, #tpu.memory_space<vmem>>, vector<8x128xf32>
    %157 = vector.broadcast %152 : vector<8x1xf32> to vector<8x128xf32>
    %158 = arith.mulf %78, %157 : vector<8x128xf32>
    %c8_84 = arith.constant 8 : index
    %c0_85 = arith.constant 0 : index
    %159 = tpu.strided_load %arg18[%c8_84, %c0_85] {strides = array<i32: 16, 1>} : memref<128x128xf32, #tpu.memory_space<vmem>>, vector<8x128xf32>
    tpu.strided_store %arg18[%c8_84, %c0_85], %158 {strides = array<i32: 16, 1>} : memref<128x128xf32, #tpu.memory_space<vmem>>, vector<8x128xf32>
    %c9 = arith.constant 9 : index
    %c0_86 = arith.constant 0 : index
    %160 = vector.load %arg11[%c9, %c0_86] : memref<16x128xf32, #tpu.memory_space<vmem>>, vector<1x128xf32>
    %161 = vector.extract_strided_slice %56 {offsets = [0, 9], sizes = [8, 1], strides = [1, 1]} : vector<8x16xf32> to vector<8x1xf32>
    %162 = vector.broadcast %160 : vector<1x128xf32> to vector<8x128xf32>
    %163 = arith.mulf %77, %162 : vector<8x128xf32>
    %164 = math.exp %163 : vector<8x128xf32>
    %c9_87 = arith.constant 9 : index
    %c0_88 = arith.constant 0 : index
    %165 = tpu.strided_load %arg17[%c9_87, %c0_88] {strides = array<i32: 16, 1>} : memref<128x128xf32, #tpu.memory_space<vmem>>, vector<8x128xf32>
    tpu.strided_store %arg17[%c9_87, %c0_88], %164 {strides = array<i32: 16, 1>} : memref<128x128xf32, #tpu.memory_space<vmem>>, vector<8x128xf32>
    %166 = vector.broadcast %161 : vector<8x1xf32> to vector<8x128xf32>
    %167 = arith.mulf %78, %166 : vector<8x128xf32>
    %c9_89 = arith.constant 9 : index
    %c0_90 = arith.constant 0 : index
    %168 = tpu.strided_load %arg18[%c9_89, %c0_90] {strides = array<i32: 16, 1>} : memref<128x128xf32, #tpu.memory_space<vmem>>, vector<8x128xf32>
    tpu.strided_store %arg18[%c9_89, %c0_90], %167 {strides = array<i32: 16, 1>} : memref<128x128xf32, #tpu.memory_space<vmem>>, vector<8x128xf32>
    %c10 = arith.constant 10 : index
    %c0_91 = arith.constant 0 : index
    %169 = vector.load %arg11[%c10, %c0_91] : memref<16x128xf32, #tpu.memory_space<vmem>>, vector<1x128xf32>
    %170 = vector.extract_strided_slice %56 {offsets = [0, 10], sizes = [8, 1], strides = [1, 1]} : vector<8x16xf32> to vector<8x1xf32>
    %171 = vector.broadcast %169 : vector<1x128xf32> to vector<8x128xf32>
    %172 = arith.mulf %77, %171 : vector<8x128xf32>
    %173 = math.exp %172 : vector<8x128xf32>
    %c10_92 = arith.constant 10 : index
    %c0_93 = arith.constant 0 : index
    %174 = tpu.strided_load %arg17[%c10_92, %c0_93] {strides = array<i32: 16, 1>} : memref<128x128xf32, #tpu.memory_space<vmem>>, vector<8x128xf32>
    tpu.strided_store %arg17[%c10_92, %c0_93], %173 {strides = array<i32: 16, 1>} : memref<128x128xf32, #tpu.memory_space<vmem>>, vector<8x128xf32>
    %175 = vector.broadcast %170 : vector<8x1xf32> to vector<8x128xf32>
    %176 = arith.mulf %78, %175 : vector<8x128xf32>
    %c10_94 = arith.constant 10 : index
    %c0_95 = arith.constant 0 : index
    %177 = tpu.strided_load %arg18[%c10_94, %c0_95] {strides = array<i32: 16, 1>} : memref<128x128xf32, #tpu.memory_space<vmem>>, vector<8x128xf32>
    tpu.strided_store %arg18[%c10_94, %c0_95], %176 {strides = array<i32: 16, 1>} : memref<128x128xf32, #tpu.memory_space<vmem>>, vector<8x128xf32>
    %c11 = arith.constant 11 : index
    %c0_96 = arith.constant 0 : index
    %178 = vector.load %arg11[%c11, %c0_96] : memref<16x128xf32, #tpu.memory_space<vmem>>, vector<1x128xf32>
    %179 = vector.extract_strided_slice %56 {offsets = [0, 11], sizes = [8, 1], strides = [1, 1]} : vector<8x16xf32> to vector<8x1xf32>
    %180 = vector.broadcast %178 : vector<1x128xf32> to vector<8x128xf32>
    %181 = arith.mulf %77, %180 : vector<8x128xf32>
    %182 = math.exp %181 : vector<8x128xf32>
    %c11_97 = arith.constant 11 : index
    %c0_98 = arith.constant 0 : index
    %183 = tpu.strided_load %arg17[%c11_97, %c0_98] {strides = array<i32: 16, 1>} : memref<128x128xf32, #tpu.memory_space<vmem>>, vector<8x128xf32>
    tpu.strided_store %arg17[%c11_97, %c0_98], %182 {strides = array<i32: 16, 1>} : memref<128x128xf32, #tpu.memory_space<vmem>>, vector<8x128xf32>
    %184 = vector.broadcast %179 : vector<8x1xf32> to vector<8x128xf32>
    %185 = arith.mulf %78, %184 : vector<8x128xf32>
    %c11_99 = arith.constant 11 : index
    %c0_100 = arith.constant 0 : index
    %186 = tpu.strided_load %arg18[%c11_99, %c0_100] {strides = array<i32: 16, 1>} : memref<128x128xf32, #tpu.memory_space<vmem>>, vector<8x128xf32>
    tpu.strided_store %arg18[%c11_99, %c0_100], %185 {strides = array<i32: 16, 1>} : memref<128x128xf32, #tpu.memory_space<vmem>>, vector<8x128xf32>
    %c12 = arith.constant 12 : index
    %c0_101 = arith.constant 0 : index
    %187 = vector.load %arg11[%c12, %c0_101] : memref<16x128xf32, #tpu.memory_space<vmem>>, vector<1x128xf32>
    %188 = vector.extract_strided_slice %56 {offsets = [0, 12], sizes = [8, 1], strides = [1, 1]} : vector<8x16xf32> to vector<8x1xf32>
    %189 = vector.broadcast %187 : vector<1x128xf32> to vector<8x128xf32>
    %190 = arith.mulf %77, %189 : vector<8x128xf32>
    %191 = math.exp %190 : vector<8x128xf32>
    %c12_102 = arith.constant 12 : index
    %c0_103 = arith.constant 0 : index
    %192 = tpu.strided_load %arg17[%c12_102, %c0_103] {strides = array<i32: 16, 1>} : memref<128x128xf32, #tpu.memory_space<vmem>>, vector<8x128xf32>
    tpu.strided_store %arg17[%c12_102, %c0_103], %191 {strides = array<i32: 16, 1>} : memref<128x128xf32, #tpu.memory_space<vmem>>, vector<8x128xf32>
    %193 = vector.broadcast %188 : vector<8x1xf32> to vector<8x128xf32>
    %194 = arith.mulf %78, %193 : vector<8x128xf32>
    %c12_104 = arith.constant 12 : index
    %c0_105 = arith.constant 0 : index
    %195 = tpu.strided_load %arg18[%c12_104, %c0_105] {strides = array<i32: 16, 1>} : memref<128x128xf32, #tpu.memory_space<vmem>>, vector<8x128xf32>
    tpu.strided_store %arg18[%c12_104, %c0_105], %194 {strides = array<i32: 16, 1>} : memref<128x128xf32, #tpu.memory_space<vmem>>, vector<8x128xf32>
    %c13 = arith.constant 13 : index
    %c0_106 = arith.constant 0 : index
    %196 = vector.load %arg11[%c13, %c0_106] : memref<16x128xf32, #tpu.memory_space<vmem>>, vector<1x128xf32>
    %197 = vector.extract_strided_slice %56 {offsets = [0, 13], sizes = [8, 1], strides = [1, 1]} : vector<8x16xf32> to vector<8x1xf32>
    %198 = vector.broadcast %196 : vector<1x128xf32> to vector<8x128xf32>
    %199 = arith.mulf %77, %198 : vector<8x128xf32>
    %200 = math.exp %199 : vector<8x128xf32>
    %c13_107 = arith.constant 13 : index
    %c0_108 = arith.constant 0 : index
    %201 = tpu.strided_load %arg17[%c13_107, %c0_108] {strides = array<i32: 16, 1>} : memref<128x128xf32, #tpu.memory_space<vmem>>, vector<8x128xf32>
    tpu.strided_store %arg17[%c13_107, %c0_108], %200 {strides = array<i32: 16, 1>} : memref<128x128xf32, #tpu.memory_space<vmem>>, vector<8x128xf32>
    %202 = vector.broadcast %197 : vector<8x1xf32> to vector<8x128xf32>
    %203 = arith.mulf %78, %202 : vector<8x128xf32>
    %c13_109 = arith.constant 13 : index
    %c0_110 = arith.constant 0 : index
    %204 = tpu.strided_load %arg18[%c13_109, %c0_110] {strides = array<i32: 16, 1>} : memref<128x128xf32, #tpu.memory_space<vmem>>, vector<8x128xf32>
    tpu.strided_store %arg18[%c13_109, %c0_110], %203 {strides = array<i32: 16, 1>} : memref<128x128xf32, #tpu.memory_space<vmem>>, vector<8x128xf32>
    %c14 = arith.constant 14 : index
    %c0_111 = arith.constant 0 : index
    %205 = vector.load %arg11[%c14, %c0_111] : memref<16x128xf32, #tpu.memory_space<vmem>>, vector<1x128xf32>
    %206 = vector.extract_strided_slice %56 {offsets = [0, 14], sizes = [8, 1], strides = [1, 1]} : vector<8x16xf32> to vector<8x1xf32>
    %207 = vector.broadcast %205 : vector<1x128xf32> to vector<8x128xf32>
    %208 = arith.mulf %77, %207 : vector<8x128xf32>
    %209 = math.exp %208 : vector<8x128xf32>
    %c14_112 = arith.constant 14 : index
    %c0_113 = arith.constant 0 : index
    %210 = tpu.strided_load %arg17[%c14_112, %c0_113] {strides = array<i32: 16, 1>} : memref<128x128xf32, #tpu.memory_space<vmem>>, vector<8x128xf32>
    tpu.strided_store %arg17[%c14_112, %c0_113], %209 {strides = array<i32: 16, 1>} : memref<128x128xf32, #tpu.memory_space<vmem>>, vector<8x128xf32>
    %211 = vector.broadcast %206 : vector<8x1xf32> to vector<8x128xf32>
    %212 = arith.mulf %78, %211 : vector<8x128xf32>
    %c14_114 = arith.constant 14 : index
    %c0_115 = arith.constant 0 : index
    %213 = tpu.strided_load %arg18[%c14_114, %c0_115] {strides = array<i32: 16, 1>} : memref<128x128xf32, #tpu.memory_space<vmem>>, vector<8x128xf32>
    tpu.strided_store %arg18[%c14_114, %c0_115], %212 {strides = array<i32: 16, 1>} : memref<128x128xf32, #tpu.memory_space<vmem>>, vector<8x128xf32>
    %c15 = arith.constant 15 : index
    %c0_116 = arith.constant 0 : index
    %214 = vector.load %arg11[%c15, %c0_116] : memref<16x128xf32, #tpu.memory_space<vmem>>, vector<1x128xf32>
    %215 = vector.extract_strided_slice %56 {offsets = [0, 15], sizes = [8, 1], strides = [1, 1]} : vector<8x16xf32> to vector<8x1xf32>
    %216 = vector.broadcast %214 : vector<1x128xf32> to vector<8x128xf32>
    %217 = arith.mulf %77, %216 : vector<8x128xf32>
    %218 = math.exp %217 : vector<8x128xf32>
    %c15_117 = arith.constant 15 : index
    %c0_118 = arith.constant 0 : index
    %219 = tpu.strided_load %arg17[%c15_117, %c0_118] {strides = array<i32: 16, 1>} : memref<128x128xf32, #tpu.memory_space<vmem>>, vector<8x128xf32>
    tpu.strided_store %arg17[%c15_117, %c0_118], %218 {strides = array<i32: 16, 1>} : memref<128x128xf32, #tpu.memory_space<vmem>>, vector<8x128xf32>
    %220 = vector.broadcast %215 : vector<8x1xf32> to vector<8x128xf32>
    %221 = arith.mulf %78, %220 : vector<8x128xf32>
    %c15_119 = arith.constant 15 : index
    %c0_120 = arith.constant 0 : index
    %222 = tpu.strided_load %arg18[%c15_119, %c0_120] {strides = array<i32: 16, 1>} : memref<128x128xf32, #tpu.memory_space<vmem>>, vector<8x128xf32>
    tpu.strided_store %arg18[%c15_119, %c0_120], %221 {strides = array<i32: 16, 1>} : memref<128x128xf32, #tpu.memory_space<vmem>>, vector<8x128xf32>
    %cst_121 = arith.constant 0.000000e+00 : f32
    %223 = vector.broadcast %cst_121 : f32 to vector<16x128xf32>
    %c0_i32 = arith.constant 0 : i32
    %c16_i32 = arith.constant 16 : i32
    %224 = arith.muli %c0_i32, %c16_i32 : i32
    %225 = tpu.assume_multiple %224, 8 : i32
    %226 = arith.index_cast %225 : i32 to index
    %c0_122 = arith.constant 0 : index
    %227 = vector.load %arg17[%226, %c0_122] : memref<128x128xf32, #tpu.memory_space<vmem>>, vector<16x128xf32>
    %228 = arith.mulf %227, %223 : vector<16x128xf32>
    %229 = arith.index_cast %225 : i32 to index
    %c0_123 = arith.constant 0 : index
    %230 = vector.load %arg18[%229, %c0_123] : memref<128x128xf32, #tpu.memory_space<vmem>>, vector<16x128xf32>
    %231 = arith.addf %228, %230 : vector<16x128xf32>
    %232 = arith.index_cast %225 : i32 to index
    %c0_124 = arith.constant 0 : index
    %233 = vector.load %arg18[%232, %c0_124] : memref<128x128xf32, #tpu.memory_space<vmem>>, vector<16x128xf32>
    tpu.vector_store %arg18[%232, %c0_124], %231 {strides = array<i32>} : memref<128x128xf32, #tpu.memory_space<vmem>>, vector<16x128xf32>,
    %c1_i32_125 = arith.constant 1 : i32
    %c16_i32_126 = arith.constant 16 : i32
    %234 = arith.muli %c1_i32_125, %c16_i32_126 : i32
    %235 = tpu.assume_multiple %234, 8 : i32
    %236 = arith.index_cast %235 : i32 to index
    %c0_127 = arith.constant 0 : index
    %237 = vector.load %arg17[%236, %c0_127] : memref<128x128xf32, #tpu.memory_space<vmem>>, vector<16x128xf32>
    %238 = arith.mulf %237, %231 : vector<16x128xf32>
    %239 = arith.index_cast %235 : i32 to index
    %c0_128 = arith.constant 0 : index
    %240 = vector.load %arg18[%239, %c0_128] : memref<128x128xf32, #tpu.memory_space<vmem>>, vector<16x128xf32>
    %241 = arith.addf %238, %240 : vector<16x128xf32>
    %242 = arith.index_cast %235 : i32 to index
    %c0_129 = arith.constant 0 : index
    %243 = vector.load %arg18[%242, %c0_129] : memref<128x128xf32, #tpu.memory_space<vmem>>, vector<16x128xf32>
    tpu.vector_store %arg18[%242, %c0_129], %241 {strides = array<i32>} : memref<128x128xf32, #tpu.memory_space<vmem>>, vector<16x128xf32>,
    %c2_i32_130 = arith.constant 2 : i32
    %c16_i32_131 = arith.constant 16 : i32
    %244 = arith.muli %c2_i32_130, %c16_i32_131 : i32
    %245 = tpu.assume_multiple %244, 8 : i32
    %246 = arith.index_cast %245 : i32 to index
    %c0_132 = arith.constant 0 : index
    %247 = vector.load %arg17[%246, %c0_132] : memref<128x128xf32, #tpu.memory_space<vmem>>, vector<16x128xf32>
    %248 = arith.mulf %247, %241 : vector<16x128xf32>
    %249 = arith.index_cast %245 : i32 to index
    %c0_133 = arith.constant 0 : index
    %250 = vector.load %arg18[%249, %c0_133] : memref<128x128xf32, #tpu.memory_space<vmem>>, vector<16x128xf32>
    %251 = arith.addf %248, %250 : vector<16x128xf32>
    %252 = arith.index_cast %245 : i32 to index
    %c0_134 = arith.constant 0 : index
    %253 = vector.load %arg18[%252, %c0_134] : memref<128x128xf32, #tpu.memory_space<vmem>>, vector<16x128xf32>
    tpu.vector_store %arg18[%252, %c0_134], %251 {strides = array<i32>} : memref<128x128xf32, #tpu.memory_space<vmem>>, vector<16x128xf32>,
    %c3_i32_135 = arith.constant 3 : i32
    %c16_i32_136 = arith.constant 16 : i32
    %254 = arith.muli %c3_i32_135, %c16_i32_136 : i32
    %255 = tpu.assume_multiple %254, 8 : i32
    %256 = arith.index_cast %255 : i32 to index
    %c0_137 = arith.constant 0 : index
    %257 = vector.load %arg17[%256, %c0_137] : memref<128x128xf32, #tpu.memory_space<vmem>>, vector<16x128xf32>
    %258 = arith.mulf %257, %251 : vector<16x128xf32>
    %259 = arith.index_cast %255 : i32 to index
    %c0_138 = arith.constant 0 : index
    %260 = vector.load %arg18[%259, %c0_138] : memref<128x128xf32, #tpu.memory_space<vmem>>, vector<16x128xf32>
    %261 = arith.addf %258, %260 : vector<16x128xf32>
    %262 = arith.index_cast %255 : i32 to index
    %c0_139 = arith.constant 0 : index
    %263 = vector.load %arg18[%262, %c0_139] : memref<128x128xf32, #tpu.memory_space<vmem>>, vector<16x128xf32>
    tpu.vector_store %arg18[%262, %c0_139], %261 {strides = array<i32>} : memref<128x128xf32, #tpu.memory_space<vmem>>, vector<16x128xf32>,
    %c4_i32 = arith.constant 4 : i32
    %c16_i32_140 = arith.constant 16 : i32
    %264 = arith.muli %c4_i32, %c16_i32_140 : i32
    %265 = tpu.assume_multiple %264, 8 : i32
    %266 = arith.index_cast %265 : i32 to index
    %c0_141 = arith.constant 0 : index
    %267 = vector.load %arg17[%266, %c0_141] : memref<128x128xf32, #tpu.memory_space<vmem>>, vector<16x128xf32>
    %268 = arith.mulf %267, %261 : vector<16x128xf32>
    %269 = arith.index_cast %265 : i32 to index
    %c0_142 = arith.constant 0 : index
    %270 = vector.load %arg18[%269, %c0_142] : memref<128x128xf32, #tpu.memory_space<vmem>>, vector<16x128xf32>
    %271 = arith.addf %268, %270 : vector<16x128xf32>
    %272 = arith.index_cast %265 : i32 to index
    %c0_143 = arith.constant 0 : index
    %273 = vector.load %arg18[%272, %c0_143] : memref<128x128xf32, #tpu.memory_space<vmem>>, vector<16x128xf32>
    tpu.vector_store %arg18[%272, %c0_143], %271 {strides = array<i32>} : memref<128x128xf32, #tpu.memory_space<vmem>>, vector<16x128xf32>,
    %c5_i32 = arith.constant 5 : i32
    %c16_i32_144 = arith.constant 16 : i32
    %274 = arith.muli %c5_i32, %c16_i32_144 : i32
    %275 = tpu.assume_multiple %274, 8 : i32
    %276 = arith.index_cast %275 : i32 to index
    %c0_145 = arith.constant 0 : index
    %277 = vector.load %arg17[%276, %c0_145] : memref<128x128xf32, #tpu.memory_space<vmem>>, vector<16x128xf32>
    %278 = arith.mulf %277, %271 : vector<16x128xf32>
    %279 = arith.index_cast %275 : i32 to index
    %c0_146 = arith.constant 0 : index
    %280 = vector.load %arg18[%279, %c0_146] : memref<128x128xf32, #tpu.memory_space<vmem>>, vector<16x128xf32>
    %281 = arith.addf %278, %280 : vector<16x128xf32>
    %282 = arith.index_cast %275 : i32 to index
    %c0_147 = arith.constant 0 : index
    %283 = vector.load %arg18[%282, %c0_147] : memref<128x128xf32, #tpu.memory_space<vmem>>, vector<16x128xf32>
    tpu.vector_store %arg18[%282, %c0_147], %281 {strides = array<i32>} : memref<128x128xf32, #tpu.memory_space<vmem>>, vector<16x128xf32>,
    %c6_i32 = arith.constant 6 : i32
    %c16_i32_148 = arith.constant 16 : i32
    %284 = arith.muli %c6_i32, %c16_i32_148 : i32
    %285 = tpu.assume_multiple %284, 8 : i32
    %286 = arith.index_cast %285 : i32 to index
    %c0_149 = arith.constant 0 : index
    %287 = vector.load %arg17[%286, %c0_149] : memref<128x128xf32, #tpu.memory_space<vmem>>, vector<16x128xf32>
    %288 = arith.mulf %287, %281 : vector<16x128xf32>
    %289 = arith.index_cast %285 : i32 to index
    %c0_150 = arith.constant 0 : index
    %290 = vector.load %arg18[%289, %c0_150] : memref<128x128xf32, #tpu.memory_space<vmem>>, vector<16x128xf32>
    %291 = arith.addf %288, %290 : vector<16x128xf32>
    %292 = arith.index_cast %285 : i32 to index
    %c0_151 = arith.constant 0 : index
    %293 = vector.load %arg18[%292, %c0_151] : memref<128x128xf32, #tpu.memory_space<vmem>>, vector<16x128xf32>
    tpu.vector_store %arg18[%292, %c0_151], %291 {strides = array<i32>} : memref<128x128xf32, #tpu.memory_space<vmem>>, vector<16x128xf32>,
    %c7_i32 = arith.constant 7 : i32
    %c16_i32_152 = arith.constant 16 : i32
    %294 = arith.muli %c7_i32, %c16_i32_152 : i32
    %295 = tpu.assume_multiple %294, 8 : i32
    %296 = arith.index_cast %295 : i32 to index
    %c0_153 = arith.constant 0 : index
    %297 = vector.load %arg17[%296, %c0_153] : memref<128x128xf32, #tpu.memory_space<vmem>>, vector<16x128xf32>
    %298 = arith.mulf %297, %291 : vector<16x128xf32>
    %299 = arith.index_cast %295 : i32 to index
    %c0_154 = arith.constant 0 : index
    %300 = vector.load %arg18[%299, %c0_154] : memref<128x128xf32, #tpu.memory_space<vmem>>, vector<16x128xf32>
    %301 = arith.addf %298, %300 : vector<16x128xf32>
    %302 = arith.index_cast %295 : i32 to index
    %c0_155 = arith.constant 0 : index
    %303 = vector.load %arg18[%302, %c0_155] : memref<128x128xf32, #tpu.memory_space<vmem>>, vector<16x128xf32>
    tpu.vector_store %arg18[%302, %c0_155], %301 {strides = array<i32>} : memref<128x128xf32, #tpu.memory_space<vmem>>, vector<16x128xf32>,
    %c8_i32 = arith.constant 8 : i32
    %c0_156 = arith.constant 0 : index
    %c0_157 = arith.constant 0 : index
    %304 = vector.load %arg12[%c0_156, %c0_157] : memref<1x128xf32, #tpu.memory_space<vmem>>, vector<1x128xf32>
    %305 = vector.broadcast %304 : vector<1x128xf32> to vector<8x128xf32>
    %306 = arith.mulf %305, %52 : vector<8x128xf32>
    %c0_158 = arith.constant 0 : index
    %c0_159 = arith.constant 0 : index
    %307 = tpu.strided_load %arg18[%c0_158, %c0_159] {strides = array<i32: 16, 1>} : memref<128x128xf32, #tpu.memory_space<vmem>>, vector<8x128xf32>
    %308 = vector.extract_strided_slice %58 {offsets = [0, 0], sizes = [8, 1], strides = [1, 1]} : vector<8x16xf32> to vector<8x1xf32>
    %309 = vector.broadcast %308 : vector<8x1xf32> to vector<8x128xf32>
    %310 = arith.mulf %307, %309 : vector<8x128xf32>
    %311 = arith.addf %306, %310 : vector<8x128xf32>
    %c1_160 = arith.constant 1 : index
    %c0_161 = arith.constant 0 : index
    %312 = tpu.strided_load %arg18[%c1_160, %c0_161] {strides = array<i32: 16, 1>} : memref<128x128xf32, #tpu.memory_space<vmem>>, vector<8x128xf32>
    %313 = vector.extract_strided_slice %58 {offsets = [0, 1], sizes = [8, 1], strides = [1, 1]} : vector<8x16xf32> to vector<8x1xf32>
    %314 = vector.broadcast %313 : vector<8x1xf32> to vector<8x128xf32>
    %315 = arith.mulf %312, %314 : vector<8x128xf32>
    %316 = arith.addf %311, %315 : vector<8x128xf32>
    %c2_162 = arith.constant 2 : index
    %c0_163 = arith.constant 0 : index
    %317 = tpu.strided_load %arg18[%c2_162, %c0_163] {strides = array<i32: 16, 1>} : memref<128x128xf32, #tpu.memory_space<vmem>>, vector<8x128xf32>
    %318 = vector.extract_strided_slice %58 {offsets = [0, 2], sizes = [8, 1], strides = [1, 1]} : vector<8x16xf32> to vector<8x1xf32>
    %319 = vector.broadcast %318 : vector<8x1xf32> to vector<8x128xf32>
    %320 = arith.mulf %317, %319 : vector<8x128xf32>
    %321 = arith.addf %316, %320 : vector<8x128xf32>
    %c3_164 = arith.constant 3 : index
    %c0_165 = arith.constant 0 : index
    %322 = tpu.strided_load %arg18[%c3_164, %c0_165] {strides = array<i32: 16, 1>} : memref<128x128xf32, #tpu.memory_space<vmem>>, vector<8x128xf32>
    %323 = vector.extract_strided_slice %58 {offsets = [0, 3], sizes = [8, 1], strides = [1, 1]} : vector<8x16xf32> to vector<8x1xf32>
    %324 = vector.broadcast %323 : vector<8x1xf32> to vector<8x128xf32>
    %325 = arith.mulf %322, %324 : vector<8x128xf32>
    %326 = arith.addf %321, %325 : vector<8x128xf32>
    %c4_166 = arith.constant 4 : index
    %c0_167 = arith.constant 0 : index
    %327 = tpu.strided_load %arg18[%c4_166, %c0_167] {strides = array<i32: 16, 1>} : memref<128x128xf32, #tpu.memory_space<vmem>>, vector<8x128xf32>
    %328 = vector.extract_strided_slice %58 {offsets = [0, 4], sizes = [8, 1], strides = [1, 1]} : vector<8x16xf32> to vector<8x1xf32>
    %329 = vector.broadcast %328 : vector<8x1xf32> to vector<8x128xf32>
    %330 = arith.mulf %327, %329 : vector<8x128xf32>
    %331 = arith.addf %326, %330 : vector<8x128xf32>
    %c5_168 = arith.constant 5 : index
    %c0_169 = arith.constant 0 : index
    %332 = tpu.strided_load %arg18[%c5_168, %c0_169] {strides = array<i32: 16, 1>} : memref<128x128xf32, #tpu.memory_space<vmem>>, vector<8x128xf32>
    %333 = vector.extract_strided_slice %58 {offsets = [0, 5], sizes = [8, 1], strides = [1, 1]} : vector<8x16xf32> to vector<8x1xf32>
    %334 = vector.broadcast %333 : vector<8x1xf32> to vector<8x128xf32>
    %335 = arith.mulf %332, %334 : vector<8x128xf32>
    %336 = arith.addf %331, %335 : vector<8x128xf32>
    %c6_170 = arith.constant 6 : index
    %c0_171 = arith.constant 0 : index
    %337 = tpu.strided_load %arg18[%c6_170, %c0_171] {strides = array<i32: 16, 1>} : memref<128x128xf32, #tpu.memory_space<vmem>>, vector<8x128xf32>
    %338 = vector.extract_strided_slice %58 {offsets = [0, 6], sizes = [8, 1], strides = [1, 1]} : vector<8x16xf32> to vector<8x1xf32>
    %339 = vector.broadcast %338 : vector<8x1xf32> to vector<8x128xf32>
    %340 = arith.mulf %337, %339 : vector<8x128xf32>
    %341 = arith.addf %336, %340 : vector<8x128xf32>
    %c7_172 = arith.constant 7 : index
    %c0_173 = arith.constant 0 : index
    %342 = tpu.strided_load %arg18[%c7_172, %c0_173] {strides = array<i32: 16, 1>} : memref<128x128xf32, #tpu.memory_space<vmem>>, vector<8x128xf32>
    %343 = vector.extract_strided_slice %58 {offsets = [0, 7], sizes = [8, 1], strides = [1, 1]} : vector<8x16xf32> to vector<8x1xf32>
    %344 = vector.broadcast %343 : vector<8x1xf32> to vector<8x128xf32>
    %345 = arith.mulf %342, %344 : vector<8x128xf32>
    %346 = arith.addf %341, %345 : vector<8x128xf32>
    %c8_174 = arith.constant 8 : index
    %c0_175 = arith.constant 0 : index
    %347 = tpu.strided_load %arg18[%c8_174, %c0_175] {strides = array<i32: 16, 1>} : memref<128x128xf32, #tpu.memory_space<vmem>>, vector<8x128xf32>
    %348 = vector.extract_strided_slice %58 {offsets = [0, 8], sizes = [8, 1], strides = [1, 1]} : vector<8x16xf32> to vector<8x1xf32>
    %349 = vector.broadcast %348 : vector<8x1xf32> to vector<8x128xf32>
    %350 = arith.mulf %347, %349 : vector<8x128xf32>
    %351 = arith.addf %346, %350 : vector<8x128xf32>
    %c9_176 = arith.constant 9 : index
    %c0_177 = arith.constant 0 : index
    %352 = tpu.strided_load %arg18[%c9_176, %c0_177] {strides = array<i32: 16, 1>} : memref<128x128xf32, #tpu.memory_space<vmem>>, vector<8x128xf32>
    %353 = vector.extract_strided_slice %58 {offsets = [0, 9], sizes = [8, 1], strides = [1, 1]} : vector<8x16xf32> to vector<8x1xf32>
    %354 = vector.broadcast %353 : vector<8x1xf32> to vector<8x128xf32>
    %355 = arith.mulf %352, %354 : vector<8x128xf32>
    %356 = arith.addf %351, %355 : vector<8x128xf32>
    %c10_178 = arith.constant 10 : index
    %c0_179 = arith.constant 0 : index
    %357 = tpu.strided_load %arg18[%c10_178, %c0_179] {strides = array<i32: 16, 1>} : memref<128x128xf32, #tpu.memory_space<vmem>>, vector<8x128xf32>
    %358 = vector.extract_strided_slice %58 {offsets = [0, 10], sizes = [8, 1], strides = [1, 1]} : vector<8x16xf32> to vector<8x1xf32>
    %359 = vector.broadcast %358 : vector<8x1xf32> to vector<8x128xf32>
    %360 = arith.mulf %357, %359 : vector<8x128xf32>
    %361 = arith.addf %356, %360 : vector<8x128xf32>
    %c11_180 = arith.constant 11 : index
    %c0_181 = arith.constant 0 : index
    %362 = tpu.strided_load %arg18[%c11_180, %c0_181] {strides = array<i32: 16, 1>} : memref<128x128xf32, #tpu.memory_space<vmem>>, vector<8x128xf32>
    %363 = vector.extract_strided_slice %58 {offsets = [0, 11], sizes = [8, 1], strides = [1, 1]} : vector<8x16xf32> to vector<8x1xf32>
    %364 = vector.broadcast %363 : vector<8x1xf32> to vector<8x128xf32>
    %365 = arith.mulf %362, %364 : vector<8x128xf32>
    %366 = arith.addf %361, %365 : vector<8x128xf32>
    %c12_182 = arith.constant 12 : index
    %c0_183 = arith.constant 0 : index
    %367 = tpu.strided_load %arg18[%c12_182, %c0_183] {strides = array<i32: 16, 1>} : memref<128x128xf32, #tpu.memory_space<vmem>>, vector<8x128xf32>
    %368 = vector.extract_strided_slice %58 {offsets = [0, 12], sizes = [8, 1], strides = [1, 1]} : vector<8x16xf32> to vector<8x1xf32>
    %369 = vector.broadcast %368 : vector<8x1xf32> to vector<8x128xf32>
    %370 = arith.mulf %367, %369 : vector<8x128xf32>
    %371 = arith.addf %366, %370 : vector<8x128xf32>
    %c13_184 = arith.constant 13 : index
    %c0_185 = arith.constant 0 : index
    %372 = tpu.strided_load %arg18[%c13_184, %c0_185] {strides = array<i32: 16, 1>} : memref<128x128xf32, #tpu.memory_space<vmem>>, vector<8x128xf32>
    %373 = vector.extract_strided_slice %58 {offsets = [0, 13], sizes = [8, 1], strides = [1, 1]} : vector<8x16xf32> to vector<8x1xf32>
    %374 = vector.broadcast %373 : vector<8x1xf32> to vector<8x128xf32>
    %375 = arith.mulf %372, %374 : vector<8x128xf32>
    %376 = arith.addf %371, %375 : vector<8x128xf32>
    %c14_186 = arith.constant 14 : index
    %c0_187 = arith.constant 0 : index
    %377 = tpu.strided_load %arg18[%c14_186, %c0_187] {strides = array<i32: 16, 1>} : memref<128x128xf32, #tpu.memory_space<vmem>>, vector<8x128xf32>
    %378 = vector.extract_strided_slice %58 {offsets = [0, 14], sizes = [8, 1], strides = [1, 1]} : vector<8x16xf32> to vector<8x1xf32>
    %379 = vector.broadcast %378 : vector<8x1xf32> to vector<8x128xf32>
    %380 = arith.mulf %377, %379 : vector<8x128xf32>
    %381 = arith.addf %376, %380 : vector<8x128xf32>
    %c15_188 = arith.constant 15 : index
    %c0_189 = arith.constant 0 : index
    %382 = tpu.strided_load %arg18[%c15_188, %c0_189] {strides = array<i32: 16, 1>} : memref<128x128xf32, #tpu.memory_space<vmem>>, vector<8x128xf32>
    %383 = vector.extract_strided_slice %58 {offsets = [0, 15], sizes = [8, 1], strides = [1, 1]} : vector<8x16xf32> to vector<8x1xf32>
    %384 = vector.broadcast %383 : vector<8x1xf32> to vector<8x128xf32>
    %385 = arith.mulf %382, %384 : vector<8x128xf32>
    %386 = arith.addf %381, %385 : vector<8x128xf32>
    %387 = arith.negf %5 : vector<8x128xf32>
    %388 = math.exp %387 : vector<8x128xf32>
    %cst_190 = arith.constant 1.000000e+00 : f32
    %389 = vector.broadcast %cst_190 : f32 to vector<8x128xf32>
    %390 = arith.addf %389, %388 : vector<8x128xf32>
    %391 = arith.divf %389, %390 : vector<8x128xf32>
    %392 = arith.mulf %5, %391 : vector<8x128xf32>
    %393 = arith.mulf %386, %392 : vector<8x128xf32>
    %c0_191 = arith.constant 0 : index
    %c0_192 = arith.constant 0 : index
    %394 = vector.load %arg13[%c0_191, %c0_192] : memref<128x32xf32, #tpu.memory_space<vmem>>, vector<128x32xf32>
    %cst_193 = arith.constant dense<0.000000e+00> : vector<8x32xf32>
    %395 = tpu.matmul %393, %394, %cst_193 {dimension_numbers = #tpu.dot_dimension_numbers<[1], [0], [0], [1], [0, 0, 1, 1], [], []>} : vector<8x128xf32>, vector<128x32xf32>, vector<8x32xf32> -> vector<8x32xf32>
    %cst_194 = arith.constant dense<0.000000e+00> : vector<8xf32>
    %396 = vector.multi_reduction <add>, %395, %cst_194 [1] : vector<8x32xf32> to vector<8xf32>
    %397 = vector.shape_cast %396 : vector<8xf32> to vector<8x1xf32>
    %cst_195 = arith.constant 3.200000e+01 : f32
    %398 = vector.broadcast %cst_195 : f32 to vector<8x1xf32>
    %399 = arith.divf %397, %398 : vector<8x1xf32>
    %400 = vector.broadcast %399 : vector<8x1xf32> to vector<8x32xf32>
    %401 = arith.subf %395, %400 : vector<8x32xf32>
    %402 = arith.mulf %401, %401 : vector<8x32xf32>
    %cst_196 = arith.constant dense<0.000000e+00> : vector<8xf32>
    %403 = vector.multi_reduction <add>, %402, %cst_196 [1] : vector<8x32xf32> to vector<8xf32>
    %404 = vector.shape_cast %403 : vector<8xf32> to vector<8x1xf32>
    %cst_197 = arith.constant 3.200000e+01 : f32
    %405 = vector.broadcast %cst_197 : f32 to vector<8x1xf32>
    %406 = arith.divf %404, %405 : vector<8x1xf32>
    %407 = vector.broadcast %399 : vector<8x1xf32> to vector<8x32xf32>
    %408 = arith.subf %395, %407 : vector<8x32xf32>
    %cst_198 = arith.constant 9.99999996E-13 : f32
    %409 = vector.broadcast %cst_198 : f32 to vector<8x1xf32>
    %410 = arith.addf %406, %409 : vector<8x1xf32>
    %411 = math.rsqrt %410 : vector<8x1xf32>
    %412 = vector.broadcast %411 : vector<8x1xf32> to vector<8x32xf32>
    %413 = arith.mulf %408, %412 : vector<8x32xf32>
    %c0_199 = arith.constant 0 : index
    %c0_200 = arith.constant 0 : index
    %414 = vector.load %arg14[%c0_199, %c0_200] : memref<1x32xf32, #tpu.memory_space<vmem>>, vector<1x32xf32>
    %415 = vector.broadcast %414 : vector<1x32xf32> to vector<8x32xf32>
    %416 = arith.mulf %413, %415 : vector<8x32xf32>
    %c0_201 = arith.constant 0 : index
    %c0_202 = arith.constant 0 : index
    %417 = vector.load %arg15[%c0_201, %c0_202] : memref<1x32xf32, #tpu.memory_space<vmem>>, vector<1x32xf32>
    %418 = vector.broadcast %417 : vector<1x32xf32> to vector<8x32xf32>
    %419 = arith.addf %416, %418 : vector<8x32xf32>
    %c0_203 = arith.constant 0 : index
    %c0_204 = arith.constant 0 : index
    %c0_205 = arith.constant 0 : index
    %420 = vector.load %arg16[%c0_203, %c0_204, %c0_205] : memref<1x8x32xf32, #tpu.memory_space<vmem>>, vector<1x8x32xf32>
    %421 = vector.shape_cast %420 : vector<1x8x32xf32> to vector<8x32xf32>
    %422 = vector.shape_cast %419 : vector<8x32xf32> to vector<1x8x32xf32>
    tpu.vector_store %arg16[%c0_203, %c0_204, %c0_205], %422 {strides = array<i32>} : memref<1x8x32xf32, #tpu.memory_space<vmem>>, vector<1x8x32xf32>,
    return
  }
  func.func @transform_0(%arg0: i32) -> (i32, i32, i32) {
    %c0_i32 = arith.constant 0 : i32
    %c0_i32_0 = arith.constant 0 : i32
    %c0_i32_1 = arith.constant 0 : i32
    return %arg0, %c0_i32, %c0_i32_0 : i32, i32, i32
  }
  func.func @transform_1(%arg0: i32) -> (i32, i32) {
    %c0_i32 = arith.constant 0 : i32
    %c0_i32_0 = arith.constant 0 : i32
    %c0_i32_1 = arith.constant 0 : i32
    return %c0_i32, %c0_i32_0 : i32, i32
  }
  func.func @transform_2(%arg0: i32) -> (i32, i32) {
    %c0_i32 = arith.constant 0 : i32
    %c0_i32_0 = arith.constant 0 : i32
    %c0_i32_1 = arith.constant 0 : i32
    return %c0_i32, %c0_i32_0 : i32, i32
  }
  func.func @transform_3(%arg0: i32) -> (i32, i32) {
    %c0_i32 = arith.constant 0 : i32
    %c0_i32_0 = arith.constant 0 : i32
    %c0_i32_1 = arith.constant 0 : i32
    return %c0_i32, %c0_i32_0 : i32, i32
  }
  func.func @transform_4(%arg0: i32) -> (i32, i32) {
    %c0_i32 = arith.constant 0 : i32
    %c0_i32_0 = arith.constant 0 : i32
    %c0_i32_1 = arith.constant 0 : i32
    return %c0_i32, %c0_i32_0 : i32, i32
  }
  func.func @transform_5(%arg0: i32) -> (i32, i32) {
    %c0_i32 = arith.constant 0 : i32
    %c0_i32_0 = arith.constant 0 : i32
    %c0_i32_1 = arith.constant 0 : i32
    return %c0_i32, %c0_i32_0 : i32, i32
  }
  func.func @transform_6(%arg0: i32) -> (i32, i32) {
    %c0_i32 = arith.constant 0 : i32
    %c0_i32_0 = arith.constant 0 : i32
    %c0_i32_1 = arith.constant 0 : i32
    return %c0_i32, %c0_i32_0 : i32, i32
  }
  func.func @transform_7(%arg0: i32) -> (i32, i32) {
    %c0_i32 = arith.constant 0 : i32
    %c0_i32_0 = arith.constant 0 : i32
    %c0_i32_1 = arith.constant 0 : i32
    return %c0_i32, %c0_i32_0 : i32, i32
  }
  func.func @transform_8(%arg0: i32) -> (i32, i32) {
    %c0_i32 = arith.constant 0 : i32
    %c0_i32_0 = arith.constant 0 : i32
    %c0_i32_1 = arith.constant 0 : i32
    return %c0_i32, %c0_i32_0 : i32, i32
  }
  func.func @transform_9(%arg0: i32) -> (i32, i32) {
    %c0_i32 = arith.constant 0 : i32
    %c0_i32_0 = arith.constant 0 : i32
    %c0_i32_1 = arith.constant 0 : i32
    return %c0_i32, %c0_i32_0 : i32, i32
  }
  func.func @transform_10(%arg0: i32) -> (i32, i32) {
    %c0_i32 = arith.constant 0 : i32
    %c0_i32_0 = arith.constant 0 : i32
    %c0_i32_1 = arith.constant 0 : i32
    return %c0_i32, %c0_i32_0 : i32, i32
  }
  func.func @transform_11(%arg0: i32) -> (i32, i32) {
    %c0_i32 = arith.constant 0 : i32
    %c0_i32_0 = arith.constant 0 : i32
    %c0_i32_1 = arith.constant 0 : i32
    return %c0_i32, %c0_i32_0 : i32, i32
  }
  func.func @transform_12(%arg0: i32) -> (i32, i32) {
    %c0_i32 = arith.constant 0 : i32
    %c0_i32_0 = arith.constant 0 : i32
    %c0_i32_1 = arith.constant 0 : i32
    return %c0_i32, %c0_i32_0 : i32, i32
  }
  func.func @transform_13(%arg0: i32) -> (i32, i32) {
    %c0_i32 = arith.constant 0 : i32
    %c0_i32_0 = arith.constant 0 : i32
    %c0_i32_1 = arith.constant 0 : i32
    return %c0_i32, %c0_i32_0 : i32, i32
  }
  func.func @transform_14(%arg0: i32) -> (i32, i32) {
    %c0_i32 = arith.constant 0 : i32
    %c0_i32_0 = arith.constant 0 : i32
    %c0_i32_1 = arith.constant 0 : i32
    return %c0_i32, %c0_i32_0 : i32, i32
  }
  func.func @transform_15(%arg0: i32) -> (i32, i32, i32) {
    %c0_i32 = arith.constant 0 : i32
    %c0_i32_0 = arith.constant 0 : i32
    %c0_i32_1 = arith.constant 0 : i32
    return %arg0, %c0_i32, %c0_i32_0 : i32, i32, i32
  }
}

</mosaic_0001>

<llo_original>
// kernel: tpu_custom_call.1
$region0: #{tpu_custom_call.1}
  #allocation0 [shape = 'u32[]', space=smem, size = 0x4, offset = 0x4, fixed_abs, tag = 'smem constant byte address 0x4 - core index']
  #allocation1 [shape = 'u32[144,128]{1,0:T(1,128)}', space=vmem, size = 0x12000, scoped, tag = 'internal scratch']
  #allocation2 [shape = 'f32[128,128]{1,0:T(8,128)}', space=vmem, size = 0x10000, scoped, tag = 'scratch operand']
  #allocation3 [shape = 'f32[128,128]{1,0:T(8,128)}', space=vmem, size = 0x10000, scoped, tag = 'scratch operand']
  %s0 = inlined_call_operand.vmem [shape: f32[2,8,32], index: 0, kind: input, shape index: {}]
  %s1 = inlined_call_operand.vmem [shape: f32[32,128], index: 1, kind: input, shape index: {}]
  %s2 = inlined_call_operand.vmem [shape: f32[32,128], index: 2, kind: input, shape index: {}]
  %s3 = inlined_call_operand.vmem [shape: f32[4,128], index: 3, kind: input, shape index: {}]
  %s4 = inlined_call_operand.vmem [shape: f32[1,128], index: 4, kind: input, shape index: {}]
  %s5 = inlined_call_operand.vmem [shape: f32[128,2], index: 5, kind: input, shape index: {}]
  %s6 = inlined_call_operand.vmem [shape: f32[128,16], index: 6, kind: input, shape index: {}]
  %s7 = inlined_call_operand.vmem [shape: f32[128,16], index: 7, kind: input, shape index: {}]
  %s8 = inlined_call_operand.vmem [shape: f32[2,128], index: 8, kind: input, shape index: {}]
  %s9 = inlined_call_operand.vmem [shape: f32[1,128], index: 9, kind: input, shape index: {}]
  %s10 = inlined_call_operand.vmem [shape: f32[16,128], index: 10, kind: input, shape index: {}]
  %s11 = inlined_call_operand.vmem [shape: f32[1,128], index: 11, kind: input, shape index: {}]
  %s12 = inlined_call_operand.vmem [shape: f32[128,32], index: 12, kind: input, shape index: {}]
  %s13 = inlined_call_operand.vmem [shape: f32[1,32], index: 13, kind: input, shape index: {}]
  %s14 = inlined_call_operand.vmem [shape: f32[1,32], index: 14, kind: input, shape index: {}]
  %s15 = inlined_call_operand.hbm [shape: f32[2,8,32], index: 15, kind: output, shape index: {}]
  %s16 = sld [smem:[#allocation0]]
  $region93: #{tpu_custom_call.1} parent=0
    _
  %s18 = ssub.s32 1, %s16
  %s19 = scalar_select 0, %s18, %s16
  $region1: #{tpu_custom_call.1} parent=0
    #allocation4 [shape = 'u8[8192]{0}', space=vmem, size = 0x2000, scoped, tag = 'output window, operand 0']
    #allocation5 [shape = 's32[2]{0}', space=sflag, size = 0x8, scoped, tag = 'scoped memory for tpu_custom_call.1']
    %20 = vsyncpa [#allocation5], 0
    %s21 = scalar_lea.sflag [#allocation5], 1
    %22 = vsyncpa %s21, 0
    loop: start=0, step=1, limit=4
    $region2: #{tpu_custom_call.1} parent=1 // loop_pre_header
      _
    $region3: #{tpu_custom_call.1} parent=1 // loop_header
      %s24 = sphi 0, %s28
      %p25 = scmp.ge.s32.totalorder %s24, 4
      %s34 = sphi 0, %s36
      %s37 = sphi 0, %s34
      %s38 = sphi 0, %s37
      %s54 = sphi 0, %s38
      %s58 = sphi 0, %s58
      %s60 = sphi 0, %s58
      %s61 = sphi 0, %s60
      %s75 = sphi 0, %s61
      %s79 = sphi 0, %s79
      %s81 = sphi 0, %s79
      %s82 = sphi 0, %s81
      %s96 = sphi 0, %s82
      %s100 = sphi 0, %s100
      %s102 = sphi 0, %s100
      %s103 = sphi 0, %s102
      %s117 = sphi 0, %s103
      %s121 = sphi 0, %s121
      %s123 = sphi 0, %s121
      %s124 = sphi 0, %s123
      %s138 = sphi 0, %s124
      %s142 = sphi 0, %s142
      %s144 = sphi 0, %s142
      %s145 = sphi 0, %s144
      %s159 = sphi 0, %s145
      %s163 = sphi 0, %s163
      %s165 = sphi 0, %s163
      %s166 = sphi 0, %s165
      %s180 = sphi 0, %s166
      %s184 = sphi 0, %s184
      %s186 = sphi 0, %s184
      %s187 = sphi 0, %s186
      %s201 = sphi 0, %s187
      %s205 = sphi 0, %s205
      %s207 = sphi 0, %s205
      %s208 = sphi 0, %s207
      %s222 = sphi 0, %s208
      %s226 = sphi 0, %s226
      %s228 = sphi 0, %s226
      %s229 = sphi 0, %s228
      %s243 = sphi 0, %s229
      %s247 = sphi 0, %s247
      %s249 = sphi 0, %s247
      %s250 = sphi 0, %s249
      %s264 = sphi 0, %s250
      %s268 = sphi 0, %s268
      %s270 = sphi 0, %s268
      %s271 = sphi 0, %s270
      %s285 = sphi 0, %s271
      %s289 = sphi 0, %s289
      %s291 = sphi 0, %s289
      %s292 = sphi 0, %s291
      %s306 = sphi 0, %s292
      %s310 = sphi 0, %s310
      %s312 = sphi 0, %s310
      %s313 = sphi 0, %s312
      %s327 = sphi 0, %s313
      %s331 = sphi 0, %s331
      %s333 = sphi 0, %s331
      %s334 = sphi 0, %s333
      %s348 = sphi 0, %s334
      %s354 = sphi 0, %s356
      %s357 = sphi 0, %s354
      %s358 = sphi 0, %s357
      %s374 = sphi 0, %s358
    $region4: #{tpu_custom_call.1} parent=1 // loop_header_branch
      %27 = sbr.rel (%p25) target = $region8
    $region5: #{tpu_custom_call.1} parent=1 // loop_body
      %s29 = ssub.s32 %s24, 1
      %s30 = ssub.s32 %s24, 2
      %s31 = sadd.s32 %s24, 1
      %s32 = ssub.s32 %s24, %s31
      %p33 = scmp.eq.s32.totalorder %s32, 0
      %s35 = sadd.s32 %s34, 1
      %s36 = scalar_select %p33, %s34, %s35
      %p39 = pneg %p33
      %p40 = scmp.eq.s32.totalorder %s24, 1
      %p41 = por %p39, %p40
      %p42 = scmp.ne.s32.totalorder %s34, %s37
      %p43 = scmp.eq.s32.totalorder %s24, 0
      %p44 = por %p42, %p43
      %p45 = scmp.ne.s32.totalorder %s34, %s37
      %p46 = scmp.eq.s32.totalorder %s29, 1
      %p47 = por %p45, %p46
      %p48 = scmp.ne.s32.totalorder %s37, %s38
      %p49 = scmp.eq.s32.totalorder %s29, 0
      %p50 = por %p48, %p49
      %p51 = scmp.ne.s32.totalorder %s37, %s38
      %p52 = scmp.eq.s32.totalorder %s30, 1
      %p53 = por %p51, %p52
      %p55 = scmp.ne.s32.totalorder %s38, %s54
      %p56 = scmp.eq.s32.totalorder %s30, 0
      %p57 = por %p55, %p56
      %s59 = sadd.s32 %s58, 1
      %p62 = scmp.eq.s32.totalorder %s24, 1
      %p63 = scmp.ne.s32.totalorder %s58, %s60
      %p64 = scmp.eq.s32.totalorder %s24, 0
      %p65 = por %p63, %p64
      %p66 = scmp.ne.s32.totalorder %s58, %s60
      %p67 = scmp.eq.s32.totalorder %s29, 1
      %p68 = por %p66, %p67
      %p69 = scmp.ne.s32.totalorder %s60, %s61
      %p70 = scmp.eq.s32.totalorder %s29, 0
      %p71 = por %p69, %p70
      %p72 = scmp.ne.s32.totalorder %s60, %s61
      %p73 = scmp.eq.s32.totalorder %s30, 1
      %p74 = por %p72, %p73
      %p76 = scmp.ne.s32.totalorder %s61, %s75
      %p77 = scmp.eq.s32.totalorder %s30, 0
      %p78 = por %p76, %p77
      %s80 = sadd.s32 %s79, 1
      %p83 = scmp.eq.s32.totalorder %s24, 1
      %p84 = scmp.ne.s32.totalorder %s79, %s81
      %p85 = scmp.eq.s32.totalorder %s24, 0
      %p86 = por %p84, %p85
      %p87 = scmp.ne.s32.totalorder %s79, %s81
      %p88 = scmp.eq.s32.totalorder %s29, 1
      %p89 = por %p87, %p88
      %p90 = scmp.ne.s32.totalorder %s81, %s82
      %p91 = scmp.eq.s32.totalorder %s29, 0
      %p92 = por %p90, %p91
      %p93 = scmp.ne.s32.totalorder %s81, %s82
      %p94 = scmp.eq.s32.totalorder %s30, 1
      %p95 = por %p93, %p94
      %p97 = scmp.ne.s32.totalorder %s82, %s96
      %p98 = scmp.eq.s32.totalorder %s30, 0
      %p99 = por %p97, %p98
      %s101 = sadd.s32 %s100, 1
      %p104 = scmp.eq.s32.totalorder %s24, 1
      %p105 = scmp.ne.s32.totalorder %s100, %s102
      %p106 = scmp.eq.s32.totalorder %s24, 0
      %p107 = por %p105, %p106
      %p108 = scmp.ne.s32.totalorder %s100, %s102
      %p109 = scmp.eq.s32.totalorder %s29, 1
      %p110 = por %p108, %p109
      %p111 = scmp.ne.s32.totalorder %s102, %s103
      %p112 = scmp.eq.s32.totalorder %s29, 0
      %p113 = por %p111, %p112
      %p114 = scmp.ne.s32.totalorder %s102, %s103
      %p115 = scmp.eq.s32.totalorder %s30, 1
      %p116 = por %p114, %p115
      %p118 = scmp.ne.s32.totalorder %s103, %s117
      %p119 = scmp.eq.s32.totalorder %s30, 0
      %p120 = por %p118, %p119
      %s122 = sadd.s32 %s121, 1
      %p125 = scmp.eq.s32.totalorder %s24, 1
      %p126 = scmp.ne.s32.totalorder %s121, %s123
      %p127 = scmp.eq.s32.totalorder %s24, 0
      %p128 = por %p126, %p127
      %p129 = scmp.ne.s32.totalorder %s121, %s123
      %p130 = scmp.eq.s32.totalorder %s29, 1
      %p131 = por %p129, %p130
      %p132 = scmp.ne.s32.totalorder %s123, %s124
      %p133 = scmp.eq.s32.totalorder %s29, 0
      %p134 = por %p132, %p133
      %p135 = scmp.ne.s32.totalorder %s123, %s124
      %p136 = scmp.eq.s32.totalorder %s30, 1
      %p137 = por %p135, %p136
      %p139 = scmp.ne.s32.totalorder %s124, %s138
      %p140 = scmp.eq.s32.totalorder %s30, 0
      %p141 = por %p139, %p140
      %s143 = sadd.s32 %s142, 1
      %p146 = scmp.eq.s32.totalorder %s24, 1
      %p147 = scmp.ne.s32.totalorder %s142, %s144
      %p148 = scmp.eq.s32.totalorder %s24, 0
      %p149 = por %p147, %p148
      %p150 = scmp.ne.s32.totalorder %s142, %s144
      %p151 = scmp.eq.s32.totalorder %s29, 1
      %p152 = por %p150, %p151
      %p153 = scmp.ne.s32.totalorder %s144, %s145
      %p154 = scmp.eq.s32.totalorder %s29, 0
      %p155 = por %p153, %p154
      %p156 = scmp.ne.s32.totalorder %s144, %s145
      %p157 = scmp.eq.s32.totalorder %s30, 1
      %p158 = por %p156, %p157
      %p160 = scmp.ne.s32.totalorder %s145, %s159
      %p161 = scmp.eq.s32.totalorder %s30, 0
      %p162 = por %p160, %p161
      %s164 = sadd.s32 %s163, 1
      %p167 = scmp.eq.s32.totalorder %s24, 1
      %p168 = scmp.ne.s32.totalorder %s163, %s165
      %p169 = scmp.eq.s32.totalorder %s24, 0
      %p170 = por %p168, %p169
      %p171 = scmp.ne.s32.totalorder %s163, %s165
      %p172 = scmp.eq.s32.totalorder %s29, 1
      %p173 = por %p171, %p172
      %p174 = scmp.ne.s32.totalorder %s165, %s166
      %p175 = scmp.eq.s32.totalorder %s29, 0
      %p176 = por %p174, %p175
      %p177 = scmp.ne.s32.totalorder %s165, %s166
      %p178 = scmp.eq.s32.totalorder %s30, 1
      %p179 = por %p177, %p178
      %p181 = scmp.ne.s32.totalorder %s166, %s180
      %p182 = scmp.eq.s32.totalorder %s30, 0
      %p183 = por %p181, %p182
      %s185 = sadd.s32 %s184, 1
      %p188 = scmp.eq.s32.totalorder %s24, 1
      %p189 = scmp.ne.s32.totalorder %s184, %s186
      %p190 = scmp.eq.s32.totalorder %s24, 0
      %p191 = por %p189, %p190
      %p192 = scmp.ne.s32.totalorder %s184, %s186
      %p193 = scmp.eq.s32.totalorder %s29, 1
      %p194 = por %p192, %p193
      %p195 = scmp.ne.s32.totalorder %s186, %s187
      %p196 = scmp.eq.s32.totalorder %s29, 0
      %p197 = por %p195, %p196
      %p198 = scmp.ne.s32.totalorder %s186, %s187
      %p199 = scmp.eq.s32.totalorder %s30, 1
      %p200 = por %p198, %p199
      %p202 = scmp.ne.s32.totalorder %s187, %s201
      %p203 = scmp.eq.s32.totalorder %s30, 0
      %p204 = por %p202, %p203
      %s206 = sadd.s32 %s205, 1
      %p209 = scmp.eq.s32.totalorder %s24, 1
      %p210 = scmp.ne.s32.totalorder %s205, %s207
      %p211 = scmp.eq.s32.totalorder %s24, 0
      %p212 = por %p210, %p211
      %p213 = scmp.ne.s32.totalorder %s205, %s207
      %p214 = scmp.eq.s32.totalorder %s29, 1
      %p215 = por %p213, %p214
      %p216 = scmp.ne.s32.totalorder %s207, %s208
      %p217 = scmp.eq.s32.totalorder %s29, 0
      %p218 = por %p216, %p217
      %p219 = scmp.ne.s32.totalorder %s207, %s208
      %p220 = scmp.eq.s32.totalorder %s30, 1
      %p221 = por %p219, %p220
      %p223 = scmp.ne.s32.totalorder %s208, %s222
      %p224 = scmp.eq.s32.totalorder %s30, 0
      %p225 = por %p223, %p224
      %s227 = sadd.s32 %s226, 1
      %p230 = scmp.eq.s32.totalorder %s24, 1
      %p231 = scmp.ne.s32.totalorder %s226, %s228
      %p232 = scmp.eq.s32.totalorder %s24, 0
      %p233 = por %p231, %p232
      %p234 = scmp.ne.s32.totalorder %s226, %s228
      %p235 = scmp.eq.s32.totalorder %s29, 1
      %p236 = por %p234, %p235
      %p237 = scmp.ne.s32.totalorder %s228, %s229
      %p238 = scmp.eq.s32.totalorder %s29, 0
      %p239 = por %p237, %p238
      %p240 = scmp.ne.s32.totalorder %s228, %s229
      %p241 = scmp.eq.s32.totalorder %s30, 1
      %p242 = por %p240, %p241
      %p244 = scmp.ne.s32.totalorder %s229, %s243
      %p245 = scmp.eq.s32.totalorder %s30, 0
      %p246 = por %p244, %p245
      %s248 = sadd.s32 %s247, 1
      %p251 = scmp.eq.s32.totalorder %s24, 1
      %p252 = scmp.ne.s32.totalorder %s247, %s249
      %p253 = scmp.eq.s32.totalorder %s24, 0
      %p254 = por %p252, %p253
      %p255 = scmp.ne.s32.totalorder %s247, %s249
      %p256 = scmp.eq.s32.totalorder %s29, 1
      %p257 = por %p255, %p256
      %p258 = scmp.ne.s32.totalorder %s249, %s250
      %p259 = scmp.eq.s32.totalorder %s29, 0
      %p260 = por %p258, %p259
      %p261 = scmp.ne.s32.totalorder %s249, %s250
      %p262 = scmp.eq.s32.totalorder %s30, 1
      %p263 = por %p261, %p262
      %p265 = scmp.ne.s32.totalorder %s250, %s264
      %p266 = scmp.eq.s32.totalorder %s30, 0
      %p267 = por %p265, %p266
      %s269 = sadd.s32 %s268, 1
      %p272 = scmp.eq.s32.totalorder %s24, 1
      %p273 = scmp.ne.s32.totalorder %s268, %s270
      %p274 = scmp.eq.s32.totalorder %s24, 0
      %p275 = por %p273, %p274
      %p276 = scmp.ne.s32.totalorder %s268, %s270
      %p277 = scmp.eq.s32.totalorder %s29, 1
      %p278 = por %p276, %p277
      %p279 = scmp.ne.s32.totalorder %s270, %s271
      %p280 = scmp.eq.s32.totalorder %s29, 0
      %p281 = por %p279, %p280
      %p282 = scmp.ne.s32.totalorder %s270, %s271
      %p283 = scmp.eq.s32.totalorder %s30, 1
      %p284 = por %p282, %p283
      %p286 = scmp.ne.s32.totalorder %s271, %s285
      %p287 = scmp.eq.s32.totalorder %s30, 0
      %p288 = por %p286, %p287
      %s290 = sadd.s32 %s289, 1
      %p293 = scmp.eq.s32.totalorder %s24, 1
      %p294 = scmp.ne.s32.totalorder %s289, %s291
      %p295 = scmp.eq.s32.totalorder %s24, 0
      %p296 = por %p294, %p295
      %p297 = scmp.ne.s32.totalorder %s289, %s291
      %p298 = scmp.eq.s32.totalorder %s29, 1
      %p299 = por %p297, %p298
      %p300 = scmp.ne.s32.totalorder %s291, %s292
      %p301 = scmp.eq.s32.totalorder %s29, 0
      %p302 = por %p300, %p301
      %p303 = scmp.ne.s32.totalorder %s291, %s292
      %p304 = scmp.eq.s32.totalorder %s30, 1
      %p305 = por %p303, %p304
      %p307 = scmp.ne.s32.totalorder %s292, %s306
      %p308 = scmp.eq.s32.totalorder %s30, 0
      %p309 = por %p307, %p308
      %s311 = sadd.s32 %s310, 1
      %p314 = scmp.eq.s32.totalorder %s24, 1
      %p315 = scmp.ne.s32.totalorder %s310, %s312
      %p316 = scmp.eq.s32.totalorder %s24, 0
      %p317 = por %p315, %p316
      %p318 = scmp.ne.s32.totalorder %s310, %s312
      %p319 = scmp.eq.s32.totalorder %s29, 1
      %p320 = por %p318, %p319
      %p321 = scmp.ne.s32.totalorder %s312, %s313
      %p322 = scmp.eq.s32.totalorder %s29, 0
      %p323 = por %p321, %p322
      %p324 = scmp.ne.s32.totalorder %s312, %s313
      %p325 = scmp.eq.s32.totalorder %s30, 1
      %p326 = por %p324, %p325
      %p328 = scmp.ne.s32.totalorder %s313, %s327
      %p329 = scmp.eq.s32.totalorder %s30, 0
      %p330 = por %p328, %p329
      %s332 = sadd.s32 %s331, 1
      %p335 = scmp.eq.s32.totalorder %s24, 1
      %p336 = scmp.ne.s32.totalorder %s331, %s333
      %p337 = scmp.eq.s32.totalorder %s24, 0
      %p338 = por %p336, %p337
      %p339 = scmp.ne.s32.totalorder %s331, %s333
      %p340 = scmp.eq.s32.totalorder %s29, 1
      %p341 = por %p339, %p340
      %p342 = scmp.ne.s32.totalorder %s333, %s334
      %p343 = scmp.eq.s32.totalorder %s29, 0
      %p344 = por %p342, %p343
      %p345 = scmp.ne.s32.totalorder %s333, %s334
      %p346 = scmp.eq.s32.totalorder %s30, 1
      %p347 = por %p345, %p346
      %p349 = scmp.ne.s32.totalorder %s334, %s348
      %p350 = scmp.eq.s32.totalorder %s30, 0
      %p351 = por %p349, %p350
      %s352 = ssub.s32 %s24, %s31
      %p353 = scmp.eq.s32.totalorder %s352, 0
      %s355 = sadd.s32 %s354, 1
      %s356 = scalar_select %p353, %s354, %s355
      %p359 = pneg %p353
      %p360 = scmp.eq.s32.totalorder %s24, 1
      %p361 = por %p359, %p360
      %p362 = scmp.ne.s32.totalorder %s354, %s357
      %p363 = scmp.eq.s32.totalorder %s24, 0
      %p364 = por %p362, %p363
      %p365 = scmp.ne.s32.totalorder %s354, %s357
      %p366 = scmp.eq.s32.totalorder %s29, 1
      %p367 = por %p365, %p366
      %p368 = scmp.ne.s32.totalorder %s357, %s358
      %p369 = scmp.eq.s32.totalorder %s29, 0
      %p370 = por %p368, %p369
      %p371 = scmp.ne.s32.totalorder %s357, %s358
      %p372 = scmp.eq.s32.totalorder %s30, 1
      %p373 = por %p371, %p372
      %p375 = scmp.ne.s32.totalorder %s358, %s374
      %p376 = scmp.eq.s32.totalorder %s30, 0
      %p377 = por %p375, %p376
      %p378 = scmp.le.s32.totalorder 1, %s24
      %p379 = scmp.lt.s32.totalorder %s24, 3
      %p380 = pnand %p378, %p379
      %p381 = pneg %p380
      // Predicated region
      $region9: #{tpu_custom_call.1} parent=5 // pred_check
        _
      $region10: #{tpu_custom_call.1} parent=5 // pred_check_branch
        %383 = sbr.rel (%p380) target = $region12
      $region11: #{tpu_custom_call.1} parent=5 // pred_region
        %s384 = ssub.s32 %s24, 1
        // Predicated region
        $region13: #{tpu_custom_call.1} parent=11 // pred_check
          %p385 = pneg %p71
        $region14: #{tpu_custom_call.1} parent=11 // pred_check_branch
          %387 = sbr.rel (%p385) target = $region16
        $region15: #{tpu_custom_call.1} parent=11 // pred_region
          _
        $region16: #{tpu_custom_call.1} parent=11 // pred_fallthru
          _
        // Predicated region
        $region17: #{tpu_custom_call.1} parent=11 // pred_check
          %p388 = pneg %p92
        $region18: #{tpu_custom_call.1} parent=11 // pred_check_branch
          %390 = sbr.rel (%p388) target = $region20
        $region19: #{tpu_custom_call.1} parent=11 // pred_region
          _
        $region20: #{tpu_custom_call.1} parent=11 // pred_fallthru
          _
        // Predicated region
        $region21: #{tpu_custom_call.1} parent=11 // pred_check
          %p391 = pneg %p113
        $region22: #{tpu_custom_call.1} parent=11 // pred_check_branch
          %393 = sbr.rel (%p391) target = $region24
        $region23: #{tpu_custom_call.1} parent=11 // pred_region
          _
        $region24: #{tpu_custom_call.1} parent=11 // pred_fallthru
          _
        // Predicated region
        $region25: #{tpu_custom_call.1} parent=11 // pred_check
          %p394 = pneg %p134
        $region26: #{tpu_custom_call.1} parent=11 // pred_check_branch
          %396 = sbr.rel (%p394) target = $region28
        $region27: #{tpu_custom_call.1} parent=11 // pred_region
          _
        $region28: #{tpu_custom_call.1} parent=11 // pred_fallthru
          _
        // Predicated region
        $region29: #{tpu_custom_call.1} parent=11 // pred_check
          %p397 = pneg %p155
        $region30: #{tpu_custom_call.1} parent=11 // pred_check_branch
          %399 = sbr.rel (%p397) target = $region32
        $region31: #{tpu_custom_call.1} parent=11 // pred_region
          _
        $region32: #{tpu_custom_call.1} parent=11 // pred_fallthru
          _
        // Predicated region
        $region33: #{tpu_custom_call.1} parent=11 // pred_check
          %p400 = pneg %p176
        $region34: #{tpu_custom_call.1} parent=11 // pred_check_branch
          %402 = sbr.rel (%p400) target = $region36
        $region35: #{tpu_custom_call.1} parent=11 // pred_region
          _
        $region36: #{tpu_custom_call.1} parent=11 // pred_fallthru
          _
        // Predicated region
        $region37: #{tpu_custom_call.1} parent=11 // pred_check
          %p403 = pneg %p197
        $region38: #{tpu_custom_call.1} parent=11 // pred_check_branch
          %405 = sbr.rel (%p403) target = $region40
        $region39: #{tpu_custom_call.1} parent=11 // pred_region
          _
        $region40: #{tpu_custom_call.1} parent=11 // pred_fallthru
          _
        // Predicated region
        $region41: #{tpu_custom_call.1} parent=11 // pred_check
          %p406 = pneg %p218
        $region42: #{tpu_custom_call.1} parent=11 // pred_check_branch
          %408 = sbr.rel (%p406) target = $region44
        $region43: #{tpu_custom_call.1} parent=11 // pred_region
          _
        $region44: #{tpu_custom_call.1} parent=11 // pred_fallthru
          _
        // Predicated region
        $region45: #{tpu_custom_call.1} parent=11 // pred_check
          %p409 = pneg %p239
        $region46: #{tpu_custom_call.1} parent=11 // pred_check_branch
          %411 = sbr.rel (%p409) target = $region48
        $region47: #{tpu_custom_call.1} parent=11 // pred_region
          _
        $region48: #{tpu_custom_call.1} parent=11 // pred_fallthru
          _
        // Predicated region
        $region49: #{tpu_custom_call.1} parent=11 // pred_check
          %p412 = pneg %p260
        $region50: #{tpu_custom_call.1} parent=11 // pred_check_branch
          %414 = sbr.rel (%p412) target = $region52
        $region51: #{tpu_custom_call.1} parent=11 // pred_region
          _
        $region52: #{tpu_custom_call.1} parent=11 // pred_fallthru
          _
        // Predicated region
        $region53: #{tpu_custom_call.1} parent=11 // pred_check
          %p415 = pneg %p281
        $region54: #{tpu_custom_call.1} parent=11 // pred_check_branch
          %417 = sbr.rel (%p415) target = $region56
        $region55: #{tpu_custom_call.1} parent=11 // pred_region
          _
        $region56: #{tpu_custom_call.1} parent=11 // pred_fallthru
          _
        // Predicated region
        $region57: #{tpu_custom_call.1} parent=11 // pred_check
          %p418 = pneg %p302
        $region58: #{tpu_custom_call.1} parent=11 // pred_check_branch
          %420 = sbr.rel (%p418) target = $region60
        $region59: #{tpu_custom_call.1} parent=11 // pred_region
          _
        $region60: #{tpu_custom_call.1} parent=11 // pred_fallthru
          _
        // Predicated region
        $region61: #{tpu_custom_call.1} parent=11 // pred_check
          %p421 = pneg %p323
        $region62: #{tpu_custom_call.1} parent=11 // pred_check_branch
          %423 = sbr.rel (%p421) target = $region64
        $region63: #{tpu_custom_call.1} parent=11 // pred_region
          _
        $region64: #{tpu_custom_call.1} parent=11 // pred_fallthru
          _
        // Predicated region
        $region65: #{tpu_custom_call.1} parent=11 // pred_check
          %p424 = pneg %p344
        $region66: #{tpu_custom_call.1} parent=11 // pred_check_branch
          %426 = sbr.rel (%p424) target = $region68
        $region67: #{tpu_custom_call.1} parent=11 // pred_region
          _
        $region68: #{tpu_custom_call.1} parent=11 // pred_fallthru
          _
      $region12: #{tpu_custom_call.1} parent=5 // pred_fallthru
        _
      %p427 = scmp.lt.s32.totalorder %s24, 2
      // Predicated region
      $region69: #{tpu_custom_call.1} parent=5 // pred_check
        %p428 = pneg %p427
      $region70: #{tpu_custom_call.1} parent=5 // pred_check_branch
        %430 = sbr.rel (%p428) target = $region72
      $region71: #{tpu_custom_call.1} parent=5 // pred_region
        // Predicated region
        $region73: #{tpu_custom_call.1} parent=71 // pred_check
          %p431 = pneg %p44
        $region74: #{tpu_custom_call.1} parent=71 // pred_check_branch
          %433 = sbr.rel (%p431) target = $region76
        $region75: #{tpu_custom_call.1} parent=71 // pred_region
          %p434 = scmp.lt.s32.totalorder %s24, 1
          %s435 = scalar_select %p434, %s24, 1
          %s436 = smul.addr %s435, 8
          %s437 = scalar_lea.vmem %s0, %s436
        $region76: #{tpu_custom_call.1} parent=71 // pred_fallthru
          _
      $region72: #{tpu_custom_call.1} parent=5 // pred_fallthru
        _
      %p438 = scmp.le.s32.totalorder 1, %s24
      %p439 = scmp.lt.s32.totalorder %s24, 3
      %p440 = pnand %p438, %p439
      %p441 = pneg %p440
      // Predicated region
      $region77: #{tpu_custom_call.1} parent=5 // pred_check
        _
      $region78: #{tpu_custom_call.1} parent=5 // pred_check_branch
        %443 = sbr.rel (%p440) target = $region80
      $region79: #{tpu_custom_call.1} parent=5 // pred_region
        %s444 = ssub.s32 %s24, 1
        %p445 = scmp.lt.s32.totalorder %s29, 1
        %s446 = scalar_select %p445, %s29, 1
        %s447 = smul.addr %s446, 8
        %s448 = scalar_lea.vmem %s0, %s447
        %p449 = pneg %p50
        %p450 = pneg %p47
        %p451 = pneg %p71
        %p452 = pneg %p68
        %p453 = pneg %p92
        %p454 = pneg %p89
        %p455 = pneg %p113
        %p456 = pneg %p110
        %p457 = pneg %p134
        %p458 = pneg %p131
        %p459 = pneg %p155
        %p460 = pneg %p152
        %p461 = pneg %p176
        %p462 = pneg %p173
        %p463 = pneg %p197
        %p464 = pneg %p194
        %p465 = pneg %p218
        %p466 = pneg %p215
        %p467 = pneg %p239
        %p468 = pneg %p236
        %p469 = pneg %p260
        %p470 = pneg %p257
        %p471 = pneg %p281
        %p472 = pneg %p278
        %p473 = pneg %p302
        %p474 = pneg %p299
        %p475 = pneg %p323
        %p476 = pneg %p320
        %p477 = pneg %p344
        %p478 = pneg %p341
        %p479 = pneg %p370
        %p480 = pneg %p367
        %s481 = sand.u32 %s357, 1
        %s482 = scalar_lea.sflag [#allocation5], %s481
        %s483 = sand.u32 %s357, 1
        %s484 = smul.addr %s483, 8
        %s485 = scalar_lea.vmem [#allocation4], %s484
        %p486 = scmp.lt.s32.totalorder %s29, 1
        %s487 = scalar_select %p486, %s29, 1
        %s488 = smul.addr %s487, 8
        %s489 = scalar_lea.vmem %s0, %s488
        %v490 = vld [vmem:[%s489] sm:$0xff]
        %v491 = vld [vmem:[%s1] sm:$0xff]
        %v492 = vld [vmem:[%s1 + $0x8] sm:$0xff]
        %v493 = vld [vmem:[%s1 + $0x10] sm:$0xff]
        %v494 = vld [vmem:[%s1 + $0x18] sm:$0xff]
        %vm495 = vcmask 261120
        %v497 = vsel %vm495, %v490, 0
        %499 = vmatprep.subr.mxu0 0.0
        %500 = vmatpush1.msra.mxu0 %v491
        %501 = vmatprep.subr.mxu0 0.0
        %502 = vmatpush1.msra.mxu0 %v492
        %503 = vmatprep.subr.mxu0 0.0
        %504 = vmatpush1.msra.mxu0 %v493
        %505 = vmatprep.subr.mxu0 0.0
        %506 = vmatpush1.msra.mxu0 %v494
        %507 = vmatprep.subr.mxu0 0.0
        %508 = vmatpush1.msra.mxu0 0.0
        %509 = vmatprep.subr.mxu0 0.0
        %510 = vmatpush1.msra.mxu0 0.0
        %511 = vmatprep.subr.mxu0 0.0
        %512 = vmatpush1.msra.mxu0 0.0
        %513 = vmatprep.subr.mxu0 0.0
        %514 = vmatpush1.msra.mxu0 0.0
        %515 = vmatprep.subr.mxu0 0.0
        %516 = vmatpush1.msra.mxu0 0.0
        %517 = vmatprep.subr.mxu0 0.0
        %518 = vmatpush1.msra.mxu0 0.0
        %519 = vmatprep.subr.mxu0 0.0
        %520 = vmatpush1.msra.mxu0 0.0
        %521 = vmatprep.subr.mxu0 0.0
        %522 = vmatpush1.msra.mxu0 0.0
        %523 = vmatprep.subr.mxu0 0.0
        %524 = vmatpush1.msra.mxu0 0.0
        %525 = vmatprep.subr.mxu0 0.0
        %526 = vmatpush1.msra.mxu0 0.0
        %527 = vmatprep.subr.mxu0 0.0
        %528 = vmatpush1.msra.mxu0 0.0
        %529 = vmatprep.subr.mxu0 0.0
        %530 = vmatpush1.msra.mxu0 0.0
        %531 = vmatprep.subr.mxu0 0.0
        %532 = vmatpush1.msra.mxu0 0.0
        %533 = vmatprep.subr.mxu0 0.0
        %534 = vmatpush1.msra.mxu0 0.0
        %535 = vmatprep.subr.mxu0 0.0
        %536 = vmatpush1.msra.mxu0 0.0
        %537 = vmatprep.subr.mxu0 0.0
        %538 = vmatpush1.msra.mxu0 0.0
        %539 = vmatprep.subr.mxu0 0.0
        %540 = vmatpush1.msra.mxu0 0.0
        %541 = vmatprep.subr.mxu0 0.0
        %542 = vmatpush1.msra.mxu0 0.0
        %543 = vmatprep.subr.mxu0 0.0
        %544 = vmatpush1.msra.mxu0 0.0
        %545 = vmatprep.subr.mxu0 0.0
        %546 = vmatpush1.msra.mxu0 0.0
        %547 = vmatprep.subr.mxu0 0.0
        %548 = vmatpush1.msra.mxu0 0.0
        %549 = vmatprep.subr.mxu0 0.0
        %550 = vmatpush1.msra.mxu0 0.0
        %551 = vmatprep.subr.mxu0 0.0
        %552 = vmatpush1.msra.mxu0 0.0
        %553 = vmatprep.subr.mxu0 0.0
        %554 = vmatpush1.msra.mxu0 0.0
        %555 = vmatprep.subr.mxu0 0.0
        %556 = vmatpush1.msra.mxu0 0.0
        %557 = vmatprep.subr.mxu0 0.0
        %558 = vmatpush1.msra.mxu0 0.0
        %559 = vmatprep.subr.mxu0 0.0
        %560 = vmatpush1.msra.mxu0 0.0
        %561 = vmatprep.subr.mxu0 0.0
        %562 = vmatpush1.msra.mxu0 0.0
        %563 = vmatprep.mubr.f32.mxu0 0.0
        %564 = vmatmul.mubr.f32.gmra.mrb[0].mxu0 %v497
        %v565 = vpop.f32.mrb[0].mxu0
        %v566 = vadd.f32 0.0, %v565
        %v567 = vpop.f32.mrb[0].mxu0
        %568 = vdwg.mxu0
        %v569 = vld [vmem:[%s2] sm:$0xff]
        %v570 = vld [vmem:[%s2 + $0x8] sm:$0xff]
        %v571 = vld [vmem:[%s2 + $0x10] sm:$0xff]
        %v572 = vld [vmem:[%s2 + $0x18] sm:$0xff]
        %573 = vmatprep.subr.mxu0 0.0
        %574 = vmatpush1.msra.mxu0 %v569
        %575 = vmatprep.subr.mxu0 0.0
        %576 = vmatpush1.msra.mxu0 %v570
        %577 = vmatprep.subr.mxu0 0.0
        %578 = vmatpush1.msra.mxu0 %v571
        %579 = vmatprep.subr.mxu0 0.0
        %580 = vmatpush1.msra.mxu0 %v572
        %581 = vmatprep.subr.mxu0 0.0
        %582 = vmatpush1.msra.mxu0 0.0
        %583 = vmatprep.subr.mxu0 0.0
        %584 = vmatpush1.msra.mxu0 0.0
        %585 = vmatprep.subr.mxu0 0.0
        %586 = vmatpush1.msra.mxu0 0.0
        %587 = vmatprep.subr.mxu0 0.0
        %588 = vmatpush1.msra.mxu0 0.0
        %589 = vmatprep.subr.mxu0 0.0
        %590 = vmatpush1.msra.mxu0 0.0
        %591 = vmatprep.subr.mxu0 0.0
        %592 = vmatpush1.msra.mxu0 0.0
        %593 = vmatprep.subr.mxu0 0.0
        %594 = vmatpush1.msra.mxu0 0.0
        %595 = vmatprep.subr.mxu0 0.0
        %596 = vmatpush1.msra.mxu0 0.0
        %597 = vmatprep.subr.mxu0 0.0
        %598 = vmatpush1.msra.mxu0 0.0
        %599 = vmatprep.subr.mxu0 0.0
        %600 = vmatpush1.msra.mxu0 0.0
        %601 = vmatprep.subr.mxu0 0.0
        %602 = vmatpush1.msra.mxu0 0.0
        %603 = vmatprep.subr.mxu0 0.0
        %604 = vmatpush1.msra.mxu0 0.0
        %605 = vmatprep.subr.mxu0 0.0
        %606 = vmatpush1.msra.mxu0 0.0
        %607 = vmatprep.subr.mxu0 0.0
        %608 = vmatpush1.msra.mxu0 0.0
        %609 = vmatprep.subr.mxu0 0.0
        %610 = vmatpush1.msra.mxu0 0.0
        %611 = vmatprep.subr.mxu0 0.0
        %612 = vmatpush1.msra.mxu0 0.0
        %613 = vmatprep.subr.mxu0 0.0
        %614 = vmatpush1.msra.mxu0 0.0
        %615 = vmatprep.subr.mxu0 0.0
        %616 = vmatpush1.msra.mxu0 0.0
        %617 = vmatprep.subr.mxu0 0.0
        %618 = vmatpush1.msra.mxu0 0.0
        %619 = vmatprep.subr.mxu0 0.0
        %620 = vmatpush1.msra.mxu0 0.0
        %621 = vmatprep.subr.mxu0 0.0
        %622 = vmatpush1.msra.mxu0 0.0
        %623 = vmatprep.subr.mxu0 0.0
        %624 = vmatpush1.msra.mxu0 0.0
        %625 = vmatprep.subr.mxu0 0.0
        %626 = vmatpush1.msra.mxu0 0.0
        %627 = vmatprep.subr.mxu0 0.0
        %628 = vmatpush1.msra.mxu0 0.0
        %629 = vmatprep.subr.mxu0 0.0
        %630 = vmatpush1.msra.mxu0 0.0
        %631 = vmatprep.subr.mxu0 0.0
        %632 = vmatpush1.msra.mxu0 0.0
        %633 = vmatprep.subr.mxu0 0.0
        %634 = vmatpush1.msra.mxu0 0.0
        %635 = vmatprep.subr.mxu0 0.0
        %636 = vmatpush1.msra.mxu0 0.0
        %637 = vmatprep.mubr.f32.mxu0 0.0
        %638 = vmatmul.mubr.f32.gmra.mrb[0].mxu0 %v497
        %v639 = vpop.f32.mrb[0].mxu0
        %v640 = vadd.f32 0.0, %v639
        %v641 = vpop.f32.mrb[0].mxu0
        %642 = vdwg.mxu0
        %v643 = vlaneseq
        %v644 = vshrl.u32 %v643, 7
        %v645 = vld [vmem:[%s4] sm:$0x1]
        %v647 = vlaneseq
        %v648 = vshrl.u32 %v647, 7
        %v649 = vsub.s32 0, %v648
        %v650 = vrot.slane %v645, %v649
        %v652 = vld [vmem:[%s3] sm:$0x1]
        %vm653 = vcmp.ge.s32.totalorder %v644, 3
        %v654 = vrot.slane %v566, 5
        %v655 = vsel %vm653, 1, 0
        %vm656 = vcmp.eq.s32.totalorder %v655, 1
        %v657 = vsel %vm656, %v654, 0.0
        %v658 = vlaneseq
        %v659 = vshrl.u32 %v658, 7
        %v660 = vsub.s32 0, %v659
        %v661 = vrot.slane %v652, %v660
        %v662 = vmul.f32 %v661, %v657
        %v663 = vadd.f32 %v650, %v662
        %v664 = vld [vmem:[%s3 + $0x1] sm:$0x1]
        %vm665 = vcmp.ge.s32.totalorder %v644, 2
        %v666 = vrot.slane %v566, 6
        %v667 = vsel %vm665, 1, 0
        %vm668 = vcmp.eq.s32.totalorder %v667, 1
        %v669 = vsel %vm668, %v666, 0.0
        %v670 = vlaneseq
        %v671 = vshrl.u32 %v670, 7
        %v672 = vsub.s32 0, %v671
        %v673 = vrot.slane %v664, %v672
        %v674 = vmul.f32 %v673, %v669
        %v675 = vadd.f32 %v663, %v674
        %v676 = vld [vmem:[%s3 + $0x2] sm:$0x1]
        %vm677 = vcmp.ge.s32.totalorder %v644, 1
        %v678 = vrot.slane %v566, 7
        %v679 = vsel %vm677, 1, 0
        %vm680 = vcmp.eq.s32.totalorder %v679, 1
        %v681 = vsel %vm680, %v678, 0.0
        %v682 = vlaneseq
        %v683 = vshrl.u32 %v682, 7
        %v684 = vsub.s32 0, %v683
        %v685 = vrot.slane %v676, %v684
        %v686 = vmul.f32 %v685, %v681
        %v687 = vadd.f32 %v675, %v686
        %v688 = vld [vmem:[%s3 + $0x3] sm:$0x1]
        %v689 = vlaneseq
        %v690 = vshrl.u32 %v689, 7
        %v691 = vsub.s32 0, %v690
        %v692 = vrot.slane %v688, %v691
        %v693 = vmul.f32 %v692, %v566
        %v694 = vadd.f32 %v687, %v693
        %v695 = vxor.u32 %v694, 2147483648
        %v696 = vmul.f32 %v695, 1.442695
        %v697 = vpow.pop %v696
        %v698 = vadd.f32 %v697, 1.0
        %v699 = vrcp.pop %v698
        %v700 = vmul.f32 1.0, %v699
        %v701 = vmul.f32 %v694, %v700
        %v702 = vld [vmem:[%s5] sm:$0xff]
        %v703 = vld [vmem:[%s5 + $0x8] sm:$0xff]
        %v704 = vld [vmem:[%s5 + $0x10] sm:$0xff]
        %v705 = vld [vmem:[%s5 + $0x18] sm:$0xff]
        %v706 = vld [vmem:[%s5 + $0x20] sm:$0xff]
        %v707 = vld [vmem:[%s5 + $0x28] sm:$0xff]
        %v708 = vld [vmem:[%s5 + $0x30] sm:$0xff]
        %v709 = vld [vmem:[%s5 + $0x38] sm:$0xff]
        %v710 = vld [vmem:[%s5 + $0x40] sm:$0xff]
        %v711 = vld [vmem:[%s5 + $0x48] sm:$0xff]
        %v712 = vld [vmem:[%s5 + $0x50] sm:$0xff]
        %v713 = vld [vmem:[%s5 + $0x58] sm:$0xff]
        %v714 = vld [vmem:[%s5 + $0x60] sm:$0xff]
        %v715 = vld [vmem:[%s5 + $0x68] sm:$0xff]
        %v716 = vld [vmem:[%s5 + $0x70] sm:$0xff]
        %v717 = vld [vmem:[%s5 + $0x78] sm:$0xff]
        %718 = vmatprep.subr.mxu0 0.0
        %719 = vmatpush1.msra.mxu0 %v702
        %720 = vmatprep.subr.mxu0 0.0
        %721 = vmatpush1.msra.mxu0 %v703
        %722 = vmatprep.subr.mxu0 0.0
        %723 = vmatpush1.msra.mxu0 %v704
        %724 = vmatprep.subr.mxu0 0.0
        %725 = vmatpush1.msra.mxu0 %v705
        %726 = vmatprep.subr.mxu0 0.0
        %727 = vmatpush1.msra.mxu0 %v706
        %728 = vmatprep.subr.mxu0 0.0
        %729 = vmatpush1.msra.mxu0 %v707
        %730 = vmatprep.subr.mxu0 0.0
        %731 = vmatpush1.msra.mxu0 %v708
        %732 = vmatprep.subr.mxu0 0.0
        %733 = vmatpush1.msra.mxu0 %v709
        %734 = vmatprep.subr.mxu0 0.0
        %735 = vmatpush1.msra.mxu0 %v710
        %736 = vmatprep.subr.mxu0 0.0
        %737 = vmatpush1.msra.mxu0 %v711
        %738 = vmatprep.subr.mxu0 0.0
        %739 = vmatpush1.msra.mxu0 %v712
        %740 = vmatprep.subr.mxu0 0.0
        %741 = vmatpush1.msra.mxu0 %v713
        %742 = vmatprep.subr.mxu0 0.0
        %743 = vmatpush1.msra.mxu0 %v714
        %744 = vmatprep.subr.mxu0 0.0
        %745 = vmatpush1.msra.mxu0 %v715
        %746 = vmatprep.subr.mxu0 0.0
        %747 = vmatpush1.msra.mxu0 %v716
        %748 = vmatprep.subr.mxu0 0.0
        %749 = vmatpush1.msra.mxu0 %v717
        %750 = vmatprep.subr.mxu0 0.0
        %751 = vmatpush1.msra.mxu0 0.0
        %752 = vmatprep.subr.mxu0 0.0
        %753 = vmatpush1.msra.mxu0 0.0
        %754 = vmatprep.subr.mxu0 0.0
        %755 = vmatpush1.msra.mxu0 0.0
        %756 = vmatprep.subr.mxu0 0.0
        %757 = vmatpush1.msra.mxu0 0.0
        %758 = vmatprep.subr.mxu0 0.0
        %759 = vmatpush1.msra.mxu0 0.0
        %760 = vmatprep.subr.mxu0 0.0
        %761 = vmatpush1.msra.mxu0 0.0
        %762 = vmatprep.subr.mxu0 0.0
        %763 = vmatpush1.msra.mxu0 0.0
        %764 = vmatprep.subr.mxu0 0.0
        %765 = vmatpush1.msra.mxu0 0.0
        %766 = vmatprep.subr.mxu0 0.0
        %767 = vmatpush1.msra.mxu0 0.0
        %768 = vmatprep.subr.mxu0 0.0
        %769 = vmatpush1.msra.mxu0 0.0
        %770 = vmatprep.subr.mxu0 0.0
        %771 = vmatpush1.msra.mxu0 0.0
        %772 = vmatprep.subr.mxu0 0.0
        %773 = vmatpush1.msra.mxu0 0.0
        %774 = vmatprep.subr.mxu0 0.0
        %775 = vmatpush1.msra.mxu0 0.0
        %776 = vmatprep.subr.mxu0 0.0
        %777 = vmatpush1.msra.mxu0 0.0
        %778 = vmatprep.subr.mxu0 0.0
        %779 = vmatpush1.msra.mxu0 0.0
        %780 = vmatprep.subr.mxu0 0.0
        %781 = vmatpush1.msra.mxu0 0.0
        %782 = vmatprep.mubr.f32.mxu0 0.0
        %783 = vmatmul.mubr.f32.gmra.mrb[0].mxu0 %v701
        %v784 = vpop.f32.mrb[0].mxu0
        %v785 = vadd.f32 0.0, %v784
        %v786 = vpop.f32.mrb[0].mxu0
        %787 = vdwg.mxu0
        %v788 = vld [vmem:[%s6] sm:$0xff]
        %v789 = vld [vmem:[%s6 + $0x8] sm:$0xff]
        %v790 = vld [vmem:[%s6 + $0x10] sm:$0xff]
        %v791 = vld [vmem:[%s6 + $0x18] sm:$0xff]
        %v792 = vld [vmem:[%s6 + $0x20] sm:$0xff]
        %v793 = vld [vmem:[%s6 + $0x28] sm:$0xff]
        %v794 = vld [vmem:[%s6 + $0x30] sm:$0xff]
        %v795 = vld [vmem:[%s6 + $0x38] sm:$0xff]
        %v796 = vld [vmem:[%s6 + $0x40] sm:$0xff]
        %v797 = vld [vmem:[%s6 + $0x48] sm:$0xff]
        %v798 = vld [vmem:[%s6 + $0x50] sm:$0xff]
        %v799 = vld [vmem:[%s6 + $0x58] sm:$0xff]
        %v800 = vld [vmem:[%s6 + $0x60] sm:$0xff]
        %v801 = vld [vmem:[%s6 + $0x68] sm:$0xff]
        %v802 = vld [vmem:[%s6 + $0x70] sm:$0xff]
        %v803 = vld [vmem:[%s6 + $0x78] sm:$0xff]
        %804 = vmatprep.subr.mxu0 0.0
        %805 = vmatpush1.msra.mxu0 %v788
        %806 = vmatprep.subr.mxu0 0.0
        %807 = vmatpush1.msra.mxu0 %v789
        %808 = vmatprep.subr.mxu0 0.0
        %809 = vmatpush1.msra.mxu0 %v790
        %810 = vmatprep.subr.mxu0 0.0
        %811 = vmatpush1.msra.mxu0 %v791
        %812 = vmatprep.subr.mxu0 0.0
        %813 = vmatpush1.msra.mxu0 %v792
        %814 = vmatprep.subr.mxu0 0.0
        %815 = vmatpush1.msra.mxu0 %v793
        %816 = vmatprep.subr.mxu0 0.0
        %817 = vmatpush1.msra.mxu0 %v794
        %818 = vmatprep.subr.mxu0 0.0
        %819 = vmatpush1.msra.mxu0 %v795
        %820 = vmatprep.subr.mxu0 0.0
        %821 = vmatpush1.msra.mxu0 %v796
        %822 = vmatprep.subr.mxu0 0.0
        %823 = vmatpush1.msra.mxu0 %v797
        %824 = vmatprep.subr.mxu0 0.0
        %825 = vmatpush1.msra.mxu0 %v798
        %826 = vmatprep.subr.mxu0 0.0
        %827 = vmatpush1.msra.mxu0 %v799
        %828 = vmatprep.subr.mxu0 0.0
        %829 = vmatpush1.msra.mxu0 %v800
        %830 = vmatprep.subr.mxu0 0.0
        %831 = vmatpush1.msra.mxu0 %v801
        %832 = vmatprep.subr.mxu0 0.0
        %833 = vmatpush1.msra.mxu0 %v802
        %834 = vmatprep.subr.mxu0 0.0
        %835 = vmatpush1.msra.mxu0 %v803
        %836 = vmatprep.subr.mxu0 0.0
        %837 = vmatpush1.msra.mxu0 0.0
        %838 = vmatprep.subr.mxu0 0.0
        %839 = vmatpush1.msra.mxu0 0.0
        %840 = vmatprep.subr.mxu0 0.0
        %841 = vmatpush1.msra.mxu0 0.0
        %842 = vmatprep.subr.mxu0 0.0
        %843 = vmatpush1.msra.mxu0 0.0
        %844 = vmatprep.subr.mxu0 0.0
        %845 = vmatpush1.msra.mxu0 0.0
        %846 = vmatprep.subr.mxu0 0.0
        %847 = vmatpush1.msra.mxu0 0.0
        %848 = vmatprep.subr.mxu0 0.0
        %849 = vmatpush1.msra.mxu0 0.0
        %850 = vmatprep.subr.mxu0 0.0
        %851 = vmatpush1.msra.mxu0 0.0
        %852 = vmatprep.subr.mxu0 0.0
        %853 = vmatpush1.msra.mxu0 0.0
        %854 = vmatprep.subr.mxu0 0.0
        %855 = vmatpush1.msra.mxu0 0.0
        %856 = vmatprep.subr.mxu0 0.0
        %857 = vmatpush1.msra.mxu0 0.0
        %858 = vmatprep.subr.mxu0 0.0
        %859 = vmatpush1.msra.mxu0 0.0
        %860 = vmatprep.subr.mxu0 0.0
        %861 = vmatpush1.msra.mxu0 0.0
        %862 = vmatprep.subr.mxu0 0.0
        %863 = vmatpush1.msra.mxu0 0.0
        %864 = vmatprep.subr.mxu0 0.0
        %865 = vmatpush1.msra.mxu0 0.0
        %866 = vmatprep.subr.mxu0 0.0
        %867 = vmatpush1.msra.mxu0 0.0
        %868 = vmatprep.mubr.f32.mxu0 0.0
        %869 = vmatmul.mubr.f32.gmra.mrb[0].mxu0 %v701
        %v870 = vpop.f32.mrb[0].mxu0
        %v871 = vadd.f32 0.0, %v870
        %v872 = vpop.f32.mrb[0].mxu0
        %873 = vdwg.mxu0
        %v874 = vld [vmem:[%s7] sm:$0xff]
        %v875 = vld [vmem:[%s7 + $0x8] sm:$0xff]
        %v876 = vld [vmem:[%s7 + $0x10] sm:$0xff]
        %v877 = vld [vmem:[%s7 + $0x18] sm:$0xff]
        %v878 = vld [vmem:[%s7 + $0x20] sm:$0xff]
        %v879 = vld [vmem:[%s7 + $0x28] sm:$0xff]
        %v880 = vld [vmem:[%s7 + $0x30] sm:$0xff]
        %v881 = vld [vmem:[%s7 + $0x38] sm:$0xff]
        %v882 = vld [vmem:[%s7 + $0x40] sm:$0xff]
        %v883 = vld [vmem:[%s7 + $0x48] sm:$0xff]
        %v884 = vld [vmem:[%s7 + $0x50] sm:$0xff]
        %v885 = vld [vmem:[%s7 + $0x58] sm:$0xff]
        %v886 = vld [vmem:[%s7 + $0x60] sm:$0xff]
        %v887 = vld [vmem:[%s7 + $0x68] sm:$0xff]
        %v888 = vld [vmem:[%s7 + $0x70] sm:$0xff]
        %v889 = vld [vmem:[%s7 + $0x78] sm:$0xff]
        %890 = vmatprep.subr.mxu0 0.0
        %891 = vmatpush1.msra.mxu0 %v874
        %892 = vmatprep.subr.mxu0 0.0
        %893 = vmatpush1.msra.mxu0 %v875
        %894 = vmatprep.subr.mxu0 0.0
        %895 = vmatpush1.msra.mxu0 %v876
        %896 = vmatprep.subr.mxu0 0.0
        %897 = vmatpush1.msra.mxu0 %v877
        %898 = vmatprep.subr.mxu0 0.0
        %899 = vmatpush1.msra.mxu0 %v878
        %900 = vmatprep.subr.mxu0 0.0
        %901 = vmatpush1.msra.mxu0 %v879
        %902 = vmatprep.subr.mxu0 0.0
        %903 = vmatpush1.msra.mxu0 %v880
        %904 = vmatprep.subr.mxu0 0.0
        %905 = vmatpush1.msra.mxu0 %v881
        %906 = vmatprep.subr.mxu0 0.0
        %907 = vmatpush1.msra.mxu0 %v882
        %908 = vmatprep.subr.mxu0 0.0
        %909 = vmatpush1.msra.mxu0 %v883
        %910 = vmatprep.subr.mxu0 0.0
        %911 = vmatpush1.msra.mxu0 %v884
        %912 = vmatprep.subr.mxu0 0.0
        %913 = vmatpush1.msra.mxu0 %v885
        %914 = vmatprep.subr.mxu0 0.0
        %915 = vmatpush1.msra.mxu0 %v886
        %916 = vmatprep.subr.mxu0 0.0
        %917 = vmatpush1.msra.mxu0 %v887
        %918 = vmatprep.subr.mxu0 0.0
        %919 = vmatpush1.msra.mxu0 %v888
        %920 = vmatprep.subr.mxu0 0.0
        %921 = vmatpush1.msra.mxu0 %v889
        %922 = vmatprep.subr.mxu0 0.0
        %923 = vmatpush1.msra.mxu0 0.0
        %924 = vmatprep.subr.mxu0 0.0
        %925 = vmatpush1.msra.mxu0 0.0
        %926 = vmatprep.subr.mxu0 0.0
        %927 = vmatpush1.msra.mxu0 0.0
        %928 = vmatprep.subr.mxu0 0.0
        %929 = vmatpush1.msra.mxu0 0.0
        %930 = vmatprep.subr.mxu0 0.0
        %931 = vmatpush1.msra.mxu0 0.0
        %932 = vmatprep.subr.mxu0 0.0
        %933 = vmatpush1.msra.mxu0 0.0
        %934 = vmatprep.subr.mxu0 0.0
        %935 = vmatpush1.msra.mxu0 0.0
        %936 = vmatprep.subr.mxu0 0.0
        %937 = vmatpush1.msra.mxu0 0.0
        %938 = vmatprep.subr.mxu0 0.0
        %939 = vmatpush1.msra.mxu0 0.0
        %940 = vmatprep.subr.mxu0 0.0
        %941 = vmatpush1.msra.mxu0 0.0
        %942 = vmatprep.subr.mxu0 0.0
        %943 = vmatpush1.msra.mxu0 0.0
        %944 = vmatprep.subr.mxu0 0.0
        %945 = vmatpush1.msra.mxu0 0.0
        %946 = vmatprep.subr.mxu0 0.0
        %947 = vmatpush1.msra.mxu0 0.0
        %948 = vmatprep.subr.mxu0 0.0
        %949 = vmatpush1.msra.mxu0 0.0
        %950 = vmatprep.subr.mxu0 0.0
        %951 = vmatpush1.msra.mxu0 0.0
        %952 = vmatprep.subr.mxu0 0.0
        %953 = vmatpush1.msra.mxu0 0.0
        %954 = vmatprep.mubr.f32.mxu0 0.0
        %955 = vmatmul.mubr.f32.gmra.mrb[0].mxu0 %v701
        %v956 = vpop.f32.mrb[0].mxu0
        %v957 = vadd.f32 0.0, %v956
        %v958 = vpop.f32.mrb[0].mxu0
        %959 = vdwg.mxu0
        %v960 = vld [vmem:[%s8] sm:$0x3]
        %v961 = vld [vmem:[%s9] sm:$0x1]
        %v963 = vlaneseq
        %v964 = vshrl.u32 %v963, 7
        %v965 = vsub.s32 0, %v964
        %v966 = vrot.slane %v961, %v965
        %vm968 = vcmask 15360
        %v970 = vsel %vm968, %v785, 0
        %vm972 = vcmask 1041408
        %v974 = vsel %vm972, %v960, 0
        %976 = vmatprep.subr.mxu0 0.0
        %977 = vmatpush1.msra.mxu0 %v974
        %978 = vmatprep.subr.mxu0 0.0
        %979 = vmatpush1.msra.mxu0 0.0
        %980 = vmatprep.subr.mxu0 0.0
        %981 = vmatpush1.msra.mxu0 0.0
        %982 = vmatprep.subr.mxu0 0.0
        %983 = vmatpush1.msra.mxu0 0.0
        %984 = vmatprep.subr.mxu0 0.0
        %985 = vmatpush1.msra.mxu0 0.0
        %986 = vmatprep.subr.mxu0 0.0
        %987 = vmatpush1.msra.mxu0 0.0
        %988 = vmatprep.subr.mxu0 0.0
        %989 = vmatpush1.msra.mxu0 0.0
        %990 = vmatprep.subr.mxu0 0.0
        %991 = vmatpush1.msra.mxu0 0.0
        %992 = vmatprep.subr.mxu0 0.0
        %993 = vmatpush1.msra.mxu0 0.0
        %994 = vmatprep.subr.mxu0 0.0
        %995 = vmatpush1.msra.mxu0 0.0
        %996 = vmatprep.subr.mxu0 0.0
        %997 = vmatpush1.msra.mxu0 0.0
        %998 = vmatprep.subr.mxu0 0.0
        %999 = vmatpush1.msra.mxu0 0.0
        %1000 = vmatprep.subr.mxu0 0.0
        %1001 = vmatpush1.msra.mxu0 0.0
        %1002 = vmatprep.subr.mxu0 0.0
        %1003 = vmatpush1.msra.mxu0 0.0
        %1004 = vmatprep.subr.mxu0 0.0
        %1005 = vmatpush1.msra.mxu0 0.0
        %1006 = vmatprep.subr.mxu0 0.0
        %1007 = vmatpush1.msra.mxu0 0.0
        %1008 = vmatprep.subr.mxu0 0.0
        %1009 = vmatpush1.msra.mxu0 0.0
        %1010 = vmatprep.subr.mxu0 0.0
        %1011 = vmatpush1.msra.mxu0 0.0
        %1012 = vmatprep.subr.mxu0 0.0
        %1013 = vmatpush1.msra.mxu0 0.0
        %1014 = vmatprep.subr.mxu0 0.0
        %1015 = vmatpush1.msra.mxu0 0.0
        %1016 = vmatprep.subr.mxu0 0.0
        %1017 = vmatpush1.msra.mxu0 0.0
        %1018 = vmatprep.subr.mxu0 0.0
        %1019 = vmatpush1.msra.mxu0 0.0
        %1020 = vmatprep.subr.mxu0 0.0
        %1021 = vmatpush1.msra.mxu0 0.0
        %1022 = vmatprep.subr.mxu0 0.0
        %1023 = vmatpush1.msra.mxu0 0.0
        %1024 = vmatprep.subr.mxu0 0.0
        %1025 = vmatpush1.msra.mxu0 0.0
        %1026 = vmatprep.subr.mxu0 0.0
        %1027 = vmatpush1.msra.mxu0 0.0
        %1028 = vmatprep.subr.mxu0 0.0
        %1029 = vmatpush1.msra.mxu0 0.0
        %1030 = vmatprep.subr.mxu0 0.0
        %1031 = vmatpush1.msra.mxu0 0.0
        %1032 = vmatprep.subr.mxu0 0.0
        %1033 = vmatpush1.msra.mxu0 0.0
        %1034 = vmatprep.subr.mxu0 0.0
        %1035 = vmatpush1.msra.mxu0 0.0
        %1036 = vmatprep.subr.mxu0 0.0
        %1037 = vmatpush1.msra.mxu0 0.0
        %1038 = vmatprep.subr.mxu0 0.0
        %1039 = vmatpush1.msra.mxu0 0.0
        %1040 = vmatprep.mubr.f32.mxu0 0.0
        %1041 = vmatmul.mubr.f32.gmra.mrb[0].mxu0 %v970
        %v1042 = vpop.f32.mrb[0].mxu0
        %v1043 = vadd.f32 %v966, %v1042
        %v1044 = vpop.f32.mrb[0].mxu0
        %1045 = vdwg.mxu0
        %v1046 = vmax.f32 %v1043, 0.0
        %vm1047 = vcmp.ne.f32.partialorder %v1043, %v1043
        %v1048 = vadd.f32 %v1043, 0.0
        %v1049 = vand.u32 2147483647, %v1043
        %v1050 = vsub.f32 0.0, %v1049
        %v1051 = vmul.f32 %v1050, 1.442695
        %v1052 = vpow.pop %v1051
        %v1053 = vadd.f32 %v1052, 1.0
        %v1054 = vlog2.pop %v1053
        %v1055 = vmul.f32 %v1054, 0.6931472
        %v1056 = vmul.f32 -0.5, %v1052
        %v1057 = vadd.f32 %v1056, 1.0
        %v1058 = vmul.f32 %v1057, %v1052
        %v1059 = vand.u32 2147483647, %v1052
        %vm1060 = vcmp.lt.f32.partialorder %v1059, 0.0004427343
        %v1061 = vsel %vm1060, %v1058, %v1055
        %v1062 = vadd.f32 %v1046, %v1061
        %v1063 = vsel %vm1047, %v1048, %v1062
        %v1064 = vmul.f32 %v1063, %v701
        %v1065 = vld [vmem:[%s10] sm:$0x1]
        %v1066 = vlaneseq
        %v1067 = vshrl.u32 %v1066, 7
        %v1068 = vsub.s32 0, %v1067
        %v1069 = vrot.slane %v1065, %v1068
        %v1070 = vmul.f32 %v1063, %v1069
        %v1071 = vmul.f32 %v1070, 1.442695
        %v1072 = vpow.pop %v1071
        %1073 = vst [vmem:[#allocation2] ss:$16 sm:$0x3] %v1072
        %1074 = vst [vmem:[#allocation2] ss:$16 sm:$0xc] %v1072
        %1075 = vst [vmem:[#allocation2] ss:$16 sm:$0x30] %v1072
        %1076 = vst [vmem:[#allocation2] ss:$16 sm:$0xc0] %v1072
        %1078 = vset.pattern.permute.xlu0 0
        %1079 = vperm.xlu0 %1078, %v871
        %v1080 = vpop.permute.xlu0 %1079
        %v1082 = vmul.f32 %v1064, %v1080
        %1083 = vst [vmem:[#allocation3] ss:$16 sm:$0x3] %v1082
        %1084 = vst [vmem:[#allocation3] ss:$16 sm:$0xc] %v1082
        %1085 = vst [vmem:[#allocation3] ss:$16 sm:$0x30] %v1082
        %1086 = vst [vmem:[#allocation3] ss:$16 sm:$0xc0] %v1082
        %v1087 = vld [vmem:[%s10 + $0x1] sm:$0x1]
        %v1088 = vlaneseq
        %v1089 = vshrl.u32 %v1088, 7
        %v1090 = vsub.s32 0, %v1089
        %v1091 = vrot.slane %v1087, %v1090
        %v1092 = vmul.f32 %v1063, %v1091
        %v1093 = vmul.f32 %v1092, 1.442695
        %v1094 = vpow.pop %v1093
        %s1095 = scalar_lea.vmem [#allocation2], 1
        %1096 = vst [vmem:[%s1095] ss:$16 sm:$0x3] %v1094
        %1097 = vst [vmem:[%s1095] ss:$16 sm:$0xc] %v1094
        %1098 = vst [vmem:[%s1095] ss:$16 sm:$0x30] %v1094
        %1099 = vst [vmem:[%s1095] ss:$16 sm:$0xc0] %v1094
        %1100 = vset.pattern.permute.xlu0 1
        %1101 = vperm.xlu0 %1100, %v871
        %v1102 = vpop.permute.xlu0 %1101
        %v1104 = vmul.f32 %v1064, %v1102
        %s1105 = scalar_lea.vmem [#allocation3], 1
        %1106 = vst [vmem:[%s1105] ss:$16 sm:$0x3] %v1104
        %1107 = vst [vmem:[%s1105] ss:$16 sm:$0xc] %v1104
        %1108 = vst [vmem:[%s1105] ss:$16 sm:$0x30] %v1104
        %1109 = vst [vmem:[%s1105] ss:$16 sm:$0xc0] %v1104
        %v1110 = vld [vmem:[%s10 + $0x2] sm:$0x1]
        %v1111 = vlaneseq
        %v1112 = vshrl.u32 %v1111, 7
        %v1113 = vsub.s32 0, %v1112
        %v1114 = vrot.slane %v1110, %v1113
        %v1115 = vmul.f32 %v1063, %v1114
        %v1116 = vmul.f32 %v1115, 1.442695
        %v1117 = vpow.pop %v1116
        %s1118 = scalar_lea.vmem [#allocation2], 2
        %1119 = vst [vmem:[%s1118] ss:$16 sm:$0x3] %v1117
        %1120 = vst [vmem:[%s1118] ss:$16 sm:$0xc] %v1117
        %1121 = vst [vmem:[%s1118] ss:$16 sm:$0x30] %v1117
        %1122 = vst [vmem:[%s1118] ss:$16 sm:$0xc0] %v1117
        %1123 = vset.pattern.permute.xlu0 2
        %1124 = vperm.xlu0 %1123, %v871
        %v1125 = vpop.permute.xlu0 %1124
        %v1127 = vmul.f32 %v1064, %v1125
        %s1128 = scalar_lea.vmem [#allocation3], 2
        %1129 = vst [vmem:[%s1128] ss:$16 sm:$0x3] %v1127
        %1130 = vst [vmem:[%s1128] ss:$16 sm:$0xc] %v1127
        %1131 = vst [vmem:[%s1128] ss:$16 sm:$0x30] %v1127
        %1132 = vst [vmem:[%s1128] ss:$16 sm:$0xc0] %v1127
        %v1133 = vld [vmem:[%s10 + $0x3] sm:$0x1]
        %v1134 = vlaneseq
        %v1135 = vshrl.u32 %v1134, 7
        %v1136 = vsub.s32 0, %v1135
        %v1137 = vrot.slane %v1133, %v1136
        %v1138 = vmul.f32 %v1063, %v1137
        %v1139 = vmul.f32 %v1138, 1.442695
        %v1140 = vpow.pop %v1139
        %s1141 = scalar_lea.vmem [#allocation2], 3
        %1142 = vst [vmem:[%s1141] ss:$16 sm:$0x3] %v1140
        %1143 = vst [vmem:[%s1141] ss:$16 sm:$0xc] %v1140
        %1144 = vst [vmem:[%s1141] ss:$16 sm:$0x30] %v1140
        %1145 = vst [vmem:[%s1141] ss:$16 sm:$0xc0] %v1140
        %1146 = vset.pattern.permute.xlu0 3
        %1147 = vperm.xlu0 %1146, %v871
        %v1148 = vpop.permute.xlu0 %1147
        %v1150 = vmul.f32 %v1064, %v1148
        %s1151 = scalar_lea.vmem [#allocation3], 3
        %1152 = vst [vmem:[%s1151] ss:$16 sm:$0x3] %v1150
        %1153 = vst [vmem:[%s1151] ss:$16 sm:$0xc] %v1150
        %1154 = vst [vmem:[%s1151] ss:$16 sm:$0x30] %v1150
        %1155 = vst [vmem:[%s1151] ss:$16 sm:$0xc0] %v1150
        %v1156 = vld [vmem:[%s10 + $0x4] sm:$0x1]
        %v1157 = vlaneseq
        %v1158 = vshrl.u32 %v1157, 7
        %v1159 = vsub.s32 0, %v1158
        %v1160 = vrot.slane %v1156, %v1159
        %v1161 = vmul.f32 %v1063, %v1160
        %v1162 = vmul.f32 %v1161, 1.442695
        %v1163 = vpow.pop %v1162
        %s1164 = scalar_lea.vmem [#allocation2], 4
        %1165 = vst [vmem:[%s1164] ss:$16 sm:$0x3] %v1163
        %1166 = vst [vmem:[%s1164] ss:$16 sm:$0xc] %v1163
        %1167 = vst [vmem:[%s1164] ss:$16 sm:$0x30] %v1163
        %1168 = vst [vmem:[%s1164] ss:$16 sm:$0xc0] %v1163
        %1169 = vset.pattern.permute.xlu0 4
        %1170 = vperm.xlu0 %1169, %v871
        %v1171 = vpop.permute.xlu0 %1170
        %v1173 = vmul.f32 %v1064, %v1171
        %s1174 = scalar_lea.vmem [#allocation3], 4
        %1175 = vst [vmem:[%s1174] ss:$16 sm:$0x3] %v1173
        %1176 = vst [vmem:[%s1174] ss:$16 sm:$0xc] %v1173
        %1177 = vst [vmem:[%s1174] ss:$16 sm:$0x30] %v1173
        %1178 = vst [vmem:[%s1174] ss:$16 sm:$0xc0] %v1173
        %v1179 = vld [vmem:[%s10 + $0x5] sm:$0x1]
        %v1180 = vlaneseq
        %v1181 = vshrl.u32 %v1180, 7
        %v1182 = vsub.s32 0, %v1181
        %v1183 = vrot.slane %v1179, %v1182
        %v1184 = vmul.f32 %v1063, %v1183
        %v1185 = vmul.f32 %v1184, 1.442695
        %v1186 = vpow.pop %v1185
        %s1187 = scalar_lea.vmem [#allocation2], 5
        %1188 = vst [vmem:[%s1187] ss:$16 sm:$0x3] %v1186
        %1189 = vst [vmem:[%s1187] ss:$16 sm:$0xc] %v1186
        %1190 = vst [vmem:[%s1187] ss:$16 sm:$0x30] %v1186
        %1191 = vst [vmem:[%s1187] ss:$16 sm:$0xc0] %v1186
        %1192 = vset.pattern.permute.xlu0 5
        %1193 = vperm.xlu0 %1192, %v871
        %v1194 = vpop.permute.xlu0 %1193
        %v1196 = vmul.f32 %v1064, %v1194
        %s1197 = scalar_lea.vmem [#allocation3], 5
        %1198 = vst [vmem:[%s1197] ss:$16 sm:$0x3] %v1196
        %1199 = vst [vmem:[%s1197] ss:$16 sm:$0xc] %v1196
        %1200 = vst [vmem:[%s1197] ss:$16 sm:$0x30] %v1196
        %1201 = vst [vmem:[%s1197] ss:$16 sm:$0xc0] %v1196
        %v1202 = vld [vmem:[%s10 + $0x6] sm:$0x1]
        %v1203 = vlaneseq
        %v1204 = vshrl.u32 %v1203, 7
        %v1205 = vsub.s32 0, %v1204
        %v1206 = vrot.slane %v1202, %v1205
        %v1207 = vmul.f32 %v1063, %v1206
        %v1208 = vmul.f32 %v1207, 1.442695
        %v1209 = vpow.pop %v1208
        %s1210 = scalar_lea.vmem [#allocation2], 6
        %1211 = vst [vmem:[%s1210] ss:$16 sm:$0x3] %v1209
        %1212 = vst [vmem:[%s1210] ss:$16 sm:$0xc] %v1209
        %1213 = vst [vmem:[%s1210] ss:$16 sm:$0x30] %v1209
        %1214 = vst [vmem:[%s1210] ss:$16 sm:$0xc0] %v1209
        %1215 = vset.pattern.permute.xlu0 6
        %1216 = vperm.xlu0 %1215, %v871
        %v1217 = vpop.permute.xlu0 %1216
        %v1219 = vmul.f32 %v1064, %v1217
        %s1220 = scalar_lea.vmem [#allocation3], 6
        %1221 = vst [vmem:[%s1220] ss:$16 sm:$0x3] %v1219
        %1222 = vst [vmem:[%s1220] ss:$16 sm:$0xc] %v1219
        %1223 = vst [vmem:[%s1220] ss:$16 sm:$0x30] %v1219
        %1224 = vst [vmem:[%s1220] ss:$16 sm:$0xc0] %v1219
        %v1225 = vld [vmem:[%s10 + $0x7] sm:$0x1]
        %v1226 = vlaneseq
        %v1227 = vshrl.u32 %v1226, 7
        %v1228 = vsub.s32 0, %v1227
        %v1229 = vrot.slane %v1225, %v1228
        %v1230 = vmul.f32 %v1063, %v1229
        %v1231 = vmul.f32 %v1230, 1.442695
        %v1232 = vpow.pop %v1231
        %s1233 = scalar_lea.vmem [#allocation2], 7
        %1234 = vst [vmem:[%s1233] ss:$16 sm:$0x3] %v1232
        %1235 = vst [vmem:[%s1233] ss:$16 sm:$0xc] %v1232
        %1236 = vst [vmem:[%s1233] ss:$16 sm:$0x30] %v1232
        %1237 = vst [vmem:[%s1233] ss:$16 sm:$0xc0] %v1232
        %1238 = vset.pattern.permute.xlu0 7
        %1239 = vperm.xlu0 %1238, %v871
        %v1240 = vpop.permute.xlu0 %1239
        %v1242 = vmul.f32 %v1064, %v1240
        %s1243 = scalar_lea.vmem [#allocation3], 7
        %1244 = vst [vmem:[%s1243] ss:$16 sm:$0x3] %v1242
        %1245 = vst [vmem:[%s1243] ss:$16 sm:$0xc] %v1242
        %1246 = vst [vmem:[%s1243] ss:$16 sm:$0x30] %v1242
        %1247 = vst [vmem:[%s1243] ss:$16 sm:$0xc0] %v1242
        %v1248 = vld [vmem:[%s10 + $0x8] sm:$0x1]
        %v1249 = vlaneseq
        %v1250 = vshrl.u32 %v1249, 7
        %v1251 = vsub.s32 0, %v1250
        %v1252 = vrot.slane %v1248, %v1251
        %v1253 = vmul.f32 %v1063, %v1252
        %v1254 = vmul.f32 %v1253, 1.442695
        %v1255 = vpow.pop %v1254
        %s1256 = scalar_lea.vmem [#allocation2], 8
        %1257 = vst [vmem:[%s1256] ss:$16 sm:$0x3] %v1255
        %1258 = vst [vmem:[%s1256] ss:$16 sm:$0xc] %v1255
        %1259 = vst [vmem:[%s1256] ss:$16 sm:$0x30] %v1255
        %1260 = vst [vmem:[%s1256] ss:$16 sm:$0xc0] %v1255
        %1261 = vset.pattern.permute.xlu0 8
        %1262 = vperm.xlu0 %1261, %v871
        %v1263 = vpop.permute.xlu0 %1262
        %v1265 = vmul.f32 %v1064, %v1263
        %s1266 = scalar_lea.vmem [#allocation3], 8
        %1267 = vst [vmem:[%s1266] ss:$16 sm:$0x3] %v1265
        %1268 = vst [vmem:[%s1266] ss:$16 sm:$0xc] %v1265
        %1269 = vst [vmem:[%s1266] ss:$16 sm:$0x30] %v1265
        %1270 = vst [vmem:[%s1266] ss:$16 sm:$0xc0] %v1265
        %v1271 = vld [vmem:[%s10 + $0x9] sm:$0x1]
        %v1272 = vlaneseq
        %v1273 = vshrl.u32 %v1272, 7
        %v1274 = vsub.s32 0, %v1273
        %v1275 = vrot.slane %v1271, %v1274
        %v1276 = vmul.f32 %v1063, %v1275
        %v1277 = vmul.f32 %v1276, 1.442695
        %v1278 = vpow.pop %v1277
        %s1279 = scalar_lea.vmem [#allocation2], 9
        %1280 = vst [vmem:[%s1279] ss:$16 sm:$0x3] %v1278
        %1281 = vst [vmem:[%s1279] ss:$16 sm:$0xc] %v1278
        %1282 = vst [vmem:[%s1279] ss:$16 sm:$0x30] %v1278
        %1283 = vst [vmem:[%s1279] ss:$16 sm:$0xc0] %v1278
        %1284 = vset.pattern.permute.xlu0 9
        %1285 = vperm.xlu0 %1284, %v871
        %v1286 = vpop.permute.xlu0 %1285
        %v1288 = vmul.f32 %v1064, %v1286
        %s1289 = scalar_lea.vmem [#allocation3], 9
        %1290 = vst [vmem:[%s1289] ss:$16 sm:$0x3] %v1288
        %1291 = vst [vmem:[%s1289] ss:$16 sm:$0xc] %v1288
        %1292 = vst [vmem:[%s1289] ss:$16 sm:$0x30] %v1288
        %1293 = vst [vmem:[%s1289] ss:$16 sm:$0xc0] %v1288
        %v1294 = vld [vmem:[%s10 + $0xa] sm:$0x1]
        %v1295 = vlaneseq
        %v1296 = vshrl.u32 %v1295, 7
        %v1297 = vsub.s32 0, %v1296
        %v1298 = vrot.slane %v1294, %v1297
        %v1299 = vmul.f32 %v1063, %v1298
        %v1300 = vmul.f32 %v1299, 1.442695
        %v1301 = vpow.pop %v1300
        %s1302 = scalar_lea.vmem [#allocation2], 10
        %1303 = vst [vmem:[%s1302] ss:$16 sm:$0x3] %v1301
        %1304 = vst [vmem:[%s1302] ss:$16 sm:$0xc] %v1301
        %1305 = vst [vmem:[%s1302] ss:$16 sm:$0x30] %v1301
        %1306 = vst [vmem:[%s1302] ss:$16 sm:$0xc0] %v1301
        %1307 = vset.pattern.permute.xlu0 10
        %1308 = vperm.xlu0 %1307, %v871
        %v1309 = vpop.permute.xlu0 %1308
        %v1311 = vmul.f32 %v1064, %v1309
        %s1312 = scalar_lea.vmem [#allocation3], 10
        %1313 = vst [vmem:[%s1312] ss:$16 sm:$0x3] %v1311
        %1314 = vst [vmem:[%s1312] ss:$16 sm:$0xc] %v1311
        %1315 = vst [vmem:[%s1312] ss:$16 sm:$0x30] %v1311
        %1316 = vst [vmem:[%s1312] ss:$16 sm:$0xc0] %v1311
        %v1317 = vld [vmem:[%s10 + $0xb] sm:$0x1]
        %v1318 = vlaneseq
        %v1319 = vshrl.u32 %v1318, 7
        %v1320 = vsub.s32 0, %v1319
        %v1321 = vrot.slane %v1317, %v1320
        %v1322 = vmul.f32 %v1063, %v1321
        %v1323 = vmul.f32 %v1322, 1.442695
        %v1324 = vpow.pop %v1323
        %s1325 = scalar_lea.vmem [#allocation2], 11
        %1326 = vst [vmem:[%s1325] ss:$16 sm:$0x3] %v1324
        %1327 = vst [vmem:[%s1325] ss:$16 sm:$0xc] %v1324
        %1328 = vst [vmem:[%s1325] ss:$16 sm:$0x30] %v1324
        %1329 = vst [vmem:[%s1325] ss:$16 sm:$0xc0] %v1324
        %1330 = vset.pattern.permute.xlu0 11
        %1331 = vperm.xlu0 %1330, %v871
        %v1332 = vpop.permute.xlu0 %1331
        %v1334 = vmul.f32 %v1064, %v1332
        %s1335 = scalar_lea.vmem [#allocation3], 11
        %1336 = vst [vmem:[%s1335] ss:$16 sm:$0x3] %v1334
        %1337 = vst [vmem:[%s1335] ss:$16 sm:$0xc] %v1334
        %1338 = vst [vmem:[%s1335] ss:$16 sm:$0x30] %v1334
        %1339 = vst [vmem:[%s1335] ss:$16 sm:$0xc0] %v1334
        %v1340 = vld [vmem:[%s10 + $0xc] sm:$0x1]
        %v1341 = vlaneseq
        %v1342 = vshrl.u32 %v1341, 7
        %v1343 = vsub.s32 0, %v1342
        %v1344 = vrot.slane %v1340, %v1343
        %v1345 = vmul.f32 %v1063, %v1344
        %v1346 = vmul.f32 %v1345, 1.442695
        %v1347 = vpow.pop %v1346
        %s1348 = scalar_lea.vmem [#allocation2], 12
        %1349 = vst [vmem:[%s1348] ss:$16 sm:$0x3] %v1347
        %1350 = vst [vmem:[%s1348] ss:$16 sm:$0xc] %v1347
        %1351 = vst [vmem:[%s1348] ss:$16 sm:$0x30] %v1347
        %1352 = vst [vmem:[%s1348] ss:$16 sm:$0xc0] %v1347
        %1353 = vset.pattern.permute.xlu0 12
        %1354 = vperm.xlu0 %1353, %v871
        %v1355 = vpop.permute.xlu0 %1354
        %v1357 = vmul.f32 %v1064, %v1355
        %s1358 = scalar_lea.vmem [#allocation3], 12
        %1359 = vst [vmem:[%s1358] ss:$16 sm:$0x3] %v1357
        %1360 = vst [vmem:[%s1358] ss:$16 sm:$0xc] %v1357
        %1361 = vst [vmem:[%s1358] ss:$16 sm:$0x30] %v1357
        %1362 = vst [vmem:[%s1358] ss:$16 sm:$0xc0] %v1357
        %v1363 = vld [vmem:[%s10 + $0xd] sm:$0x1]
        %v1364 = vlaneseq
        %v1365 = vshrl.u32 %v1364, 7
        %v1366 = vsub.s32 0, %v1365
        %v1367 = vrot.slane %v1363, %v1366
        %v1368 = vmul.f32 %v1063, %v1367
        %v1369 = vmul.f32 %v1368, 1.442695
        %v1370 = vpow.pop %v1369
        %s1371 = scalar_lea.vmem [#allocation2], 13
        %1372 = vst [vmem:[%s1371] ss:$16 sm:$0x3] %v1370
        %1373 = vst [vmem:[%s1371] ss:$16 sm:$0xc] %v1370
        %1374 = vst [vmem:[%s1371] ss:$16 sm:$0x30] %v1370
        %1375 = vst [vmem:[%s1371] ss:$16 sm:$0xc0] %v1370
        %1376 = vset.pattern.permute.xlu0 13
        %1377 = vperm.xlu0 %1376, %v871
        %v1378 = vpop.permute.xlu0 %1377
        %v1380 = vmul.f32 %v1064, %v1378
        %s1381 = scalar_lea.vmem [#allocation3], 13
        %1382 = vst [vmem:[%s1381] ss:$16 sm:$0x3] %v1380
        %1383 = vst [vmem:[%s1381] ss:$16 sm:$0xc] %v1380
        %1384 = vst [vmem:[%s1381] ss:$16 sm:$0x30] %v1380
        %1385 = vst [vmem:[%s1381] ss:$16 sm:$0xc0] %v1380
        %v1386 = vld [vmem:[%s10 + $0xe] sm:$0x1]
        %v1387 = vlaneseq
        %v1388 = vshrl.u32 %v1387, 7
        %v1389 = vsub.s32 0, %v1388
        %v1390 = vrot.slane %v1386, %v1389
        %v1391 = vmul.f32 %v1063, %v1390
        %v1392 = vmul.f32 %v1391, 1.442695
        %v1393 = vpow.pop %v1392
        %s1394 = scalar_lea.vmem [#allocation2], 14
        %1395 = vst [vmem:[%s1394] ss:$16 sm:$0x3] %v1393
        %1396 = vst [vmem:[%s1394] ss:$16 sm:$0xc] %v1393
        %1397 = vst [vmem:[%s1394] ss:$16 sm:$0x30] %v1393
        %1398 = vst [vmem:[%s1394] ss:$16 sm:$0xc0] %v1393
        %1399 = vset.pattern.permute.xlu0 14
        %1400 = vperm.xlu0 %1399, %v871
        %v1401 = vpop.permute.xlu0 %1400
        %v1403 = vmul.f32 %v1064, %v1401
        %s1404 = scalar_lea.vmem [#allocation3], 14
        %1405 = vst [vmem:[%s1404] ss:$16 sm:$0x3] %v1403
        %1406 = vst [vmem:[%s1404] ss:$16 sm:$0xc] %v1403
        %1407 = vst [vmem:[%s1404] ss:$16 sm:$0x30] %v1403
        %1408 = vst [vmem:[%s1404] ss:$16 sm:$0xc0] %v1403
        %v1409 = vld [vmem:[%s10 + $0xf] sm:$0x1]
        %v1410 = vlaneseq
        %v1411 = vshrl.u32 %v1410, 7
        %v1412 = vsub.s32 0, %v1411
        %v1413 = vrot.slane %v1409, %v1412
        %v1414 = vmul.f32 %v1063, %v1413
        %v1415 = vmul.f32 %v1414, 1.442695
        %v1416 = vpow.pop %v1415
        %s1417 = scalar_lea.vmem [#allocation2], 15
        %1418 = vst [vmem:[%s1417] ss:$16 sm:$0x3] %v1416
        %1419 = vst [vmem:[%s1417] ss:$16 sm:$0xc] %v1416
        %1420 = vst [vmem:[%s1417] ss:$16 sm:$0x30] %v1416
        %1421 = vst [vmem:[%s1417] ss:$16 sm:$0xc0] %v1416
        %1422 = vset.pattern.permute.xlu0 15
        %1423 = vperm.xlu0 %1422, %v871
        %v1424 = vpop.permute.xlu0 %1423
        %v1426 = vmul.f32 %v1064, %v1424
        %s1427 = scalar_lea.vmem [#allocation3], 15
        %1428 = vst [vmem:[%s1427] ss:$16 sm:$0x3] %v1426
        %1429 = vst [vmem:[%s1427] ss:$16 sm:$0xc] %v1426
        %1430 = vst [vmem:[%s1427] ss:$16 sm:$0x30] %v1426
        %1431 = vst [vmem:[%s1427] ss:$16 sm:$0xc0] %v1426
        %v1432 = vld [vmem:[#allocation2] sm:$0xff]
        %v1433 = vld [vmem:[#allocation2 + $0x8] sm:$0xff]
        %v1434 = vmul.f32 %v1432, 0.0
        %v1435 = vmul.f32 %v1433, 0.0
        %v1436 = vld [vmem:[#allocation3] sm:$0xff]
        %v1437 = vld [vmem:[#allocation3 + $0x8] sm:$0xff]
        %v1438 = vadd.f32 %v1434, %v1436
        %v1439 = vadd.f32 %v1435, %v1437
        %1440 = vst [vmem:[#allocation3] sm:$0xff] %v1438
        %1441 = vst [vmem:[#allocation3 + $0x8] sm:$0xff] %v1439
        %s1442 = scalar_lea.vmem [#allocation2], 16
        %v1443 = vld [vmem:[%s1442] sm:$0xff]
        %v1444 = vld [vmem:[%s1442 + $0x8] sm:$0xff]
        %v1445 = vmul.f32 %v1443, %v1438
        %v1446 = vmul.f32 %v1444, %v1439
        %s1447 = scalar_lea.vmem [#allocation3], 16
        %v1448 = vld [vmem:[%s1447] sm:$0xff]
        %v1449 = vld [vmem:[%s1447 + $0x8] sm:$0xff]
        %v1450 = vadd.f32 %v1445, %v1448
        %v1451 = vadd.f32 %v1446, %v1449
        %1452 = vst [vmem:[%s1447] sm:$0xff] %v1450
        %1453 = vst [vmem:[%s1447 + $0x8] sm:$0xff] %v1451
        %s1454 = scalar_lea.vmem [#allocation2], 32
        %v1455 = vld [vmem:[%s1454] sm:$0xff]
        %v1456 = vld [vmem:[%s1454 + $0x8] sm:$0xff]
        %v1457 = vmul.f32 %v1455, %v1450
        %v1458 = vmul.f32 %v1456, %v1451
        %s1459 = scalar_lea.vmem [#allocation3], 32
        %v1460 = vld [vmem:[%s1459] sm:$0xff]
        %v1461 = vld [vmem:[%s1459 + $0x8] sm:$0xff]
        %v1462 = vadd.f32 %v1457, %v1460
        %v1463 = vadd.f32 %v1458, %v1461
        %1464 = vst [vmem:[%s1459] sm:$0xff] %v1462
        %1465 = vst [vmem:[%s1459 + $0x8] sm:$0xff] %v1463
        %s1466 = scalar_lea.vmem [#allocation2], 48
        %v1467 = vld [vmem:[%s1466] sm:$0xff]
        %v1468 = vld [vmem:[%s1466 + $0x8] sm:$0xff]
        %v1469 = vmul.f32 %v1467, %v1462
        %v1470 = vmul.f32 %v1468, %v1463
        %s1471 = scalar_lea.vmem [#allocation3], 48
        %v1472 = vld [vmem:[%s1471] sm:$0xff]
        %v1473 = vld [vmem:[%s1471 + $0x8] sm:$0xff]
        %v1474 = vadd.f32 %v1469, %v1472
        %v1475 = vadd.f32 %v1470, %v1473
        %1476 = vst [vmem:[%s1471] sm:$0xff] %v1474
        %1477 = vst [vmem:[%s1471 + $0x8] sm:$0xff] %v1475
        %s1478 = scalar_lea.vmem [#allocation2], 64
        %v1479 = vld [vmem:[%s1478] sm:$0xff]
        %v1480 = vld [vmem:[%s1478 + $0x8] sm:$0xff]
        %v1481 = vmul.f32 %v1479, %v1474
        %v1482 = vmul.f32 %v1480, %v1475
        %s1483 = scalar_lea.vmem [#allocation3], 64
        %v1484 = vld [vmem:[%s1483] sm:$0xff]
        %v1485 = vld [vmem:[%s1483 + $0x8] sm:$0xff]
        %v1486 = vadd.f32 %v1481, %v1484
        %v1487 = vadd.f32 %v1482, %v1485
        %1488 = vst [vmem:[%s1483] sm:$0xff] %v1486
        %1489 = vst [vmem:[%s1483 + $0x8] sm:$0xff] %v1487
        %s1490 = scalar_lea.vmem [#allocation2], 80
        %v1491 = vld [vmem:[%s1490] sm:$0xff]
        %v1492 = vld [vmem:[%s1490 + $0x8] sm:$0xff]
        %v1493 = vmul.f32 %v1491, %v1486
        %v1494 = vmul.f32 %v1492, %v1487
        %s1495 = scalar_lea.vmem [#allocation3], 80
        %v1496 = vld [vmem:[%s1495] sm:$0xff]
        %v1497 = vld [vmem:[%s1495 + $0x8] sm:$0xff]
        %v1498 = vadd.f32 %v1493, %v1496
        %v1499 = vadd.f32 %v1494, %v1497
        %1500 = vst [vmem:[%s1495] sm:$0xff] %v1498
        %1501 = vst [vmem:[%s1495 + $0x8] sm:$0xff] %v1499
        %s1502 = scalar_lea.vmem [#allocation2], 96
        %v1503 = vld [vmem:[%s1502] sm:$0xff]
        %v1504 = vld [vmem:[%s1502 + $0x8] sm:$0xff]
        %v1505 = vmul.f32 %v1503, %v1498
        %v1506 = vmul.f32 %v1504, %v1499
        %s1507 = scalar_lea.vmem [#allocation3], 96
        %v1508 = vld [vmem:[%s1507] sm:$0xff]
        %v1509 = vld [vmem:[%s1507 + $0x8] sm:$0xff]
        %v1510 = vadd.f32 %v1505, %v1508
        %v1511 = vadd.f32 %v1506, %v1509
        %1512 = vst [vmem:[%s1507] sm:$0xff] %v1510
        %1513 = vst [vmem:[%s1507 + $0x8] sm:$0xff] %v1511
        %s1514 = scalar_lea.vmem [#allocation2], 112
        %v1515 = vld [vmem:[%s1514] sm:$0xff]
        %v1516 = vld [vmem:[%s1514 + $0x8] sm:$0xff]
        %v1517 = vmul.f32 %v1515, %v1510
        %v1518 = vmul.f32 %v1516, %v1511
        %s1519 = scalar_lea.vmem [#allocation3], 112
        %v1520 = vld [vmem:[%s1519] sm:$0xff]
        %v1521 = vld [vmem:[%s1519 + $0x8] sm:$0xff]
        %v1522 = vadd.f32 %v1517, %v1520
        %v1523 = vadd.f32 %v1518, %v1521
        %1524 = vst [vmem:[%s1519] sm:$0xff] %v1522
        %1525 = vst [vmem:[%s1519 + $0x8] sm:$0xff] %v1523
        %v1526 = vld [vmem:[%s11] sm:$0x1]
        %v1528 = vlaneseq
        %v1529 = vshrl.u32 %v1528, 7
        %v1530 = vsub.s32 0, %v1529
        %v1531 = vrot.slane %v1526, %v1530
        %v1533 = vmul.f32 %v1531, %v701
        %v1534 = vld [vmem:[#allocation3] ss:$16 sm:$0x3]
        %v1535 = vld [vmem:[#allocation3] ss:$16 sm:$0xc]
        %v1536 = vor.u32 %v1534, %v1535
        %v1537 = vld [vmem:[#allocation3] ss:$16 sm:$0x30]
        %v1538 = vor.u32 %v1536, %v1537
        %v1539 = vld [vmem:[#allocation3] ss:$16 sm:$0xc0]
        %v1540 = vor.u32 %v1538, %v1539
        %1542 = vset.pattern.permute.xlu0 0
        %1543 = vperm.xlu0 %1542, %v957
        %v1544 = vpop.permute.xlu0 %1543
        %v1546 = vmul.f32 %v1540, %v1544
        %v1547 = vadd.f32 %v1533, %v1546
        %v1548 = vld [vmem:[%s1105] ss:$16 sm:$0x3]
        %v1549 = vld [vmem:[%s1105] ss:$16 sm:$0xc]
        %v1550 = vor.u32 %v1548, %v1549
        %v1551 = vld [vmem:[%s1105] ss:$16 sm:$0x30]
        %v1552 = vor.u32 %v1550, %v1551
        %v1553 = vld [vmem:[%s1105] ss:$16 sm:$0xc0]
        %v1554 = vor.u32 %v1552, %v1553
        %1555 = vset.pattern.permute.xlu0 1
        %1556 = vperm.xlu0 %1555, %v957
        %v1557 = vpop.permute.xlu0 %1556
        %v1559 = vmul.f32 %v1554, %v1557
        %v1560 = vadd.f32 %v1547, %v1559
        %v1561 = vld [vmem:[%s1128] ss:$16 sm:$0x3]
        %v1562 = vld [vmem:[%s1128] ss:$16 sm:$0xc]
        %v1563 = vor.u32 %v1561, %v1562
        %v1564 = vld [vmem:[%s1128] ss:$16 sm:$0x30]
        %v1565 = vor.u32 %v1563, %v1564
        %v1566 = vld [vmem:[%s1128] ss:$16 sm:$0xc0]
        %v1567 = vor.u32 %v1565, %v1566
        %1568 = vset.pattern.permute.xlu0 2
        %1569 = vperm.xlu0 %1568, %v957
        %v1570 = vpop.permute.xlu0 %1569
        %v1572 = vmul.f32 %v1567, %v1570
        %v1573 = vadd.f32 %v1560, %v1572
        %v1574 = vld [vmem:[%s1151] ss:$16 sm:$0x3]
        %v1575 = vld [vmem:[%s1151] ss:$16 sm:$0xc]
        %v1576 = vor.u32 %v1574, %v1575
        %v1577 = vld [vmem:[%s1151] ss:$16 sm:$0x30]
        %v1578 = vor.u32 %v1576, %v1577
        %v1579 = vld [vmem:[%s1151] ss:$16 sm:$0xc0]
        %v1580 = vor.u32 %v1578, %v1579
        %1581 = vset.pattern.permute.xlu0 3
        %1582 = vperm.xlu0 %1581, %v957
        %v1583 = vpop.permute.xlu0 %1582
        %v1585 = vmul.f32 %v1580, %v1583
        %v1586 = vadd.f32 %v1573, %v1585
        %v1587 = vld [vmem:[%s1174] ss:$16 sm:$0x3]
        %v1588 = vld [vmem:[%s1174] ss:$16 sm:$0xc]
        %v1589 = vor.u32 %v1587, %v1588
        %v1590 = vld [vmem:[%s1174] ss:$16 sm:$0x30]
        %v1591 = vor.u32 %v1589, %v1590
        %v1592 = vld [vmem:[%s1174] ss:$16 sm:$0xc0]
        %v1593 = vor.u32 %v1591, %v1592
        %1594 = vset.pattern.permute.xlu0 4
        %1595 = vperm.xlu0 %1594, %v957
        %v1596 = vpop.permute.xlu0 %1595
        %v1598 = vmul.f32 %v1593, %v1596
        %v1599 = vadd.f32 %v1586, %v1598
        %v1600 = vld [vmem:[%s1197] ss:$16 sm:$0x3]
        %v1601 = vld [vmem:[%s1197] ss:$16 sm:$0xc]
        %v1602 = vor.u32 %v1600, %v1601
        %v1603 = vld [vmem:[%s1197] ss:$16 sm:$0x30]
        %v1604 = vor.u32 %v1602, %v1603
        %v1605 = vld [vmem:[%s1197] ss:$16 sm:$0xc0]
        %v1606 = vor.u32 %v1604, %v1605
        %1607 = vset.pattern.permute.xlu0 5
        %1608 = vperm.xlu0 %1607, %v957
        %v1609 = vpop.permute.xlu0 %1608
        %v1611 = vmul.f32 %v1606, %v1609
        %v1612 = vadd.f32 %v1599, %v1611
        %v1613 = vld [vmem:[%s1220] ss:$16 sm:$0x3]
        %v1614 = vld [vmem:[%s1220] ss:$16 sm:$0xc]
        %v1615 = vor.u32 %v1613, %v1614
        %v1616 = vld [vmem:[%s1220] ss:$16 sm:$0x30]
        %v1617 = vor.u32 %v1615, %v1616
        %v1618 = vld [vmem:[%s1220] ss:$16 sm:$0xc0]
        %v1619 = vor.u32 %v1617, %v1618
        %1620 = vset.pattern.permute.xlu0 6
        %1621 = vperm.xlu0 %1620, %v957
        %v1622 = vpop.permute.xlu0 %1621
        %v1624 = vmul.f32 %v1619, %v1622
        %v1625 = vadd.f32 %v1612, %v1624
        %v1626 = vld [vmem:[%s1243] ss:$16 sm:$0x3]
        %v1627 = vld [vmem:[%s1243] ss:$16 sm:$0xc]
        %v1628 = vor.u32 %v1626, %v1627
        %v1629 = vld [vmem:[%s1243] ss:$16 sm:$0x30]
        %v1630 = vor.u32 %v1628, %v1629
        %v1631 = vld [vmem:[%s1243] ss:$16 sm:$0xc0]
        %v1632 = vor.u32 %v1630, %v1631
        %1633 = vset.pattern.permute.xlu0 7
        %1634 = vperm.xlu0 %1633, %v957
        %v1635 = vpop.permute.xlu0 %1634
        %v1637 = vmul.f32 %v1632, %v1635
        %v1638 = vadd.f32 %v1625, %v1637
        %v1639 = vld [vmem:[%s1266] ss:$16 sm:$0x3]
        %v1640 = vld [vmem:[%s1266] ss:$16 sm:$0xc]
        %v1641 = vor.u32 %v1639, %v1640
        %v1642 = vld [vmem:[%s1266] ss:$16 sm:$0x30]
        %v1643 = vor.u32 %v1641, %v1642
        %v1644 = vld [vmem:[%s1266] ss:$16 sm:$0xc0]
        %v1645 = vor.u32 %v1643, %v1644
        %1646 = vset.pattern.permute.xlu0 8
        %1647 = vperm.xlu0 %1646, %v957
        %v1648 = vpop.permute.xlu0 %1647
        %v1650 = vmul.f32 %v1645, %v1648
        %v1651 = vadd.f32 %v1638, %v1650
        %v1652 = vld [vmem:[%s1289] ss:$16 sm:$0x3]
        %v1653 = vld [vmem:[%s1289] ss:$16 sm:$0xc]
        %v1654 = vor.u32 %v1652, %v1653
        %v1655 = vld [vmem:[%s1289] ss:$16 sm:$0x30]
        %v1656 = vor.u32 %v1654, %v1655
        %v1657 = vld [vmem:[%s1289] ss:$16 sm:$0xc0]
        %v1658 = vor.u32 %v1656, %v1657
        %1659 = vset.pattern.permute.xlu0 9
        %1660 = vperm.xlu0 %1659, %v957
        %v1661 = vpop.permute.xlu0 %1660
        %v1663 = vmul.f32 %v1658, %v1661
        %v1664 = vadd.f32 %v1651, %v1663
        %v1665 = vld [vmem:[%s1312] ss:$16 sm:$0x3]
        %v1666 = vld [vmem:[%s1312] ss:$16 sm:$0xc]
        %v1667 = vor.u32 %v1665, %v1666
        %v1668 = vld [vmem:[%s1312] ss:$16 sm:$0x30]
        %v1669 = vor.u32 %v1667, %v1668
        %v1670 = vld [vmem:[%s1312] ss:$16 sm:$0xc0]
        %v1671 = vor.u32 %v1669, %v1670
        %1672 = vset.pattern.permute.xlu0 10
        %1673 = vperm.xlu0 %1672, %v957
        %v1674 = vpop.permute.xlu0 %1673
        %v1676 = vmul.f32 %v1671, %v1674
        %v1677 = vadd.f32 %v1664, %v1676
        %v1678 = vld [vmem:[%s1335] ss:$16 sm:$0x3]
        %v1679 = vld [vmem:[%s1335] ss:$16 sm:$0xc]
        %v1680 = vor.u32 %v1678, %v1679
        %v1681 = vld [vmem:[%s1335] ss:$16 sm:$0x30]
        %v1682 = vor.u32 %v1680, %v1681
        %v1683 = vld [vmem:[%s1335] ss:$16 sm:$0xc0]
        %v1684 = vor.u32 %v1682, %v1683
        %1685 = vset.pattern.permute.xlu0 11
        %1686 = vperm.xlu0 %1685, %v957
        %v1687 = vpop.permute.xlu0 %1686
        %v1689 = vmul.f32 %v1684, %v1687
        %v1690 = vadd.f32 %v1677, %v1689
        %v1691 = vld [vmem:[%s1358] ss:$16 sm:$0x3]
        %v1692 = vld [vmem:[%s1358] ss:$16 sm:$0xc]
        %v1693 = vor.u32 %v1691, %v1692
        %v1694 = vld [vmem:[%s1358] ss:$16 sm:$0x30]
        %v1695 = vor.u32 %v1693, %v1694
        %v1696 = vld [vmem:[%s1358] ss:$16 sm:$0xc0]
        %v1697 = vor.u32 %v1695, %v1696
        %1698 = vset.pattern.permute.xlu0 12
        %1699 = vperm.xlu0 %1698, %v957
        %v1700 = vpop.permute.xlu0 %1699
        %v1702 = vmul.f32 %v1697, %v1700
        %v1703 = vadd.f32 %v1690, %v1702
        %v1704 = vld [vmem:[%s1381] ss:$16 sm:$0x3]
        %v1705 = vld [vmem:[%s1381] ss:$16 sm:$0xc]
        %v1706 = vor.u32 %v1704, %v1705
        %v1707 = vld [vmem:[%s1381] ss:$16 sm:$0x30]
        %v1708 = vor.u32 %v1706, %v1707
        %v1709 = vld [vmem:[%s1381] ss:$16 sm:$0xc0]
        %v1710 = vor.u32 %v1708, %v1709
        %1711 = vset.pattern.permute.xlu0 13
        %1712 = vperm.xlu0 %1711, %v957
        %v1713 = vpop.permute.xlu0 %1712
        %v1715 = vmul.f32 %v1710, %v1713
        %v1716 = vadd.f32 %v1703, %v1715
        %v1717 = vld [vmem:[%s1404] ss:$16 sm:$0x3]
        %v1718 = vld [vmem:[%s1404] ss:$16 sm:$0xc]
        %v1719 = vor.u32 %v1717, %v1718
        %v1720 = vld [vmem:[%s1404] ss:$16 sm:$0x30]
        %v1721 = vor.u32 %v1719, %v1720
        %v1722 = vld [vmem:[%s1404] ss:$16 sm:$0xc0]
        %v1723 = vor.u32 %v1721, %v1722
        %1724 = vset.pattern.permute.xlu0 14
        %1725 = vperm.xlu0 %1724, %v957
        %v1726 = vpop.permute.xlu0 %1725
        %v1728 = vmul.f32 %v1723, %v1726
        %v1729 = vadd.f32 %v1716, %v1728
        %v1730 = vld [vmem:[%s1427] ss:$16 sm:$0x3]
        %v1731 = vld [vmem:[%s1427] ss:$16 sm:$0xc]
        %v1732 = vor.u32 %v1730, %v1731
        %v1733 = vld [vmem:[%s1427] ss:$16 sm:$0x30]
        %v1734 = vor.u32 %v1732, %v1733
        %v1735 = vld [vmem:[%s1427] ss:$16 sm:$0xc0]
        %v1736 = vor.u32 %v1734, %v1735
        %1737 = vset.pattern.permute.xlu0 15
        %1738 = vperm.xlu0 %1737, %v957
        %v1739 = vpop.permute.xlu0 %1738
        %v1741 = vmul.f32 %v1736, %v1739
        %v1742 = vadd.f32 %v1729, %v1741
        %v1743 = vxor.u32 %v640, 2147483648
        %v1744 = vmul.f32 %v1743, 1.442695
        %v1745 = vpow.pop %v1744
        %v1746 = vadd.f32 %v1745, 1.0
        %v1747 = vrcp.pop %v1746
        %v1748 = vmul.f32 1.0, %v1747
        %v1749 = vmul.f32 %v640, %v1748
        %v1750 = vmul.f32 %v1742, %v1749
        %v1751 = vld [vmem:[%s12] sm:$0xff]
        %v1752 = vld [vmem:[%s12 + $0x8] sm:$0xff]
        %v1753 = vld [vmem:[%s12 + $0x10] sm:$0xff]
        %v1754 = vld [vmem:[%s12 + $0x18] sm:$0xff]
        %v1755 = vld [vmem:[%s12 + $0x20] sm:$0xff]
        %v1756 = vld [vmem:[%s12 + $0x28] sm:$0xff]
        %v1757 = vld [vmem:[%s12 + $0x30] sm:$0xff]
        %v1758 = vld [vmem:[%s12 + $0x38] sm:$0xff]
        %v1759 = vld [vmem:[%s12 + $0x40] sm:$0xff]
        %v1760 = vld [vmem:[%s12 + $0x48] sm:$0xff]
        %v1761 = vld [vmem:[%s12 + $0x50] sm:$0xff]
        %v1762 = vld [vmem:[%s12 + $0x58] sm:$0xff]
        %v1763 = vld [vmem:[%s12 + $0x60] sm:$0xff]
        %v1764 = vld [vmem:[%s12 + $0x68] sm:$0xff]
        %v1765 = vld [vmem:[%s12 + $0x70] sm:$0xff]
        %v1766 = vld [vmem:[%s12 + $0x78] sm:$0xff]
        %1767 = vmatprep.subr.mxu0 0.0
        %1768 = vmatpush1.msra.mxu0 %v1751
        %1769 = vmatprep.subr.mxu0 0.0
        %1770 = vmatpush1.msra.mxu0 %v1752
        %1771 = vmatprep.subr.mxu0 0.0
        %1772 = vmatpush1.msra.mxu0 %v1753
        %1773 = vmatprep.subr.mxu0 0.0
        %1774 = vmatpush1.msra.mxu0 %v1754
        %1775 = vmatprep.subr.mxu0 0.0
        %1776 = vmatpush1.msra.mxu0 %v1755
        %1777 = vmatprep.subr.mxu0 0.0
        %1778 = vmatpush1.msra.mxu0 %v1756
        %1779 = vmatprep.subr.mxu0 0.0
        %1780 = vmatpush1.msra.mxu0 %v1757
        %1781 = vmatprep.subr.mxu0 0.0
        %1782 = vmatpush1.msra.mxu0 %v1758
        %1783 = vmatprep.subr.mxu0 0.0
        %1784 = vmatpush1.msra.mxu0 %v1759
        %1785 = vmatprep.subr.mxu0 0.0
        %1786 = vmatpush1.msra.mxu0 %v1760
        %1787 = vmatprep.subr.mxu0 0.0
        %1788 = vmatpush1.msra.mxu0 %v1761
        %1789 = vmatprep.subr.mxu0 0.0
        %1790 = vmatpush1.msra.mxu0 %v1762
        %1791 = vmatprep.subr.mxu0 0.0
        %1792 = vmatpush1.msra.mxu0 %v1763
        %1793 = vmatprep.subr.mxu0 0.0
        %1794 = vmatpush1.msra.mxu0 %v1764
        %1795 = vmatprep.subr.mxu0 0.0
        %1796 = vmatpush1.msra.mxu0 %v1765
        %1797 = vmatprep.subr.mxu0 0.0
        %1798 = vmatpush1.msra.mxu0 %v1766
        %1799 = vmatprep.subr.mxu0 0.0
        %1800 = vmatpush1.msra.mxu0 0.0
        %1801 = vmatprep.subr.mxu0 0.0
        %1802 = vmatpush1.msra.mxu0 0.0
        %1803 = vmatprep.subr.mxu0 0.0
        %1804 = vmatpush1.msra.mxu0 0.0
        %1805 = vmatprep.subr.mxu0 0.0
        %1806 = vmatpush1.msra.mxu0 0.0
        %1807 = vmatprep.subr.mxu0 0.0
        %1808 = vmatpush1.msra.mxu0 0.0
        %1809 = vmatprep.subr.mxu0 0.0
        %1810 = vmatpush1.msra.mxu0 0.0
        %1811 = vmatprep.subr.mxu0 0.0
        %1812 = vmatpush1.msra.mxu0 0.0
        %1813 = vmatprep.subr.mxu0 0.0
        %1814 = vmatpush1.msra.mxu0 0.0
        %1815 = vmatprep.subr.mxu0 0.0
        %1816 = vmatpush1.msra.mxu0 0.0
        %1817 = vmatprep.subr.mxu0 0.0
        %1818 = vmatpush1.msra.mxu0 0.0
        %1819 = vmatprep.subr.mxu0 0.0
        %1820 = vmatpush1.msra.mxu0 0.0
        %1821 = vmatprep.subr.mxu0 0.0
        %1822 = vmatpush1.msra.mxu0 0.0
        %1823 = vmatprep.subr.mxu0 0.0
        %1824 = vmatpush1.msra.mxu0 0.0
        %1825 = vmatprep.subr.mxu0 0.0
        %1826 = vmatpush1.msra.mxu0 0.0
        %1827 = vmatprep.subr.mxu0 0.0
        %1828 = vmatpush1.msra.mxu0 0.0
        %1829 = vmatprep.subr.mxu0 0.0
        %1830 = vmatpush1.msra.mxu0 0.0
        %1831 = vmatprep.mubr.f32.mxu0 0.0
        %1832 = vmatmul.mubr.f32.gmra.mrb[0].mxu0 %v1750
        %v1833 = vpop.f32.mrb[0].mxu0
        %v1834 = vadd.f32 0.0, %v1833
        %v1835 = vpop.f32.mrb[0].mxu0
        %1836 = vdwg.mxu0
        %v1837 = vsel %vm495, %v1834, 0.0
        %1838 = vadd.xlane.f32.xlu0 %v1837
        %v1839 = vpop.xlane.xlu0 %1838
        %v1840 = vrcp.pop 32.0
        %v1841 = vmul.f32 %v1839, %v1840
        %v1842 = vsub.f32 %v1834, %v1841
        %v1843 = vmul.f32 %v1842, %v1842
        %v1844 = vsel %vm495, %v1843, 0.0
        %1845 = vadd.xlane.f32.xlu0 %v1844
        %v1846 = vpop.xlane.xlu0 %1845
        %v1847 = vmul.f32 %v1846, %v1840
        %v1848 = vadd.f32 %v1847, 1e-12
        %v1849 = vrsqrt.pop %v1848
        %v1850 = vmul.f32 %v1842, %v1849
        %v1851 = vld [vmem:[%s13] sm:$0x1]
        %v1853 = vlaneseq
        %v1854 = vshrl.u32 %v1853, 7
        %v1855 = vsub.s32 0, %v1854
        %v1856 = vrot.slane %v1851, %v1855
        %v1858 = vmul.f32 %v1850, %v1856
        %v1859 = vld [vmem:[%s14] sm:$0x1]
        %v1861 = vlaneseq
        %v1862 = vshrl.u32 %v1861, 7
        %v1863 = vsub.s32 0, %v1862
        %v1864 = vrot.slane %v1859, %v1863
        %v1866 = vadd.f32 %v1858, %v1864
        %1867 = vst.msk [vmem:[%s485] sm:$0xff] %vm495, %v1866
        %s1868 = sand.u32 %s357, 1
        %s1869 = scalar_lea.sflag [#allocation5], %s1868
        %s1870 = sand.u32 %s357, 1
        %s1871 = smul.addr %s1870, 8
        %s1872 = scalar_lea.vmem [#allocation4], %s1871
        // Predicated region
        $region81: #{tpu_custom_call.1} parent=79 // pred_check
          %p1873 = pneg %p367
        $region82: #{tpu_custom_call.1} parent=79 // pred_check_branch
          %1875 = sbr.rel (%p1873) target = $region84
        $region83: #{tpu_custom_call.1} parent=79 // pred_region
          %s1877 = ssub.s32 128, 128
          %1878 = vsyncadd %s1869, %s1877
          %s1879 = smul.addr %s29, 128
          %s1880 = scalar_lea.hbm %s15, %s1879
          %s1882 = sshll.u32 %s1872, 4
          %s1883 = int_to_ptr.vmem [resolvable:$true] %s1882
          %1885 = dma.vmem_to_hbm [thread:$0]  %s1883, 128, %s1880, %s1869
        $region84: #{tpu_custom_call.1} parent=79 // pred_fallthru
          _
      $region80: #{tpu_custom_call.1} parent=5 // pred_fallthru
        _
      %p1886 = scmp.le.s32.totalorder 2, %s24
      // Predicated region
      $region85: #{tpu_custom_call.1} parent=5 // pred_check
        %p1887 = pneg %p1886
      $region86: #{tpu_custom_call.1} parent=5 // pred_check_branch
        %1889 = sbr.rel (%p1887) target = $region88
      $region87: #{tpu_custom_call.1} parent=5 // pred_region
        %s1890 = ssub.s32 %s24, 2
        // Predicated region
        $region89: #{tpu_custom_call.1} parent=87 // pred_check
          %p1891 = pneg %p373
        $region90: #{tpu_custom_call.1} parent=87 // pred_check_branch
          %1893 = sbr.rel (%p1891) target = $region92
        $region91: #{tpu_custom_call.1} parent=87 // pred_region
          %s1894 = sand.u32 %s358, 1
          %s1895 = scalar_lea.sflag [#allocation5], %s1894
          %s1896 = sand.u32 %s358, 1
          %s1897 = smul.addr %s1896, 8
          %s1898 = scalar_lea.vmem [#allocation4], %s1897
          %1899 = dma.done %s1895, 128
        $region92: #{tpu_custom_call.1} parent=87 // pred_fallthru
          _
      $region88: #{tpu_custom_call.1} parent=5 // pred_fallthru
        _
    $region6: #{tpu_custom_call.1} parent=1 // loop_footer
      %s28 = sadd.s32 1, %s24
    $region7: #{tpu_custom_call.1} parent=1 // loop_footer_branch
      %23 = sbr.rel target = $region3
    $region8: #{tpu_custom_call.1} parent=1 // loop_exit
      _
    %1900 = vsyncpa [#allocation5], 1
    %s1901 = scalar_lea.sflag [#allocation5], 1
    %1902 = vsyncpa %s1901, 1

</llo_original>
